<compile_context>
chip_gen: v7x
topology: tpu7x:2x2x1
jax: 0.10.0
libtpu: 0.0.40
codegen_flags: <defaults>
</compile_context>

<pallas_src>
import functools

import jax
import jax.numpy as jnp
import numpy as np
from jax import lax
from jax.experimental import pallas as pl
from jax.experimental.pallas import tpu as pltpu


def _lstm_predictor_kernel(x_ref, xw1_ref, b1_ref, w_big_ref, b2_ref,
                           wlin_ref, blin_ref, out_ref, xg_ref, *, unroll):
    Tp1, B, _ = x_ref.shape
    T = Tp1 - 1
    Hp = b2_ref.shape[-1] // 4            # padded hidden dim (128)

    # ---- Hoist loop-invariant loads out of the time loop. ----
    w_big = w_big_ref[...]                # (2Hp, 8Hp)
    b2 = b2_ref[...]                      # (1, 4Hp)
    wlin = wlin_ref[...]                  # (1, Hp)
    blin = blin_ref[...]                  # (1, 1)

    # ---- Precompute layer-1 input+bias gate terms for every step, off the
    #      serial per-step chain:  xg[t] = x[t] * wih1 + (bih1 + bhh1). ----
    xg_ref[...] = x_ref[...] * xw1_ref[...] + b1_ref[...]     # (T+1, B, 4Hp)

    def cell(gates, c):
        # Gate columns ordered (i, f, o, g); each slab is Hp = 128 lanes, so
        # all slices below are vreg-granular.
        sig = 0.5 * jnp.tanh(0.5 * gates[:, :3 * Hp]) + 0.5   # i | f | o
        g = jnp.tanh(gates[:, 3 * Hp:])
        i = sig[:, :Hp]
        f = sig[:, Hp:2 * Hp]
        o = sig[:, 2 * Hp:3 * Hp]
        c_new = f * c + i * g
        h_new = o * jnp.tanh(c_new)
        return h_new, c_new

    zeros_h = jnp.zeros((B, Hp), jnp.float32)
    t_iota = lax.broadcasted_iota(jnp.int32, out_ref.shape, 1)   # (B, Tpad)

    # Prologue: layer-1 step 0 starts from zero state -> no matmul needed.
    h1, c1 = cell(xg_ref[0], zeros_h)

    def step(t, carry):
        h1, c1, h2, c2, out_acc = carry
        # One fused MXU pass: layer-2 gates for step t AND the hidden part of
        # layer-1 gates for step t+1 (both only need h1(t), h2(t)).
        lhs = jnp.concatenate([h1, h2], axis=-1)                 # (B, 2Hp)
        big = jnp.dot(lhs, w_big, preferred_element_type=jnp.float32)
        gates2 = big[:, :4 * Hp] + b2
        gates1n = big[:, 4 * Hp:] + xg_ref[t + 1]
        # The two cells are independent -> their EUP work interleaves.
        h2n, c2n = cell(gates2, c2)
        h1n, c1n = cell(gates1n, c1)
        # Final Linear(H, 1): VPU multiply + lane reduction (no 1-wide matmul).
        y = jnp.sum(h2n * wlin, axis=-1, keepdims=True) + blin   # (B, 1)
        out_acc = jnp.where(t_iota == t, y, out_acc)             # lane-dense
        return h1n, c1n, h2n, c2n, out_acc

    out0 = jnp.zeros(out_ref.shape, jnp.float32)
    carry = lax.fori_loop(0, T, step, (h1, c1, zeros_h, zeros_h, out0),
                          unroll=unroll)
    out_ref[...] = carry[4]               # single unmasked lane-dense store


def lstm_predictor_forward(x, params, future=0):
    """Pallas forward pass of LSTMPredictor. x: (batch, seq) f32 -> (batch, seq)."""
    # TODO(synk): the autoregressive `future > 0` rollout (feeding y back as
    # the next input) is not implemented; forward() defaults to future=0.
    assert future == 0, "future > 0 not implemented"
    B, T = x.shape
    H = params["whh1"].shape[1]                   # true hidden dim (51)
    Hp = 128 * pl.cdiv(H, 128)                    # lane-aligned hidden dim
    Tpad = 128 * pl.cdiv(T, 128)                  # lane-dense output width

    def prep_w(w, kp):
        # (4H, K) in PyTorch gate order (i, f, g, o) -> (kp, 4Hp) with column
        # order (i, f, o, g), zero-padded so padded lanes never perturb the
        # recurrence.
        i, f, g, o = jnp.split(w, 4, axis=0)
        pad = lambda gw: jnp.pad(gw, ((0, Hp - H), (0, kp - gw.shape[1])))
        return jnp.concatenate([pad(i), pad(f), pad(o), pad(g)], axis=0).T

    def prep_b(b):
        i, f, g, o = jnp.split(b, 4)
        pad = lambda v: jnp.pad(v, (0, Hp - H))   # padded bias lanes = 0
        return jnp.concatenate([pad(i), pad(f), pad(o), pad(g)])

    xw1 = prep_w(params["wih1"], 1).reshape(1, 1, 4 * Hp)
    b1 = prep_b(params["bih1"] + params["bhh1"]).reshape(1, 1, 4 * Hp)
    whh1 = prep_w(params["whh1"], Hp)             # (Hp, 4Hp)
    wih2 = prep_w(params["wih2"], Hp)             # (Hp, 4Hp)
    whh2 = prep_w(params["whh2"], Hp)             # (Hp, 4Hp)
    b2 = prep_b(params["bih2"] + params["bhh2"]).reshape(1, 4 * Hp)
    # Single per-step RHS:  [h1, h2] @ [[wih2, whh1], [whh2, 0]]
    #   cols [0:4Hp)  -> layer-2 gates (step t)
    #   cols [4Hp:8Hp)-> layer-1 hidden gate contribution (step t+1)
    w_big = jnp.concatenate(
        [jnp.concatenate([wih2, whh2], axis=0),
         jnp.concatenate([whh1, jnp.zeros((Hp, 4 * Hp), jnp.float32)], axis=0)],
        axis=1)                                   # (2Hp, 8Hp)
    wlin = jnp.pad(params["wlin"].reshape(1, H), ((0, 0), (0, Hp - H)))
    blin = params["blin"].reshape(1, 1)

    # Time-major input with one trailing dummy step (read by the skewed loop
    # at t = T-1; its layer-1 result is discarded).
    x_tm = jnp.concatenate([x.T, jnp.zeros((1, B), x.dtype)], axis=0)
    x_tm = x_tm[:, :, None].astype(jnp.float32)   # (T+1, B, 1)

    kernel = functools.partial(_lstm_predictor_kernel,
                               unroll=True if T <= 32 else 8)
    c2_map = lambda i: (0, 0)
    c3_map = lambda i: (0, 0, 0)

    out = pl.pallas_call(
        kernel,
        out_shape=jax.ShapeDtypeStruct((B, Tpad), jnp.float32),
        grid=(1,),                                # single invocation
        in_specs=[
            pl.BlockSpec((T + 1, B, 1), c3_map),      # x, time-major
            pl.BlockSpec((1, 1, 4 * Hp), c3_map),     # wih1 row (in_dim = 1)
            pl.BlockSpec((1, 1, 4 * Hp), c3_map),     # b1 = bih1 + bhh1
            pl.BlockSpec((2 * Hp, 8 * Hp), c2_map),   # fused per-step weights
            pl.BlockSpec((1, 4 * Hp), c2_map),        # b2 = bih2 + bhh2
            pl.BlockSpec((1, Hp), c2_map),            # linear weight row
            pl.BlockSpec((1, 1), c2_map),             # linear bias
        ],
        out_specs=pl.BlockSpec((B, Tpad), c2_map),    # lane-dense output
        scratch_shapes=[pltpu.VMEM((T + 1, B, 4 * Hp), jnp.float32)],
        compiler_params=pltpu.CompilerParams(
            dimension_semantics=("arbitrary",)),
    )(x_tm, xw1, b1, w_big, b2, wlin, blin)

    return out[:, :T]                             # (B, T)


def init_params(key, n_hidden=51):
    """Deterministic parameter init matching PyTorch default shapes/distributions."""
    H = n_hidden
    k = 1.0 / np.sqrt(H)
    keys = jax.random.split(key, 10)
    u = lambda kk, shape: jax.random.uniform(kk, shape, jnp.float32, -k, k)
    return {
        "wih1": u(keys[0], (4 * H, 1)),
        "whh1": u(keys[1], (4 * H, H)),
        "bih1": u(keys[2], (4 * H,)),
        "bhh1": u(keys[3], (4 * H,)),
        "wih2": u(keys[4], (4 * H, H)),
        "whh2": u(keys[5], (4 * H, H)),
        "bih2": u(keys[6], (4 * H,)),
        "bhh2": u(keys[7], (4 * H,)),
        "wlin": u(keys[8], (1, H)),
        "blin": u(keys[9], (1,)),
    }


def lstm_predictor_reference(x, params):
    """Pure-JAX reference mirroring torch.nn.LSTMCell / Linear math."""
    B, T = x.shape
    H = params["whh1"].shape[1]
    h1 = jnp.zeros((B, H), jnp.float32)
    c1 = jnp.zeros((B, H), jnp.float32)
    h2 = jnp.zeros((B, H), jnp.float32)
    c2 = jnp.zeros((B, H), jnp.float32)

    def cell(xin, h, c, wih, whh, bih, bhh):
        gates = xin @ wih.T + h @ whh.T + bih + bhh
        i = jax.nn.sigmoid(gates[:, 0:H])
        f = jax.nn.sigmoid(gates[:, H:2 * H])
        g = jnp.tanh(gates[:, 2 * H:3 * H])
        o = jax.nn.sigmoid(gates[:, 3 * H:4 * H])
        c_new = f * c + i * g
        return o * jnp.tanh(c_new), c_new

    outs = []
    for t in range(T):
        x_t = x[:, t:t + 1]
        h1, c1 = cell(x_t, h1, c1, params["wih1"], params["whh1"],
                      params["bih1"], params["bhh1"])
        h2, c2 = cell(h1, h2, c2, params["wih2"], params["whh2"],
                      params["bih2"], params["bhh2"])
        outs.append(h2 @ params["wlin"].T + params["blin"])
    return jnp.concatenate(outs, axis=1)


if __name__ == "__main__":
    key = jax.random.PRNGKey(0)
    k_param, k_x = jax.random.split(key)

    B, T, H = 2, 8, 51
    params = init_params(k_param, n_hidden=H)
    x = jax.random.normal(k_x, (B, T), jnp.float32)

    out = lstm_predictor_forward(x, params)
    out = jax.block_until_ready(out)

    ref = lstm_predictor_reference(x, params)
    assert out.shape == (B, T), out.shape
    err = jnp.max(jnp.abs(out - ref))
    assert jnp.allclose(out, ref, atol=1e-4, rtol=1e-4), f"max abs err {err}"

    print("KERNEL_OK")
</pallas_src>

<mosaic_0001>
module attributes {stable_mosaic.version = 11 : i64} {
  func.func @_lstm_predictor_kernel(%arg0: i32, %arg1: memref<9x2x1xf32, #tpu.memory_space<vmem>>, %arg2: memref<1x1x512xf32, #tpu.memory_space<vmem>>, %arg3: memref<1x1x512xf32, #tpu.memory_space<vmem>>, %arg4: memref<256x1024xf32, #tpu.memory_space<vmem>>, %arg5: memref<1x512xf32, #tpu.memory_space<vmem>>, %arg6: memref<1x128xf32, #tpu.memory_space<vmem>>, %arg7: memref<1x1xf32, #tpu.memory_space<vmem>>, %arg8: memref<2x128xf32, #tpu.memory_space<vmem>>, %arg9: memref<9x2x512xf32, #tpu.memory_space<vmem>>) attributes {dimension_semantics = [#tpu.dimension_semantics<arbitrary>], iteration_bounds = array<i64: 1>, scalar_prefetch = 0 : i64, scratch_operands = 1 : i64, tpu.core_type = #tpu.core_type<tc>, window_params = [{pipeline_mode = #tpu.pipeline_mode<synchronous>, transform_indices = @transform_0, window_bounds = array<i64: 9, 2, 1>}, {pipeline_mode = #tpu.pipeline_mode<synchronous>, transform_indices = @transform_1, window_bounds = array<i64: 1, 1, 512>}, {pipeline_mode = #tpu.pipeline_mode<synchronous>, transform_indices = @transform_2, window_bounds = array<i64: 1, 1, 512>}, {pipeline_mode = #tpu.pipeline_mode<synchronous>, transform_indices = @transform_3, window_bounds = array<i64: 256, 1024>}, {pipeline_mode = #tpu.pipeline_mode<synchronous>, transform_indices = @transform_4, window_bounds = array<i64: 1, 512>}, {pipeline_mode = #tpu.pipeline_mode<synchronous>, transform_indices = @transform_5, window_bounds = array<i64: 1, 128>}, {pipeline_mode = #tpu.pipeline_mode<synchronous>, transform_indices = @transform_6, window_bounds = array<i64: 1, 1>}, {pipeline_mode = #tpu.pipeline_mode<synchronous>, transform_indices = @transform_7, window_bounds = array<i64: 2, 128>}]} {
    %c0 = arith.constant 0 : index
    %c0_0 = arith.constant 0 : index
    %0 = vector.load %arg4[%c0, %c0_0] : memref<256x1024xf32, #tpu.memory_space<vmem>>, vector<256x1024xf32>
    %c0_1 = arith.constant 0 : index
    %c0_2 = arith.constant 0 : index
    %1 = vector.load %arg5[%c0_1, %c0_2] : memref<1x512xf32, #tpu.memory_space<vmem>>, vector<1x512xf32>
    %c0_3 = arith.constant 0 : index
    %c0_4 = arith.constant 0 : index
    %2 = vector.load %arg6[%c0_3, %c0_4] : memref<1x128xf32, #tpu.memory_space<vmem>>, vector<1x128xf32>
    %c0_5 = arith.constant 0 : index
    %c0_6 = arith.constant 0 : index
    %3 = vector.load %arg7[%c0_5, %c0_6] : memref<1x1xf32, #tpu.memory_space<vmem>>, vector<1x1xf32>
    %c0_7 = arith.constant 0 : index
    %c0_8 = arith.constant 0 : index
    %c0_9 = arith.constant 0 : index
    %4 = vector.load %arg1[%c0_7, %c0_8, %c0_9] : memref<9x2x1xf32, #tpu.memory_space<vmem>>, vector<9x2x1xf32>
    %c0_10 = arith.constant 0 : index
    %c0_11 = arith.constant 0 : index
    %c0_12 = arith.constant 0 : index
    %5 = vector.load %arg2[%c0_10, %c0_11, %c0_12] : memref<1x1x512xf32, #tpu.memory_space<vmem>>, vector<1x1x512xf32>
    %6 = vector.broadcast %4 : vector<9x2x1xf32> to vector<9x2x512xf32>
    %7 = vector.broadcast %5 : vector<1x1x512xf32> to vector<9x2x512xf32>
    %8 = arith.mulf %6, %7 : vector<9x2x512xf32>
    %c0_13 = arith.constant 0 : index
    %c0_14 = arith.constant 0 : index
    %c0_15 = arith.constant 0 : index
    %9 = vector.load %arg3[%c0_13, %c0_14, %c0_15] : memref<1x1x512xf32, #tpu.memory_space<vmem>>, vector<1x1x512xf32>
    %10 = vector.broadcast %9 : vector<1x1x512xf32> to vector<9x2x512xf32>
    %11 = arith.addf %8, %10 : vector<9x2x512xf32>
    %c0_16 = arith.constant 0 : index
    %c0_17 = arith.constant 0 : index
    %c0_18 = arith.constant 0 : index
    %12 = vector.load %arg9[%c0_16, %c0_17, %c0_18] : memref<9x2x512xf32, #tpu.memory_space<vmem>>, vector<9x2x512xf32>
    tpu.vector_store %arg9[%c0_16, %c0_17, %c0_18], %11 {strides = array<i32>} : memref<9x2x512xf32, #tpu.memory_space<vmem>>, vector<9x2x512xf32>,
    %cst = arith.constant 0.000000e+00 : f32
    %13 = vector.broadcast %cst : f32 to vector<2x128xf32>
    %14 = tpu.iota {dimensions = array<i32: 1>} : vector<2x128xi32>
    %c0_19 = arith.constant 0 : index
    %c0_20 = arith.constant 0 : index
    %c0_21 = arith.constant 0 : index
    %15 = vector.load %arg9[%c0_19, %c0_20, %c0_21] : memref<9x2x512xf32, #tpu.memory_space<vmem>>, vector<1x2x512xf32>
    %16 = vector.shape_cast %15 : vector<1x2x512xf32> to vector<2x512xf32>
    %17 = vector.extract_strided_slice %16 {offsets = [0, 0], sizes = [2, 384], strides = [1, 1]} : vector<2x512xf32> to vector<2x384xf32>
    %cst_22 = arith.constant 5.000000e-01 : f32
    %18 = vector.broadcast %cst_22 : f32 to vector<2x384xf32>
    %19 = arith.mulf %18, %17 : vector<2x384xf32>
    %20 = math.tanh %19 : vector<2x384xf32>
    %cst_23 = arith.constant 5.000000e-01 : f32
    %21 = vector.broadcast %cst_23 : f32 to vector<2x384xf32>
    %22 = arith.mulf %21, %20 : vector<2x384xf32>
    %cst_24 = arith.constant 5.000000e-01 : f32
    %23 = vector.broadcast %cst_24 : f32 to vector<2x384xf32>
    %24 = arith.addf %22, %23 : vector<2x384xf32>
    %25 = vector.extract_strided_slice %16 {offsets = [0, 384], sizes = [2, 128], strides = [1, 1]} : vector<2x512xf32> to vector<2x128xf32>
    %26 = math.tanh %25 : vector<2x128xf32>
    %27 = vector.extract_strided_slice %24 {offsets = [0, 0], sizes = [2, 128], strides = [1, 1]} : vector<2x384xf32> to vector<2x128xf32>
    %28 = vector.extract_strided_slice %24 {offsets = [0, 128], sizes = [2, 128], strides = [1, 1]} : vector<2x384xf32> to vector<2x128xf32>
    %29 = vector.extract_strided_slice %24 {offsets = [0, 256], sizes = [2, 128], strides = [1, 1]} : vector<2x384xf32> to vector<2x128xf32>
    %30 = arith.mulf %28, %13 : vector<2x128xf32>
    %31 = arith.mulf %27, %26 : vector<2x128xf32>
    %32 = arith.addf %30, %31 : vector<2x128xf32>
    %33 = math.tanh %32 : vector<2x128xf32>
    %34 = arith.mulf %29, %33 : vector<2x128xf32>
    %cst_25 = arith.constant 0.000000e+00 : f32
    %35 = vector.broadcast %cst_25 : f32 to vector<2x128xf32>
    %c0_i32 = arith.constant 0 : i32
    %36 = tpu.concatenate %34, %13 in 1 : vector<2x128xf32>, vector<2x128xf32> -> vector<2x256xf32>
    %cst_26 = arith.constant dense<0.000000e+00> : vector<2x1024xf32>
    %37 = tpu.matmul %36, %0, %cst_26 {dimension_numbers = #tpu.dot_dimension_numbers<[1], [0], [0], [1], [0, 0, 1, 1], [], []>} : vector<2x256xf32>, vector<256x1024xf32>, vector<2x1024xf32> -> vector<2x1024xf32>
    %38 = vector.extract_strided_slice %37 {offsets = [0, 0], sizes = [2, 512], strides = [1, 1]} : vector<2x1024xf32> to vector<2x512xf32>
    %39 = vector.broadcast %1 : vector<1x512xf32> to vector<2x512xf32>
    %40 = arith.addf %38, %39 : vector<2x512xf32>
    %41 = vector.extract_strided_slice %37 {offsets = [0, 512], sizes = [2, 512], strides = [1, 1]} : vector<2x1024xf32> to vector<2x512xf32>
    %c1_i32 = arith.constant 1 : i32
    %42 = arith.addi %c0_i32, %c1_i32 : i32
    %43 = arith.index_cast %42 : i32 to index
    %c0_27 = arith.constant 0 : index
    %c0_28 = arith.constant 0 : index
    %44 = vector.load %arg9[%43, %c0_27, %c0_28] : memref<9x2x512xf32, #tpu.memory_space<vmem>>, vector<1x2x512xf32>
    %45 = vector.shape_cast %44 : vector<1x2x512xf32> to vector<2x512xf32>
    %46 = arith.addf %41, %45 : vector<2x512xf32>
    %47 = vector.extract_strided_slice %40 {offsets = [0, 0], sizes = [2, 384], strides = [1, 1]} : vector<2x512xf32> to vector<2x384xf32>
    %cst_29 = arith.constant 5.000000e-01 : f32
    %48 = vector.broadcast %cst_29 : f32 to vector<2x384xf32>
    %49 = arith.mulf %48, %47 : vector<2x384xf32>
    %50 = math.tanh %49 : vector<2x384xf32>
    %cst_30 = arith.constant 5.000000e-01 : f32
    %51 = vector.broadcast %cst_30 : f32 to vector<2x384xf32>
    %52 = arith.mulf %51, %50 : vector<2x384xf32>
    %cst_31 = arith.constant 5.000000e-01 : f32
    %53 = vector.broadcast %cst_31 : f32 to vector<2x384xf32>
    %54 = arith.addf %52, %53 : vector<2x384xf32>
    %55 = vector.extract_strided_slice %40 {offsets = [0, 384], sizes = [2, 128], strides = [1, 1]} : vector<2x512xf32> to vector<2x128xf32>
    %56 = math.tanh %55 : vector<2x128xf32>
    %57 = vector.extract_strided_slice %54 {offsets = [0, 0], sizes = [2, 128], strides = [1, 1]} : vector<2x384xf32> to vector<2x128xf32>
    %58 = vector.extract_strided_slice %54 {offsets = [0, 128], sizes = [2, 128], strides = [1, 1]} : vector<2x384xf32> to vector<2x128xf32>
    %59 = vector.extract_strided_slice %54 {offsets = [0, 256], sizes = [2, 128], strides = [1, 1]} : vector<2x384xf32> to vector<2x128xf32>
    %60 = arith.mulf %58, %13 : vector<2x128xf32>
    %61 = arith.mulf %57, %56 : vector<2x128xf32>
    %62 = arith.addf %60, %61 : vector<2x128xf32>
    %63 = math.tanh %62 : vector<2x128xf32>
    %64 = arith.mulf %59, %63 : vector<2x128xf32>
    %65 = vector.extract_strided_slice %46 {offsets = [0, 0], sizes = [2, 384], strides = [1, 1]} : vector<2x512xf32> to vector<2x384xf32>
    %cst_32 = arith.constant 5.000000e-01 : f32
    %66 = vector.broadcast %cst_32 : f32 to vector<2x384xf32>
    %67 = arith.mulf %66, %65 : vector<2x384xf32>
    %68 = math.tanh %67 : vector<2x384xf32>
    %cst_33 = arith.constant 5.000000e-01 : f32
    %69 = vector.broadcast %cst_33 : f32 to vector<2x384xf32>
    %70 = arith.mulf %69, %68 : vector<2x384xf32>
    %cst_34 = arith.constant 5.000000e-01 : f32
    %71 = vector.broadcast %cst_34 : f32 to vector<2x384xf32>
    %72 = arith.addf %70, %71 : vector<2x384xf32>
    %73 = vector.extract_strided_slice %46 {offsets = [0, 384], sizes = [2, 128], strides = [1, 1]} : vector<2x512xf32> to vector<2x128xf32>
    %74 = math.tanh %73 : vector<2x128xf32>
    %75 = vector.extract_strided_slice %72 {offsets = [0, 0], sizes = [2, 128], strides = [1, 1]} : vector<2x384xf32> to vector<2x128xf32>
    %76 = vector.extract_strided_slice %72 {offsets = [0, 128], sizes = [2, 128], strides = [1, 1]} : vector<2x384xf32> to vector<2x128xf32>
    %77 = vector.extract_strided_slice %72 {offsets = [0, 256], sizes = [2, 128], strides = [1, 1]} : vector<2x384xf32> to vector<2x128xf32>
    %78 = arith.mulf %76, %32 : vector<2x128xf32>
    %79 = arith.mulf %75, %74 : vector<2x128xf32>
    %80 = arith.addf %78, %79 : vector<2x128xf32>
    %81 = math.tanh %80 : vector<2x128xf32>
    %82 = arith.mulf %77, %81 : vector<2x128xf32>
    %83 = vector.broadcast %2 : vector<1x128xf32> to vector<2x128xf32>
    %84 = arith.mulf %64, %83 : vector<2x128xf32>
    %cst_35 = arith.constant dense<0.000000e+00> : vector<2xf32>
    %85 = vector.multi_reduction <add>, %84, %cst_35 [1] : vector<2x128xf32> to vector<2xf32>
    %86 = vector.shape_cast %85 : vector<2xf32> to vector<2x1xf32>
    %87 = vector.broadcast %3 : vector<1x1xf32> to vector<2x1xf32>
    %88 = arith.addf %86, %87 : vector<2x1xf32>
    %89 = vector.broadcast %c0_i32 : i32 to vector<2x128xi32>
    %90 = arith.cmpi eq, %14, %89 : vector<2x128xi32>
    %91 = vector.shape_cast %88 : vector<2x1xf32> to vector<2x1xf32>
    %92 = vector.broadcast %91 : vector<2x1xf32> to vector<2x128xf32>
    %93 = arith.select %90, %92, %35 : vector<2x128xi1>, vector<2x128xf32>
    %c1_i32_36 = arith.constant 1 : i32
    %94 = tpu.concatenate %82, %64 in 1 : vector<2x128xf32>, vector<2x128xf32> -> vector<2x256xf32>
    %cst_37 = arith.constant dense<0.000000e+00> : vector<2x1024xf32>
    %95 = tpu.matmul %94, %0, %cst_37 {dimension_numbers = #tpu.dot_dimension_numbers<[1], [0], [0], [1], [0, 0, 1, 1], [], []>} : vector<2x256xf32>, vector<256x1024xf32>, vector<2x1024xf32> -> vector<2x1024xf32>
    %96 = vector.extract_strided_slice %95 {offsets = [0, 0], sizes = [2, 512], strides = [1, 1]} : vector<2x1024xf32> to vector<2x512xf32>
    %97 = vector.broadcast %1 : vector<1x512xf32> to vector<2x512xf32>
    %98 = arith.addf %96, %97 : vector<2x512xf32>
    %99 = vector.extract_strided_slice %95 {offsets = [0, 512], sizes = [2, 512], strides = [1, 1]} : vector<2x1024xf32> to vector<2x512xf32>
    %c1_i32_38 = arith.constant 1 : i32
    %100 = arith.addi %c1_i32_36, %c1_i32_38 : i32
    %101 = arith.index_cast %100 : i32 to index
    %c0_39 = arith.constant 0 : index
    %c0_40 = arith.constant 0 : index
    %102 = vector.load %arg9[%101, %c0_39, %c0_40] : memref<9x2x512xf32, #tpu.memory_space<vmem>>, vector<1x2x512xf32>
    %103 = vector.shape_cast %102 : vector<1x2x512xf32> to vector<2x512xf32>
    %104 = arith.addf %99, %103 : vector<2x512xf32>
    %105 = vector.extract_strided_slice %98 {offsets = [0, 0], sizes = [2, 384], strides = [1, 1]} : vector<2x512xf32> to vector<2x384xf32>
    %cst_41 = arith.constant 5.000000e-01 : f32
    %106 = vector.broadcast %cst_41 : f32 to vector<2x384xf32>
    %107 = arith.mulf %106, %105 : vector<2x384xf32>
    %108 = math.tanh %107 : vector<2x384xf32>
    %cst_42 = arith.constant 5.000000e-01 : f32
    %109 = vector.broadcast %cst_42 : f32 to vector<2x384xf32>
    %110 = arith.mulf %109, %108 : vector<2x384xf32>
    %cst_43 = arith.constant 5.000000e-01 : f32
    %111 = vector.broadcast %cst_43 : f32 to vector<2x384xf32>
    %112 = arith.addf %110, %111 : vector<2x384xf32>
    %113 = vector.extract_strided_slice %98 {offsets = [0, 384], sizes = [2, 128], strides = [1, 1]} : vector<2x512xf32> to vector<2x128xf32>
    %114 = math.tanh %113 : vector<2x128xf32>
    %115 = vector.extract_strided_slice %112 {offsets = [0, 0], sizes = [2, 128], strides = [1, 1]} : vector<2x384xf32> to vector<2x128xf32>
    %116 = vector.extract_strided_slice %112 {offsets = [0, 128], sizes = [2, 128], strides = [1, 1]} : vector<2x384xf32> to vector<2x128xf32>
    %117 = vector.extract_strided_slice %112 {offsets = [0, 256], sizes = [2, 128], strides = [1, 1]} : vector<2x384xf32> to vector<2x128xf32>
    %118 = arith.mulf %116, %62 : vector<2x128xf32>
    %119 = arith.mulf %115, %114 : vector<2x128xf32>
    %120 = arith.addf %118, %119 : vector<2x128xf32>
    %121 = math.tanh %120 : vector<2x128xf32>
    %122 = arith.mulf %117, %121 : vector<2x128xf32>
    %123 = vector.extract_strided_slice %104 {offsets = [0, 0], sizes = [2, 384], strides = [1, 1]} : vector<2x512xf32> to vector<2x384xf32>
    %cst_44 = arith.constant 5.000000e-01 : f32
    %124 = vector.broadcast %cst_44 : f32 to vector<2x384xf32>
    %125 = arith.mulf %124, %123 : vector<2x384xf32>
    %126 = math.tanh %125 : vector<2x384xf32>
    %cst_45 = arith.constant 5.000000e-01 : f32
    %127 = vector.broadcast %cst_45 : f32 to vector<2x384xf32>
    %128 = arith.mulf %127, %126 : vector<2x384xf32>
    %cst_46 = arith.constant 5.000000e-01 : f32
    %129 = vector.broadcast %cst_46 : f32 to vector<2x384xf32>
    %130 = arith.addf %128, %129 : vector<2x384xf32>
    %131 = vector.extract_strided_slice %104 {offsets = [0, 384], sizes = [2, 128], strides = [1, 1]} : vector<2x512xf32> to vector<2x128xf32>
    %132 = math.tanh %131 : vector<2x128xf32>
    %133 = vector.extract_strided_slice %130 {offsets = [0, 0], sizes = [2, 128], strides = [1, 1]} : vector<2x384xf32> to vector<2x128xf32>
    %134 = vector.extract_strided_slice %130 {offsets = [0, 128], sizes = [2, 128], strides = [1, 1]} : vector<2x384xf32> to vector<2x128xf32>
    %135 = vector.extract_strided_slice %130 {offsets = [0, 256], sizes = [2, 128], strides = [1, 1]} : vector<2x384xf32> to vector<2x128xf32>
    %136 = arith.mulf %134, %80 : vector<2x128xf32>
    %137 = arith.mulf %133, %132 : vector<2x128xf32>
    %138 = arith.addf %136, %137 : vector<2x128xf32>
    %139 = math.tanh %138 : vector<2x128xf32>
    %140 = arith.mulf %135, %139 : vector<2x128xf32>
    %141 = vector.broadcast %2 : vector<1x128xf32> to vector<2x128xf32>
    %142 = arith.mulf %122, %141 : vector<2x128xf32>
    %cst_47 = arith.constant dense<0.000000e+00> : vector<2xf32>
    %143 = vector.multi_reduction <add>, %142, %cst_47 [1] : vector<2x128xf32> to vector<2xf32>
    %144 = vector.shape_cast %143 : vector<2xf32> to vector<2x1xf32>
    %145 = vector.broadcast %3 : vector<1x1xf32> to vector<2x1xf32>
    %146 = arith.addf %144, %145 : vector<2x1xf32>
    %147 = vector.broadcast %c1_i32_36 : i32 to vector<2x128xi32>
    %148 = arith.cmpi eq, %14, %147 : vector<2x128xi32>
    %149 = vector.shape_cast %146 : vector<2x1xf32> to vector<2x1xf32>
    %150 = vector.broadcast %149 : vector<2x1xf32> to vector<2x128xf32>
    %151 = arith.select %148, %150, %93 : vector<2x128xi1>, vector<2x128xf32>
    %c2_i32 = arith.constant 2 : i32
    %152 = tpu.concatenate %140, %122 in 1 : vector<2x128xf32>, vector<2x128xf32> -> vector<2x256xf32>
    %cst_48 = arith.constant dense<0.000000e+00> : vector<2x1024xf32>
    %153 = tpu.matmul %152, %0, %cst_48 {dimension_numbers = #tpu.dot_dimension_numbers<[1], [0], [0], [1], [0, 0, 1, 1], [], []>} : vector<2x256xf32>, vector<256x1024xf32>, vector<2x1024xf32> -> vector<2x1024xf32>
    %154 = vector.extract_strided_slice %153 {offsets = [0, 0], sizes = [2, 512], strides = [1, 1]} : vector<2x1024xf32> to vector<2x512xf32>
    %155 = vector.broadcast %1 : vector<1x512xf32> to vector<2x512xf32>
    %156 = arith.addf %154, %155 : vector<2x512xf32>
    %157 = vector.extract_strided_slice %153 {offsets = [0, 512], sizes = [2, 512], strides = [1, 1]} : vector<2x1024xf32> to vector<2x512xf32>
    %c1_i32_49 = arith.constant 1 : i32
    %158 = arith.addi %c2_i32, %c1_i32_49 : i32
    %159 = arith.index_cast %158 : i32 to index
    %c0_50 = arith.constant 0 : index
    %c0_51 = arith.constant 0 : index
    %160 = vector.load %arg9[%159, %c0_50, %c0_51] : memref<9x2x512xf32, #tpu.memory_space<vmem>>, vector<1x2x512xf32>
    %161 = vector.shape_cast %160 : vector<1x2x512xf32> to vector<2x512xf32>
    %162 = arith.addf %157, %161 : vector<2x512xf32>
    %163 = vector.extract_strided_slice %156 {offsets = [0, 0], sizes = [2, 384], strides = [1, 1]} : vector<2x512xf32> to vector<2x384xf32>
    %cst_52 = arith.constant 5.000000e-01 : f32
    %164 = vector.broadcast %cst_52 : f32 to vector<2x384xf32>
    %165 = arith.mulf %164, %163 : vector<2x384xf32>
    %166 = math.tanh %165 : vector<2x384xf32>
    %cst_53 = arith.constant 5.000000e-01 : f32
    %167 = vector.broadcast %cst_53 : f32 to vector<2x384xf32>
    %168 = arith.mulf %167, %166 : vector<2x384xf32>
    %cst_54 = arith.constant 5.000000e-01 : f32
    %169 = vector.broadcast %cst_54 : f32 to vector<2x384xf32>
    %170 = arith.addf %168, %169 : vector<2x384xf32>
    %171 = vector.extract_strided_slice %156 {offsets = [0, 384], sizes = [2, 128], strides = [1, 1]} : vector<2x512xf32> to vector<2x128xf32>
    %172 = math.tanh %171 : vector<2x128xf32>
    %173 = vector.extract_strided_slice %170 {offsets = [0, 0], sizes = [2, 128], strides = [1, 1]} : vector<2x384xf32> to vector<2x128xf32>
    %174 = vector.extract_strided_slice %170 {offsets = [0, 128], sizes = [2, 128], strides = [1, 1]} : vector<2x384xf32> to vector<2x128xf32>
    %175 = vector.extract_strided_slice %170 {offsets = [0, 256], sizes = [2, 128], strides = [1, 1]} : vector<2x384xf32> to vector<2x128xf32>
    %176 = arith.mulf %174, %120 : vector<2x128xf32>
    %177 = arith.mulf %173, %172 : vector<2x128xf32>
    %178 = arith.addf %176, %177 : vector<2x128xf32>
    %179 = math.tanh %178 : vector<2x128xf32>
    %180 = arith.mulf %175, %179 : vector<2x128xf32>
    %181 = vector.extract_strided_slice %162 {offsets = [0, 0], sizes = [2, 384], strides = [1, 1]} : vector<2x512xf32> to vector<2x384xf32>
    %cst_55 = arith.constant 5.000000e-01 : f32
    %182 = vector.broadcast %cst_55 : f32 to vector<2x384xf32>
    %183 = arith.mulf %182, %181 : vector<2x384xf32>
    %184 = math.tanh %183 : vector<2x384xf32>
    %cst_56 = arith.constant 5.000000e-01 : f32
    %185 = vector.broadcast %cst_56 : f32 to vector<2x384xf32>
    %186 = arith.mulf %185, %184 : vector<2x384xf32>
    %cst_57 = arith.constant 5.000000e-01 : f32
    %187 = vector.broadcast %cst_57 : f32 to vector<2x384xf32>
    %188 = arith.addf %186, %187 : vector<2x384xf32>
    %189 = vector.extract_strided_slice %162 {offsets = [0, 384], sizes = [2, 128], strides = [1, 1]} : vector<2x512xf32> to vector<2x128xf32>
    %190 = math.tanh %189 : vector<2x128xf32>
    %191 = vector.extract_strided_slice %188 {offsets = [0, 0], sizes = [2, 128], strides = [1, 1]} : vector<2x384xf32> to vector<2x128xf32>
    %192 = vector.extract_strided_slice %188 {offsets = [0, 128], sizes = [2, 128], strides = [1, 1]} : vector<2x384xf32> to vector<2x128xf32>
    %193 = vector.extract_strided_slice %188 {offsets = [0, 256], sizes = [2, 128], strides = [1, 1]} : vector<2x384xf32> to vector<2x128xf32>
    %194 = arith.mulf %192, %138 : vector<2x128xf32>
    %195 = arith.mulf %191, %190 : vector<2x128xf32>
    %196 = arith.addf %194, %195 : vector<2x128xf32>
    %197 = math.tanh %196 : vector<2x128xf32>
    %198 = arith.mulf %193, %197 : vector<2x128xf32>
    %199 = vector.broadcast %2 : vector<1x128xf32> to vector<2x128xf32>
    %200 = arith.mulf %180, %199 : vector<2x128xf32>
    %cst_58 = arith.constant dense<0.000000e+00> : vector<2xf32>
    %201 = vector.multi_reduction <add>, %200, %cst_58 [1] : vector<2x128xf32> to vector<2xf32>
    %202 = vector.shape_cast %201 : vector<2xf32> to vector<2x1xf32>
    %203 = vector.broadcast %3 : vector<1x1xf32> to vector<2x1xf32>
    %204 = arith.addf %202, %203 : vector<2x1xf32>
    %205 = vector.broadcast %c2_i32 : i32 to vector<2x128xi32>
    %206 = arith.cmpi eq, %14, %205 : vector<2x128xi32>
    %207 = vector.shape_cast %204 : vector<2x1xf32> to vector<2x1xf32>
    %208 = vector.broadcast %207 : vector<2x1xf32> to vector<2x128xf32>
    %209 = arith.select %206, %208, %151 : vector<2x128xi1>, vector<2x128xf32>
    %c3_i32 = arith.constant 3 : i32
    %210 = tpu.concatenate %198, %180 in 1 : vector<2x128xf32>, vector<2x128xf32> -> vector<2x256xf32>
    %cst_59 = arith.constant dense<0.000000e+00> : vector<2x1024xf32>
    %211 = tpu.matmul %210, %0, %cst_59 {dimension_numbers = #tpu.dot_dimension_numbers<[1], [0], [0], [1], [0, 0, 1, 1], [], []>} : vector<2x256xf32>, vector<256x1024xf32>, vector<2x1024xf32> -> vector<2x1024xf32>
    %212 = vector.extract_strided_slice %211 {offsets = [0, 0], sizes = [2, 512], strides = [1, 1]} : vector<2x1024xf32> to vector<2x512xf32>
    %213 = vector.broadcast %1 : vector<1x512xf32> to vector<2x512xf32>
    %214 = arith.addf %212, %213 : vector<2x512xf32>
    %215 = vector.extract_strided_slice %211 {offsets = [0, 512], sizes = [2, 512], strides = [1, 1]} : vector<2x1024xf32> to vector<2x512xf32>
    %c1_i32_60 = arith.constant 1 : i32
    %216 = arith.addi %c3_i32, %c1_i32_60 : i32
    %217 = arith.index_cast %216 : i32 to index
    %c0_61 = arith.constant 0 : index
    %c0_62 = arith.constant 0 : index
    %218 = vector.load %arg9[%217, %c0_61, %c0_62] : memref<9x2x512xf32, #tpu.memory_space<vmem>>, vector<1x2x512xf32>
    %219 = vector.shape_cast %218 : vector<1x2x512xf32> to vector<2x512xf32>
    %220 = arith.addf %215, %219 : vector<2x512xf32>
    %221 = vector.extract_strided_slice %214 {offsets = [0, 0], sizes = [2, 384], strides = [1, 1]} : vector<2x512xf32> to vector<2x384xf32>
    %cst_63 = arith.constant 5.000000e-01 : f32
    %222 = vector.broadcast %cst_63 : f32 to vector<2x384xf32>
    %223 = arith.mulf %222, %221 : vector<2x384xf32>
    %224 = math.tanh %223 : vector<2x384xf32>
    %cst_64 = arith.constant 5.000000e-01 : f32
    %225 = vector.broadcast %cst_64 : f32 to vector<2x384xf32>
    %226 = arith.mulf %225, %224 : vector<2x384xf32>
    %cst_65 = arith.constant 5.000000e-01 : f32
    %227 = vector.broadcast %cst_65 : f32 to vector<2x384xf32>
    %228 = arith.addf %226, %227 : vector<2x384xf32>
    %229 = vector.extract_strided_slice %214 {offsets = [0, 384], sizes = [2, 128], strides = [1, 1]} : vector<2x512xf32> to vector<2x128xf32>
    %230 = math.tanh %229 : vector<2x128xf32>
    %231 = vector.extract_strided_slice %228 {offsets = [0, 0], sizes = [2, 128], strides = [1, 1]} : vector<2x384xf32> to vector<2x128xf32>
    %232 = vector.extract_strided_slice %228 {offsets = [0, 128], sizes = [2, 128], strides = [1, 1]} : vector<2x384xf32> to vector<2x128xf32>
    %233 = vector.extract_strided_slice %228 {offsets = [0, 256], sizes = [2, 128], strides = [1, 1]} : vector<2x384xf32> to vector<2x128xf32>
    %234 = arith.mulf %232, %178 : vector<2x128xf32>
    %235 = arith.mulf %231, %230 : vector<2x128xf32>
    %236 = arith.addf %234, %235 : vector<2x128xf32>
    %237 = math.tanh %236 : vector<2x128xf32>
    %238 = arith.mulf %233, %237 : vector<2x128xf32>
    %239 = vector.extract_strided_slice %220 {offsets = [0, 0], sizes = [2, 384], strides = [1, 1]} : vector<2x512xf32> to vector<2x384xf32>
    %cst_66 = arith.constant 5.000000e-01 : f32
    %240 = vector.broadcast %cst_66 : f32 to vector<2x384xf32>
    %241 = arith.mulf %240, %239 : vector<2x384xf32>
    %242 = math.tanh %241 : vector<2x384xf32>
    %cst_67 = arith.constant 5.000000e-01 : f32
    %243 = vector.broadcast %cst_67 : f32 to vector<2x384xf32>
    %244 = arith.mulf %243, %242 : vector<2x384xf32>
    %cst_68 = arith.constant 5.000000e-01 : f32
    %245 = vector.broadcast %cst_68 : f32 to vector<2x384xf32>
    %246 = arith.addf %244, %245 : vector<2x384xf32>
    %247 = vector.extract_strided_slice %220 {offsets = [0, 384], sizes = [2, 128], strides = [1, 1]} : vector<2x512xf32> to vector<2x128xf32>
    %248 = math.tanh %247 : vector<2x128xf32>
    %249 = vector.extract_strided_slice %246 {offsets = [0, 0], sizes = [2, 128], strides = [1, 1]} : vector<2x384xf32> to vector<2x128xf32>
    %250 = vector.extract_strided_slice %246 {offsets = [0, 128], sizes = [2, 128], strides = [1, 1]} : vector<2x384xf32> to vector<2x128xf32>
    %251 = vector.extract_strided_slice %246 {offsets = [0, 256], sizes = [2, 128], strides = [1, 1]} : vector<2x384xf32> to vector<2x128xf32>
    %252 = arith.mulf %250, %196 : vector<2x128xf32>
    %253 = arith.mulf %249, %248 : vector<2x128xf32>
    %254 = arith.addf %252, %253 : vector<2x128xf32>
    %255 = math.tanh %254 : vector<2x128xf32>
    %256 = arith.mulf %251, %255 : vector<2x128xf32>
    %257 = vector.broadcast %2 : vector<1x128xf32> to vector<2x128xf32>
    %258 = arith.mulf %238, %257 : vector<2x128xf32>
    %cst_69 = arith.constant dense<0.000000e+00> : vector<2xf32>
    %259 = vector.multi_reduction <add>, %258, %cst_69 [1] : vector<2x128xf32> to vector<2xf32>
    %260 = vector.shape_cast %259 : vector<2xf32> to vector<2x1xf32>
    %261 = vector.broadcast %3 : vector<1x1xf32> to vector<2x1xf32>
    %262 = arith.addf %260, %261 : vector<2x1xf32>
    %263 = vector.broadcast %c3_i32 : i32 to vector<2x128xi32>
    %264 = arith.cmpi eq, %14, %263 : vector<2x128xi32>
    %265 = vector.shape_cast %262 : vector<2x1xf32> to vector<2x1xf32>
    %266 = vector.broadcast %265 : vector<2x1xf32> to vector<2x128xf32>
    %267 = arith.select %264, %266, %209 : vector<2x128xi1>, vector<2x128xf32>
    %c4_i32 = arith.constant 4 : i32
    %268 = tpu.concatenate %256, %238 in 1 : vector<2x128xf32>, vector<2x128xf32> -> vector<2x256xf32>
    %cst_70 = arith.constant dense<0.000000e+00> : vector<2x1024xf32>
    %269 = tpu.matmul %268, %0, %cst_70 {dimension_numbers = #tpu.dot_dimension_numbers<[1], [0], [0], [1], [0, 0, 1, 1], [], []>} : vector<2x256xf32>, vector<256x1024xf32>, vector<2x1024xf32> -> vector<2x1024xf32>
    %270 = vector.extract_strided_slice %269 {offsets = [0, 0], sizes = [2, 512], strides = [1, 1]} : vector<2x1024xf32> to vector<2x512xf32>
    %271 = vector.broadcast %1 : vector<1x512xf32> to vector<2x512xf32>
    %272 = arith.addf %270, %271 : vector<2x512xf32>
    %273 = vector.extract_strided_slice %269 {offsets = [0, 512], sizes = [2, 512], strides = [1, 1]} : vector<2x1024xf32> to vector<2x512xf32>
    %c1_i32_71 = arith.constant 1 : i32
    %274 = arith.addi %c4_i32, %c1_i32_71 : i32
    %275 = arith.index_cast %274 : i32 to index
    %c0_72 = arith.constant 0 : index
    %c0_73 = arith.constant 0 : index
    %276 = vector.load %arg9[%275, %c0_72, %c0_73] : memref<9x2x512xf32, #tpu.memory_space<vmem>>, vector<1x2x512xf32>
    %277 = vector.shape_cast %276 : vector<1x2x512xf32> to vector<2x512xf32>
    %278 = arith.addf %273, %277 : vector<2x512xf32>
    %279 = vector.extract_strided_slice %272 {offsets = [0, 0], sizes = [2, 384], strides = [1, 1]} : vector<2x512xf32> to vector<2x384xf32>
    %cst_74 = arith.constant 5.000000e-01 : f32
    %280 = vector.broadcast %cst_74 : f32 to vector<2x384xf32>
    %281 = arith.mulf %280, %279 : vector<2x384xf32>
    %282 = math.tanh %281 : vector<2x384xf32>
    %cst_75 = arith.constant 5.000000e-01 : f32
    %283 = vector.broadcast %cst_75 : f32 to vector<2x384xf32>
    %284 = arith.mulf %283, %282 : vector<2x384xf32>
    %cst_76 = arith.constant 5.000000e-01 : f32
    %285 = vector.broadcast %cst_76 : f32 to vector<2x384xf32>
    %286 = arith.addf %284, %285 : vector<2x384xf32>
    %287 = vector.extract_strided_slice %272 {offsets = [0, 384], sizes = [2, 128], strides = [1, 1]} : vector<2x512xf32> to vector<2x128xf32>
    %288 = math.tanh %287 : vector<2x128xf32>
    %289 = vector.extract_strided_slice %286 {offsets = [0, 0], sizes = [2, 128], strides = [1, 1]} : vector<2x384xf32> to vector<2x128xf32>
    %290 = vector.extract_strided_slice %286 {offsets = [0, 128], sizes = [2, 128], strides = [1, 1]} : vector<2x384xf32> to vector<2x128xf32>
    %291 = vector.extract_strided_slice %286 {offsets = [0, 256], sizes = [2, 128], strides = [1, 1]} : vector<2x384xf32> to vector<2x128xf32>
    %292 = arith.mulf %290, %236 : vector<2x128xf32>
    %293 = arith.mulf %289, %288 : vector<2x128xf32>
    %294 = arith.addf %292, %293 : vector<2x128xf32>
    %295 = math.tanh %294 : vector<2x128xf32>
    %296 = arith.mulf %291, %295 : vector<2x128xf32>
    %297 = vector.extract_strided_slice %278 {offsets = [0, 0], sizes = [2, 384], strides = [1, 1]} : vector<2x512xf32> to vector<2x384xf32>
    %cst_77 = arith.constant 5.000000e-01 : f32
    %298 = vector.broadcast %cst_77 : f32 to vector<2x384xf32>
    %299 = arith.mulf %298, %297 : vector<2x384xf32>
    %300 = math.tanh %299 : vector<2x384xf32>
    %cst_78 = arith.constant 5.000000e-01 : f32
    %301 = vector.broadcast %cst_78 : f32 to vector<2x384xf32>
    %302 = arith.mulf %301, %300 : vector<2x384xf32>
    %cst_79 = arith.constant 5.000000e-01 : f32
    %303 = vector.broadcast %cst_79 : f32 to vector<2x384xf32>
    %304 = arith.addf %302, %303 : vector<2x384xf32>
    %305 = vector.extract_strided_slice %278 {offsets = [0, 384], sizes = [2, 128], strides = [1, 1]} : vector<2x512xf32> to vector<2x128xf32>
    %306 = math.tanh %305 : vector<2x128xf32>
    %307 = vector.extract_strided_slice %304 {offsets = [0, 0], sizes = [2, 128], strides = [1, 1]} : vector<2x384xf32> to vector<2x128xf32>
    %308 = vector.extract_strided_slice %304 {offsets = [0, 128], sizes = [2, 128], strides = [1, 1]} : vector<2x384xf32> to vector<2x128xf32>
    %309 = vector.extract_strided_slice %304 {offsets = [0, 256], sizes = [2, 128], strides = [1, 1]} : vector<2x384xf32> to vector<2x128xf32>
    %310 = arith.mulf %308, %254 : vector<2x128xf32>
    %311 = arith.mulf %307, %306 : vector<2x128xf32>
    %312 = arith.addf %310, %311 : vector<2x128xf32>
    %313 = math.tanh %312 : vector<2x128xf32>
    %314 = arith.mulf %309, %313 : vector<2x128xf32>
    %315 = vector.broadcast %2 : vector<1x128xf32> to vector<2x128xf32>
    %316 = arith.mulf %296, %315 : vector<2x128xf32>
    %cst_80 = arith.constant dense<0.000000e+00> : vector<2xf32>
    %317 = vector.multi_reduction <add>, %316, %cst_80 [1] : vector<2x128xf32> to vector<2xf32>
    %318 = vector.shape_cast %317 : vector<2xf32> to vector<2x1xf32>
    %319 = vector.broadcast %3 : vector<1x1xf32> to vector<2x1xf32>
    %320 = arith.addf %318, %319 : vector<2x1xf32>
    %321 = vector.broadcast %c4_i32 : i32 to vector<2x128xi32>
    %322 = arith.cmpi eq, %14, %321 : vector<2x128xi32>
    %323 = vector.shape_cast %320 : vector<2x1xf32> to vector<2x1xf32>
    %324 = vector.broadcast %323 : vector<2x1xf32> to vector<2x128xf32>
    %325 = arith.select %322, %324, %267 : vector<2x128xi1>, vector<2x128xf32>
    %c5_i32 = arith.constant 5 : i32
    %326 = tpu.concatenate %314, %296 in 1 : vector<2x128xf32>, vector<2x128xf32> -> vector<2x256xf32>
    %cst_81 = arith.constant dense<0.000000e+00> : vector<2x1024xf32>
    %327 = tpu.matmul %326, %0, %cst_81 {dimension_numbers = #tpu.dot_dimension_numbers<[1], [0], [0], [1], [0, 0, 1, 1], [], []>} : vector<2x256xf32>, vector<256x1024xf32>, vector<2x1024xf32> -> vector<2x1024xf32>
    %328 = vector.extract_strided_slice %327 {offsets = [0, 0], sizes = [2, 512], strides = [1, 1]} : vector<2x1024xf32> to vector<2x512xf32>
    %329 = vector.broadcast %1 : vector<1x512xf32> to vector<2x512xf32>
    %330 = arith.addf %328, %329 : vector<2x512xf32>
    %331 = vector.extract_strided_slice %327 {offsets = [0, 512], sizes = [2, 512], strides = [1, 1]} : vector<2x1024xf32> to vector<2x512xf32>
    %c1_i32_82 = arith.constant 1 : i32
    %332 = arith.addi %c5_i32, %c1_i32_82 : i32
    %333 = arith.index_cast %332 : i32 to index
    %c0_83 = arith.constant 0 : index
    %c0_84 = arith.constant 0 : index
    %334 = vector.load %arg9[%333, %c0_83, %c0_84] : memref<9x2x512xf32, #tpu.memory_space<vmem>>, vector<1x2x512xf32>
    %335 = vector.shape_cast %334 : vector<1x2x512xf32> to vector<2x512xf32>
    %336 = arith.addf %331, %335 : vector<2x512xf32>
    %337 = vector.extract_strided_slice %330 {offsets = [0, 0], sizes = [2, 384], strides = [1, 1]} : vector<2x512xf32> to vector<2x384xf32>
    %cst_85 = arith.constant 5.000000e-01 : f32
    %338 = vector.broadcast %cst_85 : f32 to vector<2x384xf32>
    %339 = arith.mulf %338, %337 : vector<2x384xf32>
    %340 = math.tanh %339 : vector<2x384xf32>
    %cst_86 = arith.constant 5.000000e-01 : f32
    %341 = vector.broadcast %cst_86 : f32 to vector<2x384xf32>
    %342 = arith.mulf %341, %340 : vector<2x384xf32>
    %cst_87 = arith.constant 5.000000e-01 : f32
    %343 = vector.broadcast %cst_87 : f32 to vector<2x384xf32>
    %344 = arith.addf %342, %343 : vector<2x384xf32>
    %345 = vector.extract_strided_slice %330 {offsets = [0, 384], sizes = [2, 128], strides = [1, 1]} : vector<2x512xf32> to vector<2x128xf32>
    %346 = math.tanh %345 : vector<2x128xf32>
    %347 = vector.extract_strided_slice %344 {offsets = [0, 0], sizes = [2, 128], strides = [1, 1]} : vector<2x384xf32> to vector<2x128xf32>
    %348 = vector.extract_strided_slice %344 {offsets = [0, 128], sizes = [2, 128], strides = [1, 1]} : vector<2x384xf32> to vector<2x128xf32>
    %349 = vector.extract_strided_slice %344 {offsets = [0, 256], sizes = [2, 128], strides = [1, 1]} : vector<2x384xf32> to vector<2x128xf32>
    %350 = arith.mulf %348, %294 : vector<2x128xf32>
    %351 = arith.mulf %347, %346 : vector<2x128xf32>
    %352 = arith.addf %350, %351 : vector<2x128xf32>
    %353 = math.tanh %352 : vector<2x128xf32>
    %354 = arith.mulf %349, %353 : vector<2x128xf32>
    %355 = vector.extract_strided_slice %336 {offsets = [0, 0], sizes = [2, 384], strides = [1, 1]} : vector<2x512xf32> to vector<2x384xf32>
    %cst_88 = arith.constant 5.000000e-01 : f32
    %356 = vector.broadcast %cst_88 : f32 to vector<2x384xf32>
    %357 = arith.mulf %356, %355 : vector<2x384xf32>
    %358 = math.tanh %357 : vector<2x384xf32>
    %cst_89 = arith.constant 5.000000e-01 : f32
    %359 = vector.broadcast %cst_89 : f32 to vector<2x384xf32>
    %360 = arith.mulf %359, %358 : vector<2x384xf32>
    %cst_90 = arith.constant 5.000000e-01 : f32
    %361 = vector.broadcast %cst_90 : f32 to vector<2x384xf32>
    %362 = arith.addf %360, %361 : vector<2x384xf32>
    %363 = vector.extract_strided_slice %336 {offsets = [0, 384], sizes = [2, 128], strides = [1, 1]} : vector<2x512xf32> to vector<2x128xf32>
    %364 = math.tanh %363 : vector<2x128xf32>
    %365 = vector.extract_strided_slice %362 {offsets = [0, 0], sizes = [2, 128], strides = [1, 1]} : vector<2x384xf32> to vector<2x128xf32>
    %366 = vector.extract_strided_slice %362 {offsets = [0, 128], sizes = [2, 128], strides = [1, 1]} : vector<2x384xf32> to vector<2x128xf32>
    %367 = vector.extract_strided_slice %362 {offsets = [0, 256], sizes = [2, 128], strides = [1, 1]} : vector<2x384xf32> to vector<2x128xf32>
    %368 = arith.mulf %366, %312 : vector<2x128xf32>
    %369 = arith.mulf %365, %364 : vector<2x128xf32>
    %370 = arith.addf %368, %369 : vector<2x128xf32>
    %371 = math.tanh %370 : vector<2x128xf32>
    %372 = arith.mulf %367, %371 : vector<2x128xf32>
    %373 = vector.broadcast %2 : vector<1x128xf32> to vector<2x128xf32>
    %374 = arith.mulf %354, %373 : vector<2x128xf32>
    %cst_91 = arith.constant dense<0.000000e+00> : vector<2xf32>
    %375 = vector.multi_reduction <add>, %374, %cst_91 [1] : vector<2x128xf32> to vector<2xf32>
    %376 = vector.shape_cast %375 : vector<2xf32> to vector<2x1xf32>
    %377 = vector.broadcast %3 : vector<1x1xf32> to vector<2x1xf32>
    %378 = arith.addf %376, %377 : vector<2x1xf32>
    %379 = vector.broadcast %c5_i32 : i32 to vector<2x128xi32>
    %380 = arith.cmpi eq, %14, %379 : vector<2x128xi32>
    %381 = vector.shape_cast %378 : vector<2x1xf32> to vector<2x1xf32>
    %382 = vector.broadcast %381 : vector<2x1xf32> to vector<2x128xf32>
    %383 = arith.select %380, %382, %325 : vector<2x128xi1>, vector<2x128xf32>
    %c6_i32 = arith.constant 6 : i32
    %384 = tpu.concatenate %372, %354 in 1 : vector<2x128xf32>, vector<2x128xf32> -> vector<2x256xf32>
    %cst_92 = arith.constant dense<0.000000e+00> : vector<2x1024xf32>
    %385 = tpu.matmul %384, %0, %cst_92 {dimension_numbers = #tpu.dot_dimension_numbers<[1], [0], [0], [1], [0, 0, 1, 1], [], []>} : vector<2x256xf32>, vector<256x1024xf32>, vector<2x1024xf32> -> vector<2x1024xf32>
    %386 = vector.extract_strided_slice %385 {offsets = [0, 0], sizes = [2, 512], strides = [1, 1]} : vector<2x1024xf32> to vector<2x512xf32>
    %387 = vector.broadcast %1 : vector<1x512xf32> to vector<2x512xf32>
    %388 = arith.addf %386, %387 : vector<2x512xf32>
    %389 = vector.extract_strided_slice %385 {offsets = [0, 512], sizes = [2, 512], strides = [1, 1]} : vector<2x1024xf32> to vector<2x512xf32>
    %c1_i32_93 = arith.constant 1 : i32
    %390 = arith.addi %c6_i32, %c1_i32_93 : i32
    %391 = arith.index_cast %390 : i32 to index
    %c0_94 = arith.constant 0 : index
    %c0_95 = arith.constant 0 : index
    %392 = vector.load %arg9[%391, %c0_94, %c0_95] : memref<9x2x512xf32, #tpu.memory_space<vmem>>, vector<1x2x512xf32>
    %393 = vector.shape_cast %392 : vector<1x2x512xf32> to vector<2x512xf32>
    %394 = arith.addf %389, %393 : vector<2x512xf32>
    %395 = vector.extract_strided_slice %388 {offsets = [0, 0], sizes = [2, 384], strides = [1, 1]} : vector<2x512xf32> to vector<2x384xf32>
    %cst_96 = arith.constant 5.000000e-01 : f32
    %396 = vector.broadcast %cst_96 : f32 to vector<2x384xf32>
    %397 = arith.mulf %396, %395 : vector<2x384xf32>
    %398 = math.tanh %397 : vector<2x384xf32>
    %cst_97 = arith.constant 5.000000e-01 : f32
    %399 = vector.broadcast %cst_97 : f32 to vector<2x384xf32>
    %400 = arith.mulf %399, %398 : vector<2x384xf32>
    %cst_98 = arith.constant 5.000000e-01 : f32
    %401 = vector.broadcast %cst_98 : f32 to vector<2x384xf32>
    %402 = arith.addf %400, %401 : vector<2x384xf32>
    %403 = vector.extract_strided_slice %388 {offsets = [0, 384], sizes = [2, 128], strides = [1, 1]} : vector<2x512xf32> to vector<2x128xf32>
    %404 = math.tanh %403 : vector<2x128xf32>
    %405 = vector.extract_strided_slice %402 {offsets = [0, 0], sizes = [2, 128], strides = [1, 1]} : vector<2x384xf32> to vector<2x128xf32>
    %406 = vector.extract_strided_slice %402 {offsets = [0, 128], sizes = [2, 128], strides = [1, 1]} : vector<2x384xf32> to vector<2x128xf32>
    %407 = vector.extract_strided_slice %402 {offsets = [0, 256], sizes = [2, 128], strides = [1, 1]} : vector<2x384xf32> to vector<2x128xf32>
    %408 = arith.mulf %406, %352 : vector<2x128xf32>
    %409 = arith.mulf %405, %404 : vector<2x128xf32>
    %410 = arith.addf %408, %409 : vector<2x128xf32>
    %411 = math.tanh %410 : vector<2x128xf32>
    %412 = arith.mulf %407, %411 : vector<2x128xf32>
    %413 = vector.extract_strided_slice %394 {offsets = [0, 0], sizes = [2, 384], strides = [1, 1]} : vector<2x512xf32> to vector<2x384xf32>
    %cst_99 = arith.constant 5.000000e-01 : f32
    %414 = vector.broadcast %cst_99 : f32 to vector<2x384xf32>
    %415 = arith.mulf %414, %413 : vector<2x384xf32>
    %416 = math.tanh %415 : vector<2x384xf32>
    %cst_100 = arith.constant 5.000000e-01 : f32
    %417 = vector.broadcast %cst_100 : f32 to vector<2x384xf32>
    %418 = arith.mulf %417, %416 : vector<2x384xf32>
    %cst_101 = arith.constant 5.000000e-01 : f32
    %419 = vector.broadcast %cst_101 : f32 to vector<2x384xf32>
    %420 = arith.addf %418, %419 : vector<2x384xf32>
    %421 = vector.extract_strided_slice %394 {offsets = [0, 384], sizes = [2, 128], strides = [1, 1]} : vector<2x512xf32> to vector<2x128xf32>
    %422 = math.tanh %421 : vector<2x128xf32>
    %423 = vector.extract_strided_slice %420 {offsets = [0, 0], sizes = [2, 128], strides = [1, 1]} : vector<2x384xf32> to vector<2x128xf32>
    %424 = vector.extract_strided_slice %420 {offsets = [0, 128], sizes = [2, 128], strides = [1, 1]} : vector<2x384xf32> to vector<2x128xf32>
    %425 = vector.extract_strided_slice %420 {offsets = [0, 256], sizes = [2, 128], strides = [1, 1]} : vector<2x384xf32> to vector<2x128xf32>
    %426 = arith.mulf %424, %370 : vector<2x128xf32>
    %427 = arith.mulf %423, %422 : vector<2x128xf32>
    %428 = arith.addf %426, %427 : vector<2x128xf32>
    %429 = math.tanh %428 : vector<2x128xf32>
    %430 = arith.mulf %425, %429 : vector<2x128xf32>
    %431 = vector.broadcast %2 : vector<1x128xf32> to vector<2x128xf32>
    %432 = arith.mulf %412, %431 : vector<2x128xf32>
    %cst_102 = arith.constant dense<0.000000e+00> : vector<2xf32>
    %433 = vector.multi_reduction <add>, %432, %cst_102 [1] : vector<2x128xf32> to vector<2xf32>
    %434 = vector.shape_cast %433 : vector<2xf32> to vector<2x1xf32>
    %435 = vector.broadcast %3 : vector<1x1xf32> to vector<2x1xf32>
    %436 = arith.addf %434, %435 : vector<2x1xf32>
    %437 = vector.broadcast %c6_i32 : i32 to vector<2x128xi32>
    %438 = arith.cmpi eq, %14, %437 : vector<2x128xi32>
    %439 = vector.shape_cast %436 : vector<2x1xf32> to vector<2x1xf32>
    %440 = vector.broadcast %439 : vector<2x1xf32> to vector<2x128xf32>
    %441 = arith.select %438, %440, %383 : vector<2x128xi1>, vector<2x128xf32>
    %c7_i32 = arith.constant 7 : i32
    %442 = tpu.concatenate %430, %412 in 1 : vector<2x128xf32>, vector<2x128xf32> -> vector<2x256xf32>
    %cst_103 = arith.constant dense<0.000000e+00> : vector<2x1024xf32>
    %443 = tpu.matmul %442, %0, %cst_103 {dimension_numbers = #tpu.dot_dimension_numbers<[1], [0], [0], [1], [0, 0, 1, 1], [], []>} : vector<2x256xf32>, vector<256x1024xf32>, vector<2x1024xf32> -> vector<2x1024xf32>
    %444 = vector.extract_strided_slice %443 {offsets = [0, 0], sizes = [2, 512], strides = [1, 1]} : vector<2x1024xf32> to vector<2x512xf32>
    %445 = vector.broadcast %1 : vector<1x512xf32> to vector<2x512xf32>
    %446 = arith.addf %444, %445 : vector<2x512xf32>
    %447 = vector.extract_strided_slice %443 {offsets = [0, 512], sizes = [2, 512], strides = [1, 1]} : vector<2x1024xf32> to vector<2x512xf32>
    %c1_i32_104 = arith.constant 1 : i32
    %448 = arith.addi %c7_i32, %c1_i32_104 : i32
    %449 = arith.index_cast %448 : i32 to index
    %c0_105 = arith.constant 0 : index
    %c0_106 = arith.constant 0 : index
    %450 = vector.load %arg9[%449, %c0_105, %c0_106] : memref<9x2x512xf32, #tpu.memory_space<vmem>>, vector<1x2x512xf32>
    %451 = vector.shape_cast %450 : vector<1x2x512xf32> to vector<2x512xf32>
    %452 = arith.addf %447, %451 : vector<2x512xf32>
    %453 = vector.extract_strided_slice %446 {offsets = [0, 0], sizes = [2, 384], strides = [1, 1]} : vector<2x512xf32> to vector<2x384xf32>
    %cst_107 = arith.constant 5.000000e-01 : f32
    %454 = vector.broadcast %cst_107 : f32 to vector<2x384xf32>
    %455 = arith.mulf %454, %453 : vector<2x384xf32>
    %456 = math.tanh %455 : vector<2x384xf32>
    %cst_108 = arith.constant 5.000000e-01 : f32
    %457 = vector.broadcast %cst_108 : f32 to vector<2x384xf32>
    %458 = arith.mulf %457, %456 : vector<2x384xf32>
    %cst_109 = arith.constant 5.000000e-01 : f32
    %459 = vector.broadcast %cst_109 : f32 to vector<2x384xf32>
    %460 = arith.addf %458, %459 : vector<2x384xf32>
    %461 = vector.extract_strided_slice %446 {offsets = [0, 384], sizes = [2, 128], strides = [1, 1]} : vector<2x512xf32> to vector<2x128xf32>
    %462 = math.tanh %461 : vector<2x128xf32>
    %463 = vector.extract_strided_slice %460 {offsets = [0, 0], sizes = [2, 128], strides = [1, 1]} : vector<2x384xf32> to vector<2x128xf32>
    %464 = vector.extract_strided_slice %460 {offsets = [0, 128], sizes = [2, 128], strides = [1, 1]} : vector<2x384xf32> to vector<2x128xf32>
    %465 = vector.extract_strided_slice %460 {offsets = [0, 256], sizes = [2, 128], strides = [1, 1]} : vector<2x384xf32> to vector<2x128xf32>
    %466 = arith.mulf %464, %410 : vector<2x128xf32>
    %467 = arith.mulf %463, %462 : vector<2x128xf32>
    %468 = arith.addf %466, %467 : vector<2x128xf32>
    %469 = math.tanh %468 : vector<2x128xf32>
    %470 = arith.mulf %465, %469 : vector<2x128xf32>
    %471 = vector.extract_strided_slice %452 {offsets = [0, 0], sizes = [2, 384], strides = [1, 1]} : vector<2x512xf32> to vector<2x384xf32>
    %cst_110 = arith.constant 5.000000e-01 : f32
    %472 = vector.broadcast %cst_110 : f32 to vector<2x384xf32>
    %473 = arith.mulf %472, %471 : vector<2x384xf32>
    %474 = math.tanh %473 : vector<2x384xf32>
    %cst_111 = arith.constant 5.000000e-01 : f32
    %475 = vector.broadcast %cst_111 : f32 to vector<2x384xf32>
    %476 = arith.mulf %475, %474 : vector<2x384xf32>
    %cst_112 = arith.constant 5.000000e-01 : f32
    %477 = vector.broadcast %cst_112 : f32 to vector<2x384xf32>
    %478 = arith.addf %476, %477 : vector<2x384xf32>
    %479 = vector.extract_strided_slice %452 {offsets = [0, 384], sizes = [2, 128], strides = [1, 1]} : vector<2x512xf32> to vector<2x128xf32>
    %480 = math.tanh %479 : vector<2x128xf32>
    %481 = vector.extract_strided_slice %478 {offsets = [0, 0], sizes = [2, 128], strides = [1, 1]} : vector<2x384xf32> to vector<2x128xf32>
    %482 = vector.extract_strided_slice %478 {offsets = [0, 128], sizes = [2, 128], strides = [1, 1]} : vector<2x384xf32> to vector<2x128xf32>
    %483 = vector.extract_strided_slice %478 {offsets = [0, 256], sizes = [2, 128], strides = [1, 1]} : vector<2x384xf32> to vector<2x128xf32>
    %484 = arith.mulf %482, %428 : vector<2x128xf32>
    %485 = arith.mulf %481, %480 : vector<2x128xf32>
    %486 = arith.addf %484, %485 : vector<2x128xf32>
    %487 = math.tanh %486 : vector<2x128xf32>
    %488 = arith.mulf %483, %487 : vector<2x128xf32>
    %489 = vector.broadcast %2 : vector<1x128xf32> to vector<2x128xf32>
    %490 = arith.mulf %470, %489 : vector<2x128xf32>
    %cst_113 = arith.constant dense<0.000000e+00> : vector<2xf32>
    %491 = vector.multi_reduction <add>, %490, %cst_113 [1] : vector<2x128xf32> to vector<2xf32>
    %492 = vector.shape_cast %491 : vector<2xf32> to vector<2x1xf32>
    %493 = vector.broadcast %3 : vector<1x1xf32> to vector<2x1xf32>
    %494 = arith.addf %492, %493 : vector<2x1xf32>
    %495 = vector.broadcast %c7_i32 : i32 to vector<2x128xi32>
    %496 = arith.cmpi eq, %14, %495 : vector<2x128xi32>
    %497 = vector.shape_cast %494 : vector<2x1xf32> to vector<2x1xf32>
    %498 = vector.broadcast %497 : vector<2x1xf32> to vector<2x128xf32>
    %499 = arith.select %496, %498, %441 : vector<2x128xi1>, vector<2x128xf32>
    %c8_i32 = arith.constant 8 : i32
    %c0_114 = arith.constant 0 : index
    %c0_115 = arith.constant 0 : index
    %500 = vector.load %arg8[%c0_114, %c0_115] : memref<2x128xf32, #tpu.memory_space<vmem>>, vector<2x128xf32>
    tpu.vector_store %arg8[%c0_114, %c0_115], %499 {strides = array<i32>} : memref<2x128xf32, #tpu.memory_space<vmem>>, vector<2x128xf32>,
    return
  }
  func.func @transform_0(%arg0: i32) -> (i32, i32, i32) {
    %c0_i32 = arith.constant 0 : i32
    %c0_i32_0 = arith.constant 0 : i32
    %c0_i32_1 = arith.constant 0 : i32
    %c0_i32_2 = arith.constant 0 : i32
    return %c0_i32, %c0_i32_0, %c0_i32_1 : i32, i32, i32
  }
  func.func @transform_1(%arg0: i32) -> (i32, i32, i32) {
    %c0_i32 = arith.constant 0 : i32
    %c0_i32_0 = arith.constant 0 : i32
    %c0_i32_1 = arith.constant 0 : i32
    %c0_i32_2 = arith.constant 0 : i32
    return %c0_i32, %c0_i32_0, %c0_i32_1 : i32, i32, i32
  }
  func.func @transform_2(%arg0: i32) -> (i32, i32, i32) {
    %c0_i32 = arith.constant 0 : i32
    %c0_i32_0 = arith.constant 0 : i32
    %c0_i32_1 = arith.constant 0 : i32
    %c0_i32_2 = arith.constant 0 : i32
    return %c0_i32, %c0_i32_0, %c0_i32_1 : i32, i32, i32
  }
  func.func @transform_3(%arg0: i32) -> (i32, i32) {
    %c0_i32 = arith.constant 0 : i32
    %c0_i32_0 = arith.constant 0 : i32
    %c0_i32_1 = arith.constant 0 : i32
    return %c0_i32, %c0_i32_0 : i32, i32
  }
  func.func @transform_4(%arg0: i32) -> (i32, i32) {
    %c0_i32 = arith.constant 0 : i32
    %c0_i32_0 = arith.constant 0 : i32
    %c0_i32_1 = arith.constant 0 : i32
    return %c0_i32, %c0_i32_0 : i32, i32
  }
  func.func @transform_5(%arg0: i32) -> (i32, i32) {
    %c0_i32 = arith.constant 0 : i32
    %c0_i32_0 = arith.constant 0 : i32
    %c0_i32_1 = arith.constant 0 : i32
    return %c0_i32, %c0_i32_0 : i32, i32
  }
  func.func @transform_6(%arg0: i32) -> (i32, i32) {
    %c0_i32 = arith.constant 0 : i32
    %c0_i32_0 = arith.constant 0 : i32
    %c0_i32_1 = arith.constant 0 : i32
    return %c0_i32, %c0_i32_0 : i32, i32
  }
  func.func @transform_7(%arg0: i32) -> (i32, i32) {
    %c0_i32 = arith.constant 0 : i32
    %c0_i32_0 = arith.constant 0 : i32
    %c0_i32_1 = arith.constant 0 : i32
    return %c0_i32, %c0_i32_0 : i32, i32
  }
}

</mosaic_0001>

<llo_original>
// kernel: tpu_custom_call.1
$region0: #{tpu_custom_call.1}
  #allocation0 [shape = 'u32[]', space=smem, size = 0x4, offset = 0x4, fixed_abs, tag = 'smem constant byte address 0x4 - core index']
  #allocation1 [shape = 'u32[144,128]{1,0:T(1,128)}', space=vmem, size = 0x12000, scoped, tag = 'internal scratch']
  #allocation2 [shape = 'f32[9,2,512]{2,1,0:T(2,128)}', space=vmem, size = 0x9000, scoped, tag = 'scratch operand']
  #allocation3 [shape = 'f32[1,1]{1,0:T(1,128)S(1)}', space=vmem, size = 0x200, scoped, tag = 'scoped memory for tpu_custom_call.1']
  %s0 = inlined_call_operand.vmem [shape: f32[9,2,1], index: 0, kind: input, shape index: {}]
  %s1 = inlined_call_operand.vmem [shape: f32[1,1,512], index: 1, kind: input, shape index: {}]
  %s2 = inlined_call_operand.vmem [shape: f32[1,1,512], index: 2, kind: input, shape index: {}]
  %s3 = inlined_call_operand.hbm [shape: f32[256,1024], index: 3, kind: input, shape index: {}]
  %s4 = inlined_call_operand.vmem [shape: f32[1,512], index: 4, kind: input, shape index: {}]
  %s5 = inlined_call_operand.vmem [shape: f32[1,128], index: 5, kind: input, shape index: {}]
  %s6 = inlined_call_operand.<no memory space> [shape: f32[1,1], index: 6, kind: input, shape index: {}]
  %s7 = inlined_call_operand.hbm [shape: f32[2,128], index: 7, kind: output, shape index: {}]
  %s8 = sld [smem:[#allocation0]]
  $region42: #{tpu_custom_call.1} parent=0
    _
  %s10 = ssub.s32 1, %s8
  %s11 = scalar_select 0, %s10, %s8
  %v12 = vstv %s6
  %13 = vst [vmem:[#allocation3] sm:$0x1] %v12
  $region1: #{tpu_custom_call.1} parent=0
    #allocation4 [shape = 'u8[1048576]{0}', space=vmem, size = 0x100000, scoped, tag = 'input window, operand 3, single buffered']
    #allocation5 [shape = 's32[1]{0}', space=sflag, size = 0x4, scoped, tag = 'scoped memory for tpu_custom_call.1']
    #allocation6 [shape = 's32[1]{0}', space=sflag, size = 0x4, scoped, tag = 'scoped memory for tpu_custom_call.1']
    #allocation7 [shape = 'u8[1024]{0}', space=vmem, size = 0x400, scoped, tag = 'output window, operand 0, single buffered']
    %14 = vsyncpa [#allocation5], 0
    %15 = vsyncpa [#allocation6], 0
    // Predicated region
    $region2: #{tpu_custom_call.1} parent=1 // pred_check
      _
    $region3: #{tpu_custom_call.1} parent=1 // pred_check_branch
      %17 = sbr.rel (0) target = $region5
    $region4: #{tpu_custom_call.1} parent=1 // pred_region
      _
    $region5: #{tpu_custom_call.1} parent=1 // pred_fallthru
      _
    // Predicated region
    $region6: #{tpu_custom_call.1} parent=1 // pred_check
      _
    $region7: #{tpu_custom_call.1} parent=1 // pred_check_branch
      %19 = sbr.rel (0) target = $region9
    $region8: #{tpu_custom_call.1} parent=1 // pred_region
      _
    $region9: #{tpu_custom_call.1} parent=1 // pred_fallthru
      _
    // Predicated region
    $region10: #{tpu_custom_call.1} parent=1 // pred_check
      _
    $region11: #{tpu_custom_call.1} parent=1 // pred_check_branch
      %21 = sbr.rel (0) target = $region13
    $region12: #{tpu_custom_call.1} parent=1 // pred_region
      _
    $region13: #{tpu_custom_call.1} parent=1 // pred_fallthru
      _
    // Predicated region
    $region14: #{tpu_custom_call.1} parent=1 // pred_check
      _
    $region15: #{tpu_custom_call.1} parent=1 // pred_check_branch
      %23 = sbr.rel (0) target = $region17
    $region16: #{tpu_custom_call.1} parent=1 // pred_region
      %s25 = ssub.s32 32768, 32768
      %26 = vsyncadd [#allocation5], %s25
      %s27 = sshll.u32 [#allocation4], 4
      %s28 = int_to_ptr.vmem [resolvable:$true] %s27
      %33 = dma.hbm_to_vmem [thread:$0]  %s3, 32768, %s28, [#allocation5], 1024, 1024, 64
    $region17: #{tpu_custom_call.1} parent=1 // pred_fallthru
      _
    // Predicated region
    $region18: #{tpu_custom_call.1} parent=1 // pred_check
      _
    $region19: #{tpu_custom_call.1} parent=1 // pred_check_branch
      %35 = sbr.rel (0) target = $region21
    $region20: #{tpu_custom_call.1} parent=1 // pred_region
      _
    $region21: #{tpu_custom_call.1} parent=1 // pred_fallthru
      _
    // Predicated region
    $region22: #{tpu_custom_call.1} parent=1 // pred_check
      _
    $region23: #{tpu_custom_call.1} parent=1 // pred_check_branch
      %37 = sbr.rel (0) target = $region25
    $region24: #{tpu_custom_call.1} parent=1 // pred_region
      _
    $region25: #{tpu_custom_call.1} parent=1 // pred_fallthru
      _
    // Predicated region
    $region26: #{tpu_custom_call.1} parent=1 // pred_check
      _
    $region27: #{tpu_custom_call.1} parent=1 // pred_check_branch
      %39 = sbr.rel (0) target = $region29
    $region28: #{tpu_custom_call.1} parent=1 // pred_region
      _
    $region29: #{tpu_custom_call.1} parent=1 // pred_fallthru
      _
    // Predicated region
    $region30: #{tpu_custom_call.1} parent=1 // pred_check
      _
    $region31: #{tpu_custom_call.1} parent=1 // pred_check_branch
      %41 = sbr.rel (0) target = $region33
    $region32: #{tpu_custom_call.1} parent=1 // pred_region
      %42 = dma.done [#allocation5], 32768
    $region33: #{tpu_custom_call.1} parent=1 // pred_fallthru
      _
    %v43 = vld [vmem:[#allocation4] sm:$0xff]
    %v44 = vld [vmem:[#allocation4 + $0x8] sm:$0xff]
    %v45 = vld [vmem:[#allocation4 + $0x10] sm:$0xff]
    %v46 = vld [vmem:[#allocation4 + $0x18] sm:$0xff]
    %v47 = vld [vmem:[#allocation4 + $0x20] sm:$0xff]
    %v48 = vld [vmem:[#allocation4 + $0x28] sm:$0xff]
    %v49 = vld [vmem:[#allocation4 + $0x30] sm:$0xff]
    %v50 = vld [vmem:[#allocation4 + $0x38] sm:$0xff]
    %v51 = vld [vmem:[#allocation4 + $0x40] sm:$0xff]
    %v52 = vld [vmem:[#allocation4 + $0x48] sm:$0xff]
    %v53 = vld [vmem:[#allocation4 + $0x50] sm:$0xff]
    %v54 = vld [vmem:[#allocation4 + $0x58] sm:$0xff]
    %v55 = vld [vmem:[#allocation4 + $0x60] sm:$0xff]
    %v56 = vld [vmem:[#allocation4 + $0x68] sm:$0xff]
    %v57 = vld [vmem:[#allocation4 + $0x70] sm:$0xff]
    %v58 = vld [vmem:[#allocation4 + $0x78] sm:$0xff]
    %v59 = vld [vmem:[#allocation4 + $0x80] sm:$0xff]
    %v60 = vld [vmem:[#allocation4 + $0x88] sm:$0xff]
    %v61 = vld [vmem:[#allocation4 + $0x90] sm:$0xff]
    %v62 = vld [vmem:[#allocation4 + $0x98] sm:$0xff]
    %v63 = vld [vmem:[#allocation4 + $0xa0] sm:$0xff]
    %v64 = vld [vmem:[#allocation4 + $0xa8] sm:$0xff]
    %v65 = vld [vmem:[#allocation4 + $0xb0] sm:$0xff]
    %v66 = vld [vmem:[#allocation4 + $0xb8] sm:$0xff]
    %v67 = vld [vmem:[#allocation4 + $0xc0] sm:$0xff]
    %v68 = vld [vmem:[#allocation4 + $0xc8] sm:$0xff]
    %v69 = vld [vmem:[#allocation4 + $0xd0] sm:$0xff]
    %v70 = vld [vmem:[#allocation4 + $0xd8] sm:$0xff]
    %v71 = vld [vmem:[#allocation4 + $0xe0] sm:$0xff]
    %v72 = vld [vmem:[#allocation4 + $0xe8] sm:$0xff]
    %v73 = vld [vmem:[#allocation4 + $0xf0] sm:$0xff]
    %v74 = vld [vmem:[#allocation4 + $0xf8] sm:$0xff]
    %v75 = vld [vmem:[#allocation4 + $0x100] sm:$0xff]
    %v76 = vld [vmem:[#allocation4 + $0x108] sm:$0xff]
    %v77 = vld [vmem:[#allocation4 + $0x110] sm:$0xff]
    %v78 = vld [vmem:[#allocation4 + $0x118] sm:$0xff]
    %v79 = vld [vmem:[#allocation4 + $0x120] sm:$0xff]
    %v80 = vld [vmem:[#allocation4 + $0x128] sm:$0xff]
    %v81 = vld [vmem:[#allocation4 + $0x130] sm:$0xff]
    %v82 = vld [vmem:[#allocation4 + $0x138] sm:$0xff]
    %v83 = vld [vmem:[#allocation4 + $0x140] sm:$0xff]
    %v84 = vld [vmem:[#allocation4 + $0x148] sm:$0xff]
    %v85 = vld [vmem:[#allocation4 + $0x150] sm:$0xff]
    %v86 = vld [vmem:[#allocation4 + $0x158] sm:$0xff]
    %v87 = vld [vmem:[#allocation4 + $0x160] sm:$0xff]
    %v88 = vld [vmem:[#allocation4 + $0x168] sm:$0xff]
    %v89 = vld [vmem:[#allocation4 + $0x170] sm:$0xff]
    %v90 = vld [vmem:[#allocation4 + $0x178] sm:$0xff]
    %v91 = vld [vmem:[#allocation4 + $0x180] sm:$0xff]
    %v92 = vld [vmem:[#allocation4 + $0x188] sm:$0xff]
    %v93 = vld [vmem:[#allocation4 + $0x190] sm:$0xff]
    %v94 = vld [vmem:[#allocation4 + $0x198] sm:$0xff]
    %v95 = vld [vmem:[#allocation4 + $0x1a0] sm:$0xff]
    %v96 = vld [vmem:[#allocation4 + $0x1a8] sm:$0xff]
    %v97 = vld [vmem:[#allocation4 + $0x1b0] sm:$0xff]
    %v98 = vld [vmem:[#allocation4 + $0x1b8] sm:$0xff]
    %v99 = vld [vmem:[#allocation4 + $0x1c0] sm:$0xff]
    %v100 = vld [vmem:[#allocation4 + $0x1c8] sm:$0xff]
    %v101 = vld [vmem:[#allocation4 + $0x1d0] sm:$0xff]
    %v102 = vld [vmem:[#allocation4 + $0x1d8] sm:$0xff]
    %v103 = vld [vmem:[#allocation4 + $0x1e0] sm:$0xff]
    %v104 = vld [vmem:[#allocation4 + $0x1e8] sm:$0xff]
    %v105 = vld [vmem:[#allocation4 + $0x1f0] sm:$0xff]
    %v106 = vld [vmem:[#allocation4 + $0x1f8] sm:$0xff]
    %v107 = vld [vmem:[#allocation4 + $0x200] sm:$0xff]
    %v108 = vld [vmem:[#allocation4 + $0x208] sm:$0xff]
    %v109 = vld [vmem:[#allocation4 + $0x210] sm:$0xff]
    %v110 = vld [vmem:[#allocation4 + $0x218] sm:$0xff]
    %v111 = vld [vmem:[#allocation4 + $0x220] sm:$0xff]
    %v112 = vld [vmem:[#allocation4 + $0x228] sm:$0xff]
    %v113 = vld [vmem:[#allocation4 + $0x230] sm:$0xff]
    %v114 = vld [vmem:[#allocation4 + $0x238] sm:$0xff]
    %v115 = vld [vmem:[#allocation4 + $0x240] sm:$0xff]
    %v116 = vld [vmem:[#allocation4 + $0x248] sm:$0xff]
    %v117 = vld [vmem:[#allocation4 + $0x250] sm:$0xff]
    %v118 = vld [vmem:[#allocation4 + $0x258] sm:$0xff]
    %v119 = vld [vmem:[#allocation4 + $0x260] sm:$0xff]
    %v120 = vld [vmem:[#allocation4 + $0x268] sm:$0xff]
    %v121 = vld [vmem:[#allocation4 + $0x270] sm:$0xff]
    %v122 = vld [vmem:[#allocation4 + $0x278] sm:$0xff]
    %v123 = vld [vmem:[#allocation4 + $0x280] sm:$0xff]
    %v124 = vld [vmem:[#allocation4 + $0x288] sm:$0xff]
    %v125 = vld [vmem:[#allocation4 + $0x290] sm:$0xff]
    %v126 = vld [vmem:[#allocation4 + $0x298] sm:$0xff]
    %v127 = vld [vmem:[#allocation4 + $0x2a0] sm:$0xff]
    %v128 = vld [vmem:[#allocation4 + $0x2a8] sm:$0xff]
    %v129 = vld [vmem:[#allocation4 + $0x2b0] sm:$0xff]
    %v130 = vld [vmem:[#allocation4 + $0x2b8] sm:$0xff]
    %v131 = vld [vmem:[#allocation4 + $0x2c0] sm:$0xff]
    %v132 = vld [vmem:[#allocation4 + $0x2c8] sm:$0xff]
    %v133 = vld [vmem:[#allocation4 + $0x2d0] sm:$0xff]
    %v134 = vld [vmem:[#allocation4 + $0x2d8] sm:$0xff]
    %v135 = vld [vmem:[#allocation4 + $0x2e0] sm:$0xff]
    %v136 = vld [vmem:[#allocation4 + $0x2e8] sm:$0xff]
    %v137 = vld [vmem:[#allocation4 + $0x2f0] sm:$0xff]
    %v138 = vld [vmem:[#allocation4 + $0x2f8] sm:$0xff]
    %v139 = vld [vmem:[#allocation4 + $0x300] sm:$0xff]
    %v140 = vld [vmem:[#allocation4 + $0x308] sm:$0xff]
    %v141 = vld [vmem:[#allocation4 + $0x310] sm:$0xff]
    %v142 = vld [vmem:[#allocation4 + $0x318] sm:$0xff]
    %v143 = vld [vmem:[#allocation4 + $0x320] sm:$0xff]
    %v144 = vld [vmem:[#allocation4 + $0x328] sm:$0xff]
    %v145 = vld [vmem:[#allocation4 + $0x330] sm:$0xff]
    %v146 = vld [vmem:[#allocation4 + $0x338] sm:$0xff]
    %v147 = vld [vmem:[#allocation4 + $0x340] sm:$0xff]
    %v148 = vld [vmem:[#allocation4 + $0x348] sm:$0xff]
    %v149 = vld [vmem:[#allocation4 + $0x350] sm:$0xff]
    %v150 = vld [vmem:[#allocation4 + $0x358] sm:$0xff]
    %v151 = vld [vmem:[#allocation4 + $0x360] sm:$0xff]
    %v152 = vld [vmem:[#allocation4 + $0x368] sm:$0xff]
    %v153 = vld [vmem:[#allocation4 + $0x370] sm:$0xff]
    %v154 = vld [vmem:[#allocation4 + $0x378] sm:$0xff]
    %v155 = vld [vmem:[#allocation4 + $0x380] sm:$0xff]
    %v156 = vld [vmem:[#allocation4 + $0x388] sm:$0xff]
    %v157 = vld [vmem:[#allocation4 + $0x390] sm:$0xff]
    %v158 = vld [vmem:[#allocation4 + $0x398] sm:$0xff]
    %v159 = vld [vmem:[#allocation4 + $0x3a0] sm:$0xff]
    %v160 = vld [vmem:[#allocation4 + $0x3a8] sm:$0xff]
    %v161 = vld [vmem:[#allocation4 + $0x3b0] sm:$0xff]
    %v162 = vld [vmem:[#allocation4 + $0x3b8] sm:$0xff]
    %v163 = vld [vmem:[#allocation4 + $0x3c0] sm:$0xff]
    %v164 = vld [vmem:[#allocation4 + $0x3c8] sm:$0xff]
    %v165 = vld [vmem:[#allocation4 + $0x3d0] sm:$0xff]
    %v166 = vld [vmem:[#allocation4 + $0x3d8] sm:$0xff]
    %v167 = vld [vmem:[#allocation4 + $0x3e0] sm:$0xff]
    %v168 = vld [vmem:[#allocation4 + $0x3e8] sm:$0xff]
    %v169 = vld [vmem:[#allocation4 + $0x3f0] sm:$0xff]
    %v170 = vld [vmem:[#allocation4 + $0x3f8] sm:$0xff]
    %v171 = vld [vmem:[#allocation4 + $0x400] sm:$0xff]
    %v172 = vld [vmem:[#allocation4 + $0x408] sm:$0xff]
    %v173 = vld [vmem:[#allocation4 + $0x410] sm:$0xff]
    %v174 = vld [vmem:[#allocation4 + $0x418] sm:$0xff]
    %v175 = vld [vmem:[#allocation4 + $0x420] sm:$0xff]
    %v176 = vld [vmem:[#allocation4 + $0x428] sm:$0xff]
    %v177 = vld [vmem:[#allocation4 + $0x430] sm:$0xff]
    %v178 = vld [vmem:[#allocation4 + $0x438] sm:$0xff]
    %v179 = vld [vmem:[#allocation4 + $0x440] sm:$0xff]
    %v180 = vld [vmem:[#allocation4 + $0x448] sm:$0xff]
    %v181 = vld [vmem:[#allocation4 + $0x450] sm:$0xff]
    %v182 = vld [vmem:[#allocation4 + $0x458] sm:$0xff]
    %v183 = vld [vmem:[#allocation4 + $0x460] sm:$0xff]
    %v184 = vld [vmem:[#allocation4 + $0x468] sm:$0xff]
    %v185 = vld [vmem:[#allocation4 + $0x470] sm:$0xff]
    %v186 = vld [vmem:[#allocation4 + $0x478] sm:$0xff]
    %v187 = vld [vmem:[#allocation4 + $0x480] sm:$0xff]
    %v188 = vld [vmem:[#allocation4 + $0x488] sm:$0xff]
    %v189 = vld [vmem:[#allocation4 + $0x490] sm:$0xff]
    %v190 = vld [vmem:[#allocation4 + $0x498] sm:$0xff]
    %v191 = vld [vmem:[#allocation4 + $0x4a0] sm:$0xff]
    %v192 = vld [vmem:[#allocation4 + $0x4a8] sm:$0xff]
    %v193 = vld [vmem:[#allocation4 + $0x4b0] sm:$0xff]
    %v194 = vld [vmem:[#allocation4 + $0x4b8] sm:$0xff]
    %v195 = vld [vmem:[#allocation4 + $0x4c0] sm:$0xff]
    %v196 = vld [vmem:[#allocation4 + $0x4c8] sm:$0xff]
    %v197 = vld [vmem:[#allocation4 + $0x4d0] sm:$0xff]
    %v198 = vld [vmem:[#allocation4 + $0x4d8] sm:$0xff]
    %v199 = vld [vmem:[#allocation4 + $0x4e0] sm:$0xff]
    %v200 = vld [vmem:[#allocation4 + $0x4e8] sm:$0xff]
    %v201 = vld [vmem:[#allocation4 + $0x4f0] sm:$0xff]
    %v202 = vld [vmem:[#allocation4 + $0x4f8] sm:$0xff]
    %v203 = vld [vmem:[#allocation4 + $0x500] sm:$0xff]
    %v204 = vld [vmem:[#allocation4 + $0x508] sm:$0xff]
    %v205 = vld [vmem:[#allocation4 + $0x510] sm:$0xff]
    %v206 = vld [vmem:[#allocation4 + $0x518] sm:$0xff]
    %v207 = vld [vmem:[#allocation4 + $0x520] sm:$0xff]
    %v208 = vld [vmem:[#allocation4 + $0x528] sm:$0xff]
    %v209 = vld [vmem:[#allocation4 + $0x530] sm:$0xff]
    %v210 = vld [vmem:[#allocation4 + $0x538] sm:$0xff]
    %v211 = vld [vmem:[#allocation4 + $0x540] sm:$0xff]
    %v212 = vld [vmem:[#allocation4 + $0x548] sm:$0xff]
    %v213 = vld [vmem:[#allocation4 + $0x550] sm:$0xff]
    %v214 = vld [vmem:[#allocation4 + $0x558] sm:$0xff]
    %v215 = vld [vmem:[#allocation4 + $0x560] sm:$0xff]
    %v216 = vld [vmem:[#allocation4 + $0x568] sm:$0xff]
    %v217 = vld [vmem:[#allocation4 + $0x570] sm:$0xff]
    %v218 = vld [vmem:[#allocation4 + $0x578] sm:$0xff]
    %v219 = vld [vmem:[#allocation4 + $0x580] sm:$0xff]
    %v220 = vld [vmem:[#allocation4 + $0x588] sm:$0xff]
    %v221 = vld [vmem:[#allocation4 + $0x590] sm:$0xff]
    %v222 = vld [vmem:[#allocation4 + $0x598] sm:$0xff]
    %v223 = vld [vmem:[#allocation4 + $0x5a0] sm:$0xff]
    %v224 = vld [vmem:[#allocation4 + $0x5a8] sm:$0xff]
    %v225 = vld [vmem:[#allocation4 + $0x5b0] sm:$0xff]
    %v226 = vld [vmem:[#allocation4 + $0x5b8] sm:$0xff]
    %v227 = vld [vmem:[#allocation4 + $0x5c0] sm:$0xff]
    %v228 = vld [vmem:[#allocation4 + $0x5c8] sm:$0xff]
    %v229 = vld [vmem:[#allocation4 + $0x5d0] sm:$0xff]
    %v230 = vld [vmem:[#allocation4 + $0x5d8] sm:$0xff]
    %v231 = vld [vmem:[#allocation4 + $0x5e0] sm:$0xff]
    %v232 = vld [vmem:[#allocation4 + $0x5e8] sm:$0xff]
    %v233 = vld [vmem:[#allocation4 + $0x5f0] sm:$0xff]
    %v234 = vld [vmem:[#allocation4 + $0x5f8] sm:$0xff]
    %v235 = vld [vmem:[#allocation4 + $0x600] sm:$0xff]
    %v236 = vld [vmem:[#allocation4 + $0x608] sm:$0xff]
    %v237 = vld [vmem:[#allocation4 + $0x610] sm:$0xff]
    %v238 = vld [vmem:[#allocation4 + $0x618] sm:$0xff]
    %v239 = vld [vmem:[#allocation4 + $0x620] sm:$0xff]
    %v240 = vld [vmem:[#allocation4 + $0x628] sm:$0xff]
    %v241 = vld [vmem:[#allocation4 + $0x630] sm:$0xff]
    %v242 = vld [vmem:[#allocation4 + $0x638] sm:$0xff]
    %v243 = vld [vmem:[#allocation4 + $0x640] sm:$0xff]
    %v244 = vld [vmem:[#allocation4 + $0x648] sm:$0xff]
    %v245 = vld [vmem:[#allocation4 + $0x650] sm:$0xff]
    %v246 = vld [vmem:[#allocation4 + $0x658] sm:$0xff]
    %v247 = vld [vmem:[#allocation4 + $0x660] sm:$0xff]
    %v248 = vld [vmem:[#allocation4 + $0x668] sm:$0xff]
    %v249 = vld [vmem:[#allocation4 + $0x670] sm:$0xff]
    %v250 = vld [vmem:[#allocation4 + $0x678] sm:$0xff]
    %v251 = vld [vmem:[#allocation4 + $0x680] sm:$0xff]
    %v252 = vld [vmem:[#allocation4 + $0x688] sm:$0xff]
    %v253 = vld [vmem:[#allocation4 + $0x690] sm:$0xff]
    %v254 = vld [vmem:[#allocation4 + $0x698] sm:$0xff]
    %v255 = vld [vmem:[#allocation4 + $0x6a0] sm:$0xff]
    %v256 = vld [vmem:[#allocation4 + $0x6a8] sm:$0xff]
    %v257 = vld [vmem:[#allocation4 + $0x6b0] sm:$0xff]
    %v258 = vld [vmem:[#allocation4 + $0x6b8] sm:$0xff]
    %v259 = vld [vmem:[#allocation4 + $0x6c0] sm:$0xff]
    %v260 = vld [vmem:[#allocation4 + $0x6c8] sm:$0xff]
    %v261 = vld [vmem:[#allocation4 + $0x6d0] sm:$0xff]
    %v262 = vld [vmem:[#allocation4 + $0x6d8] sm:$0xff]
    %v263 = vld [vmem:[#allocation4 + $0x6e0] sm:$0xff]
    %v264 = vld [vmem:[#allocation4 + $0x6e8] sm:$0xff]
    %v265 = vld [vmem:[#allocation4 + $0x6f0] sm:$0xff]
    %v266 = vld [vmem:[#allocation4 + $0x6f8] sm:$0xff]
    %v267 = vld [vmem:[#allocation4 + $0x700] sm:$0xff]
    %v268 = vld [vmem:[#allocation4 + $0x708] sm:$0xff]
    %v269 = vld [vmem:[#allocation4 + $0x710] sm:$0xff]
    %v270 = vld [vmem:[#allocation4 + $0x718] sm:$0xff]
    %v271 = vld [vmem:[#allocation4 + $0x720] sm:$0xff]
    %v272 = vld [vmem:[#allocation4 + $0x728] sm:$0xff]
    %v273 = vld [vmem:[#allocation4 + $0x730] sm:$0xff]
    %v274 = vld [vmem:[#allocation4 + $0x738] sm:$0xff]
    %v275 = vld [vmem:[#allocation4 + $0x740] sm:$0xff]
    %v276 = vld [vmem:[#allocation4 + $0x748] sm:$0xff]
    %v277 = vld [vmem:[#allocation4 + $0x750] sm:$0xff]
    %v278 = vld [vmem:[#allocation4 + $0x758] sm:$0xff]
    %v279 = vld [vmem:[#allocation4 + $0x760] sm:$0xff]
    %v280 = vld [vmem:[#allocation4 + $0x768] sm:$0xff]
    %v281 = vld [vmem:[#allocation4 + $0x770] sm:$0xff]
    %v282 = vld [vmem:[#allocation4 + $0x778] sm:$0xff]
    %v283 = vld [vmem:[#allocation4 + $0x780] sm:$0xff]
    %v284 = vld [vmem:[#allocation4 + $0x788] sm:$0xff]
    %v285 = vld [vmem:[#allocation4 + $0x790] sm:$0xff]
    %v286 = vld [vmem:[#allocation4 + $0x798] sm:$0xff]
    %v287 = vld [vmem:[#allocation4 + $0x7a0] sm:$0xff]
    %v288 = vld [vmem:[#allocation4 + $0x7a8] sm:$0xff]
    %v289 = vld [vmem:[#allocation4 + $0x7b0] sm:$0xff]
    %v290 = vld [vmem:[#allocation4 + $0x7b8] sm:$0xff]
    %v291 = vld [vmem:[#allocation4 + $0x7c0] sm:$0xff]
    %v292 = vld [vmem:[#allocation4 + $0x7c8] sm:$0xff]
    %v293 = vld [vmem:[#allocation4 + $0x7d0] sm:$0xff]
    %v294 = vld [vmem:[#allocation4 + $0x7d8] sm:$0xff]
    %v295 = vld [vmem:[#allocation4 + $0x7e0] sm:$0xff]
    %v296 = vld [vmem:[#allocation4 + $0x7e8] sm:$0xff]
    %v297 = vld [vmem:[#allocation4 + $0x7f0] sm:$0xff]
    %v298 = vld [vmem:[#allocation4 + $0x7f8] sm:$0xff]
    %v299 = vld [vmem:[%s4] sm:$0xf]
    %v300 = vld [vmem:[%s5] sm:$0x1]
    %v301 = vld [vmem:[#allocation3] sm:$0x1]
    %v302 = vld [vmem:[%s0] sm:$0x3]
    %v303 = vld [vmem:[%s0 + $0x2] sm:$0x3]
    %v304 = vld [vmem:[%s0 + $0x4] sm:$0x3]
    %v305 = vld [vmem:[%s0 + $0x6] sm:$0x3]
    %v306 = vld [vmem:[%s0 + $0x8] sm:$0x3]
    %v307 = vld [vmem:[%s0 + $0xa] sm:$0x3]
    %v308 = vld [vmem:[%s0 + $0xc] sm:$0x3]
    %v309 = vld [vmem:[%s0 + $0xe] sm:$0x3]
    %v310 = vld [vmem:[%s0 + $0x10] sm:$0x3]
    %v311 = vld [vmem:[%s1] sm:$0xf]
    %313 = vset.pattern.permute.xlu0 0
    %314 = vperm.xlu0 %313, %v302
    %v315 = vpop.permute.xlu0 %314
    %318 = vset.pattern.permute.xlu0 0
    %319 = vperm.xlu0 %318, %v303
    %v320 = vpop.permute.xlu0 %319
    %323 = vset.pattern.permute.xlu0 0
    %324 = vperm.xlu0 %323, %v304
    %v325 = vpop.permute.xlu0 %324
    %328 = vset.pattern.permute.xlu0 0
    %329 = vperm.xlu0 %328, %v305
    %v330 = vpop.permute.xlu0 %329
    %333 = vset.pattern.permute.xlu0 0
    %334 = vperm.xlu0 %333, %v306
    %v335 = vpop.permute.xlu0 %334
    %338 = vset.pattern.permute.xlu0 0
    %339 = vperm.xlu0 %338, %v307
    %v340 = vpop.permute.xlu0 %339
    %343 = vset.pattern.permute.xlu0 0
    %344 = vperm.xlu0 %343, %v308
    %v345 = vpop.permute.xlu0 %344
    %348 = vset.pattern.permute.xlu0 0
    %349 = vperm.xlu0 %348, %v309
    %v350 = vpop.permute.xlu0 %349
    %353 = vset.pattern.permute.xlu0 0
    %354 = vperm.xlu0 %353, %v310
    %v355 = vpop.permute.xlu0 %354
    %v358 = vlaneseq
    %v359 = vshrl.u32 %v358, 7
    %v360 = vsub.s32 0, %v359
    %v361 = vrot.slane %v311, %v360
    %v362 = vlaneseq
    %v363 = vshrl.u32 %v362, 7
    %v364 = vsub.s32 1, %v363
    %v365 = vrot.slane %v311, %v364
    %v366 = vlaneseq
    %v367 = vshrl.u32 %v366, 7
    %v368 = vsub.s32 2, %v367
    %v369 = vrot.slane %v311, %v368
    %v370 = vlaneseq
    %v371 = vshrl.u32 %v370, 7
    %v372 = vsub.s32 3, %v371
    %v373 = vrot.slane %v311, %v372
    %v378 = vmul.f32 %v315, %v361
    %v379 = vmul.f32 %v315, %v365
    %v380 = vmul.f32 %v315, %v369
    %v381 = vmul.f32 %v315, %v373
    %v382 = vmul.f32 %v320, %v361
    %v383 = vmul.f32 %v320, %v365
    %v384 = vmul.f32 %v320, %v369
    %v385 = vmul.f32 %v320, %v373
    %v386 = vmul.f32 %v325, %v361
    %v387 = vmul.f32 %v325, %v365
    %v388 = vmul.f32 %v325, %v369
    %v389 = vmul.f32 %v325, %v373
    %v390 = vmul.f32 %v330, %v361
    %v391 = vmul.f32 %v330, %v365
    %v392 = vmul.f32 %v330, %v369
    %v393 = vmul.f32 %v330, %v373
    %v394 = vmul.f32 %v335, %v361
    %v395 = vmul.f32 %v335, %v365
    %v396 = vmul.f32 %v335, %v369
    %v397 = vmul.f32 %v335, %v373
    %v398 = vmul.f32 %v340, %v361
    %v399 = vmul.f32 %v340, %v365
    %v400 = vmul.f32 %v340, %v369
    %v401 = vmul.f32 %v340, %v373
    %v402 = vmul.f32 %v345, %v361
    %v403 = vmul.f32 %v345, %v365
    %v404 = vmul.f32 %v345, %v369
    %v405 = vmul.f32 %v345, %v373
    %v406 = vmul.f32 %v350, %v361
    %v407 = vmul.f32 %v350, %v365
    %v408 = vmul.f32 %v350, %v369
    %v409 = vmul.f32 %v350, %v373
    %v410 = vmul.f32 %v355, %v361
    %v411 = vmul.f32 %v355, %v365
    %v412 = vmul.f32 %v355, %v369
    %v413 = vmul.f32 %v355, %v373
    %v414 = vld [vmem:[%s2] sm:$0xf]
    %v416 = vlaneseq
    %v417 = vshrl.u32 %v416, 7
    %v418 = vsub.s32 0, %v417
    %v419 = vrot.slane %v414, %v418
    %v420 = vlaneseq
    %v421 = vshrl.u32 %v420, 7
    %v422 = vsub.s32 1, %v421
    %v423 = vrot.slane %v414, %v422
    %v424 = vlaneseq
    %v425 = vshrl.u32 %v424, 7
    %v426 = vsub.s32 2, %v425
    %v427 = vrot.slane %v414, %v426
    %v428 = vlaneseq
    %v429 = vshrl.u32 %v428, 7
    %v430 = vsub.s32 3, %v429
    %v431 = vrot.slane %v414, %v430
    %v436 = vadd.f32 %v378, %v419
    %v437 = vadd.f32 %v379, %v423
    %v438 = vadd.f32 %v380, %v427
    %v439 = vadd.f32 %v381, %v431
    %v440 = vadd.f32 %v382, %v419
    %v441 = vadd.f32 %v383, %v423
    %v442 = vadd.f32 %v384, %v427
    %v443 = vadd.f32 %v385, %v431
    %v444 = vadd.f32 %v386, %v419
    %v445 = vadd.f32 %v387, %v423
    %v446 = vadd.f32 %v388, %v427
    %v447 = vadd.f32 %v389, %v431
    %v448 = vadd.f32 %v390, %v419
    %v449 = vadd.f32 %v391, %v423
    %v450 = vadd.f32 %v392, %v427
    %v451 = vadd.f32 %v393, %v431
    %v452 = vadd.f32 %v394, %v419
    %v453 = vadd.f32 %v395, %v423
    %v454 = vadd.f32 %v396, %v427
    %v455 = vadd.f32 %v397, %v431
    %v456 = vadd.f32 %v398, %v419
    %v457 = vadd.f32 %v399, %v423
    %v458 = vadd.f32 %v400, %v427
    %v459 = vadd.f32 %v401, %v431
    %v460 = vadd.f32 %v402, %v419
    %v461 = vadd.f32 %v403, %v423
    %v462 = vadd.f32 %v404, %v427
    %v463 = vadd.f32 %v405, %v431
    %v464 = vadd.f32 %v406, %v419
    %v465 = vadd.f32 %v407, %v423
    %v466 = vadd.f32 %v408, %v427
    %v467 = vadd.f32 %v409, %v431
    %v468 = vadd.f32 %v410, %v419
    %v469 = vadd.f32 %v411, %v423
    %v470 = vadd.f32 %v412, %v427
    %v471 = vadd.f32 %v413, %v431
    %v508 = vcombine.low %v436, %v437
    %v509 = vcombine.low %v438, %v439
    %v511 = vunpack.c.l.s4 1983009808
    %v512 = vunpack.c.0.s8 %v511
    %v513 = vlaneseq
    %v514 = vshrl.u32 %v513, 7
    %v515 = vsub.s32 %v512, %v514
    %v516 = vrot.slane %v508, %v515
    %v518 = vunpack.c.l.s4 1983009808
    %v519 = vunpack.c.0.s8 %v518
    %v520 = vlaneseq
    %v521 = vshrl.u32 %v520, 7
    %v522 = vsub.s32 %v519, %v521
    %v523 = vrot.slane %v509, %v522
    %v524 = vcombine.low %v516, %v523
    %v525 = vcombine.low %v440, %v441
    %v526 = vcombine.low %v442, %v443
    %v528 = vunpack.c.l.s4 1983009808
    %v529 = vunpack.c.0.s8 %v528
    %v530 = vlaneseq
    %v531 = vshrl.u32 %v530, 7
    %v532 = vsub.s32 %v529, %v531
    %v533 = vrot.slane %v525, %v532
    %v535 = vunpack.c.l.s4 1983009808
    %v536 = vunpack.c.0.s8 %v535
    %v537 = vlaneseq
    %v538 = vshrl.u32 %v537, 7
    %v539 = vsub.s32 %v536, %v538
    %v540 = vrot.slane %v526, %v539
    %v541 = vcombine.low %v533, %v540
    %v542 = vcombine.low %v444, %v445
    %v543 = vcombine.low %v446, %v447
    %v545 = vunpack.c.l.s4 1983009808
    %v546 = vunpack.c.0.s8 %v545
    %v547 = vlaneseq
    %v548 = vshrl.u32 %v547, 7
    %v549 = vsub.s32 %v546, %v548
    %v550 = vrot.slane %v542, %v549
    %v552 = vunpack.c.l.s4 1983009808
    %v553 = vunpack.c.0.s8 %v552
    %v554 = vlaneseq
    %v555 = vshrl.u32 %v554, 7
    %v556 = vsub.s32 %v553, %v555
    %v557 = vrot.slane %v543, %v556
    %v558 = vcombine.low %v550, %v557
    %v559 = vcombine.low %v448, %v449
    %v560 = vcombine.low %v450, %v451
    %v562 = vunpack.c.l.s4 1983009808
    %v563 = vunpack.c.0.s8 %v562
    %v564 = vlaneseq
    %v565 = vshrl.u32 %v564, 7
    %v566 = vsub.s32 %v563, %v565
    %v567 = vrot.slane %v559, %v566
    %v569 = vunpack.c.l.s4 1983009808
    %v570 = vunpack.c.0.s8 %v569
    %v571 = vlaneseq
    %v572 = vshrl.u32 %v571, 7
    %v573 = vsub.s32 %v570, %v572
    %v574 = vrot.slane %v560, %v573
    %v575 = vcombine.low %v567, %v574
    %v576 = vcombine.low %v452, %v453
    %v577 = vcombine.low %v454, %v455
    %v579 = vunpack.c.l.s4 1983009808
    %v580 = vunpack.c.0.s8 %v579
    %v581 = vlaneseq
    %v582 = vshrl.u32 %v581, 7
    %v583 = vsub.s32 %v580, %v582
    %v584 = vrot.slane %v576, %v583
    %v586 = vunpack.c.l.s4 1983009808
    %v587 = vunpack.c.0.s8 %v586
    %v588 = vlaneseq
    %v589 = vshrl.u32 %v588, 7
    %v590 = vsub.s32 %v587, %v589
    %v591 = vrot.slane %v577, %v590
    %v592 = vcombine.low %v584, %v591
    %v593 = vcombine.low %v456, %v457
    %v594 = vcombine.low %v458, %v459
    %v596 = vunpack.c.l.s4 1983009808
    %v597 = vunpack.c.0.s8 %v596
    %v598 = vlaneseq
    %v599 = vshrl.u32 %v598, 7
    %v600 = vsub.s32 %v597, %v599
    %v601 = vrot.slane %v593, %v600
    %v603 = vunpack.c.l.s4 1983009808
    %v604 = vunpack.c.0.s8 %v603
    %v605 = vlaneseq
    %v606 = vshrl.u32 %v605, 7
    %v607 = vsub.s32 %v604, %v606
    %v608 = vrot.slane %v594, %v607
    %v609 = vcombine.low %v601, %v608
    %v610 = vcombine.low %v460, %v461
    %v611 = vcombine.low %v462, %v463
    %v613 = vunpack.c.l.s4 1983009808
    %v614 = vunpack.c.0.s8 %v613
    %v615 = vlaneseq
    %v616 = vshrl.u32 %v615, 7
    %v617 = vsub.s32 %v614, %v616
    %v618 = vrot.slane %v610, %v617
    %v620 = vunpack.c.l.s4 1983009808
    %v621 = vunpack.c.0.s8 %v620
    %v622 = vlaneseq
    %v623 = vshrl.u32 %v622, 7
    %v624 = vsub.s32 %v621, %v623
    %v625 = vrot.slane %v611, %v624
    %v626 = vcombine.low %v618, %v625
    %v627 = vcombine.low %v464, %v465
    %v628 = vcombine.low %v466, %v467
    %v630 = vunpack.c.l.s4 1983009808
    %v631 = vunpack.c.0.s8 %v630
    %v632 = vlaneseq
    %v633 = vshrl.u32 %v632, 7
    %v634 = vsub.s32 %v631, %v633
    %v635 = vrot.slane %v627, %v634
    %v637 = vunpack.c.l.s4 1983009808
    %v638 = vunpack.c.0.s8 %v637
    %v639 = vlaneseq
    %v640 = vshrl.u32 %v639, 7
    %v641 = vsub.s32 %v638, %v640
    %v642 = vrot.slane %v628, %v641
    %v643 = vcombine.low %v635, %v642
    %v644 = vcombine.low %v468, %v469
    %v645 = vcombine.low %v470, %v471
    %v647 = vunpack.c.l.s4 1983009808
    %v648 = vunpack.c.0.s8 %v647
    %v649 = vlaneseq
    %v650 = vshrl.u32 %v649, 7
    %v651 = vsub.s32 %v648, %v650
    %v652 = vrot.slane %v644, %v651
    %v654 = vunpack.c.l.s4 1983009808
    %v655 = vunpack.c.0.s8 %v654
    %v656 = vlaneseq
    %v657 = vshrl.u32 %v656, 7
    %v658 = vsub.s32 %v655, %v657
    %v659 = vrot.slane %v645, %v658
    %v660 = vcombine.low %v652, %v659
    %670 = vst [vmem:[#allocation2] sm:$0xff] %v524
    %671 = vst [vmem:[#allocation2 + $0x8] sm:$0xff] %v541
    %672 = vst [vmem:[#allocation2 + $0x10] sm:$0xff] %v558
    %673 = vst [vmem:[#allocation2 + $0x18] sm:$0xff] %v575
    %674 = vst [vmem:[#allocation2 + $0x20] sm:$0xff] %v592
    %675 = vst [vmem:[#allocation2 + $0x28] sm:$0xff] %v609
    %676 = vst [vmem:[#allocation2 + $0x30] sm:$0xff] %v626
    %677 = vst [vmem:[#allocation2 + $0x38] sm:$0xff] %v643
    %678 = vst [vmem:[#allocation2 + $0x40] sm:$0xff] %v660
    %v679 = vlaneseq
    %v680 = vand.u32 %v679, 127
    %v681 = vld [vmem:[#allocation2] sm:$0xff]
    %v682 = vmul.f32 %v681, 0.5
    %v683 = vtanh.pop %v682
    %v684 = vmul.f32 %v683, 0.5
    %v685 = vadd.f32 %v684, 0.5
    %v687 = vrot.slane %v681, 6
    %v689 = vtanh.pop %v687
    %v691 = vrot.slane %v685, 2
    %v693 = vmul.f32 %v691, 0.0
    %v694 = vmul.f32 %v685, %v689
    %v695 = vadd.f32 %v693, %v694
    %v696 = vtanh.pop %v695
    %v697 = vrot.slane %v685, 4
    %v699 = vmul.f32 %v697, %v696
    %700 = vmatprep.subr.mxu0 %v44
    %701 = vmatpush1.msra.mxu0 %v43
    %702 = vmatprep.subr.mxu0 %v52
    %703 = vmatpush1.msra.mxu0 %v51
    %704 = vmatprep.subr.mxu0 %v60
    %705 = vmatpush1.msra.mxu0 %v59
    %706 = vmatprep.subr.mxu0 %v68
    %707 = vmatpush1.msra.mxu0 %v67
    %708 = vmatprep.subr.mxu0 %v76
    %709 = vmatpush1.msra.mxu0 %v75
    %710 = vmatprep.subr.mxu0 %v84
    %711 = vmatpush1.msra.mxu0 %v83
    %712 = vmatprep.subr.mxu0 %v92
    %713 = vmatpush1.msra.mxu0 %v91
    %714 = vmatprep.subr.mxu0 %v100
    %715 = vmatpush1.msra.mxu0 %v99
    %716 = vmatprep.subr.mxu0 %v108
    %717 = vmatpush1.msra.mxu0 %v107
    %718 = vmatprep.subr.mxu0 %v116
    %719 = vmatpush1.msra.mxu0 %v115
    %720 = vmatprep.subr.mxu0 %v124
    %721 = vmatpush1.msra.mxu0 %v123
    %722 = vmatprep.subr.mxu0 %v132
    %723 = vmatpush1.msra.mxu0 %v131
    %724 = vmatprep.subr.mxu0 %v140
    %725 = vmatpush1.msra.mxu0 %v139
    %726 = vmatprep.subr.mxu0 %v148
    %727 = vmatpush1.msra.mxu0 %v147
    %728 = vmatprep.subr.mxu0 %v156
    %729 = vmatpush1.msra.mxu0 %v155
    %730 = vmatprep.subr.mxu0 %v164
    %731 = vmatpush1.msra.mxu0 %v163
    %732 = vmatprep.subr.mxu0 %v172
    %733 = vmatpush1.msra.mxu0 %v171
    %734 = vmatprep.subr.mxu0 %v180
    %735 = vmatpush1.msra.mxu0 %v179
    %736 = vmatprep.subr.mxu0 %v188
    %737 = vmatpush1.msra.mxu0 %v187
    %738 = vmatprep.subr.mxu0 %v196
    %739 = vmatpush1.msra.mxu0 %v195
    %740 = vmatprep.subr.mxu0 %v204
    %741 = vmatpush1.msra.mxu0 %v203
    %742 = vmatprep.subr.mxu0 %v212
    %743 = vmatpush1.msra.mxu0 %v211
    %744 = vmatprep.subr.mxu0 %v220
    %745 = vmatpush1.msra.mxu0 %v219
    %746 = vmatprep.subr.mxu0 %v228
    %747 = vmatpush1.msra.mxu0 %v227
    %748 = vmatprep.subr.mxu0 %v236
    %749 = vmatpush1.msra.mxu0 %v235
    %750 = vmatprep.subr.mxu0 %v244
    %751 = vmatpush1.msra.mxu0 %v243
    %752 = vmatprep.subr.mxu0 %v252
    %753 = vmatpush1.msra.mxu0 %v251
    %754 = vmatprep.subr.mxu0 %v260
    %755 = vmatpush1.msra.mxu0 %v259
    %756 = vmatprep.subr.mxu0 %v268
    %757 = vmatpush1.msra.mxu0 %v267
    %758 = vmatprep.subr.mxu0 %v276
    %759 = vmatpush1.msra.mxu0 %v275
    %760 = vmatprep.subr.mxu0 %v284
    %761 = vmatpush1.msra.mxu0 %v283
    %762 = vmatprep.subr.mxu0 %v292
    %763 = vmatpush1.msra.mxu0 %v291
    %764 = vmatprep.mubr.f32.mxu0 0.0
    %765 = vmatmul.mubr.f32.gmra.mrb[0].mxu0 %v699
    %v766 = vpop.f32.mrb[0].mxu0
    %v767 = vadd.f32 0.0, %v766
    %v768 = vpop.f32.mrb[0].mxu0
    %v769 = vadd.f32 0.0, %v768
    %770 = vdwg.mxu0
    %771 = vmatprep.subr.mxu0 %v46
    %772 = vmatpush1.msra.mxu0 %v45
    %773 = vmatprep.subr.mxu0 %v54
    %774 = vmatpush1.msra.mxu0 %v53
    %775 = vmatprep.subr.mxu0 %v62
    %776 = vmatpush1.msra.mxu0 %v61
    %777 = vmatprep.subr.mxu0 %v70
    %778 = vmatpush1.msra.mxu0 %v69
    %779 = vmatprep.subr.mxu0 %v78
    %780 = vmatpush1.msra.mxu0 %v77
    %781 = vmatprep.subr.mxu0 %v86
    %782 = vmatpush1.msra.mxu0 %v85
    %783 = vmatprep.subr.mxu0 %v94
    %784 = vmatpush1.msra.mxu0 %v93
    %785 = vmatprep.subr.mxu0 %v102
    %786 = vmatpush1.msra.mxu0 %v101
    %787 = vmatprep.subr.mxu0 %v110
    %788 = vmatpush1.msra.mxu0 %v109
    %789 = vmatprep.subr.mxu0 %v118
    %790 = vmatpush1.msra.mxu0 %v117
    %791 = vmatprep.subr.mxu0 %v126
    %792 = vmatpush1.msra.mxu0 %v125
    %793 = vmatprep.subr.mxu0 %v134
    %794 = vmatpush1.msra.mxu0 %v133
    %795 = vmatprep.subr.mxu0 %v142
    %796 = vmatpush1.msra.mxu0 %v141
    %797 = vmatprep.subr.mxu0 %v150
    %798 = vmatpush1.msra.mxu0 %v149
    %799 = vmatprep.subr.mxu0 %v158
    %800 = vmatpush1.msra.mxu0 %v157
    %801 = vmatprep.subr.mxu0 %v166
    %802 = vmatpush1.msra.mxu0 %v165
    %803 = vmatprep.subr.mxu0 %v174
    %804 = vmatpush1.msra.mxu0 %v173
    %805 = vmatprep.subr.mxu0 %v182
    %806 = vmatpush1.msra.mxu0 %v181
    %807 = vmatprep.subr.mxu0 %v190
    %808 = vmatpush1.msra.mxu0 %v189
    %809 = vmatprep.subr.mxu0 %v198
    %810 = vmatpush1.msra.mxu0 %v197
    %811 = vmatprep.subr.mxu0 %v206
    %812 = vmatpush1.msra.mxu0 %v205
    %813 = vmatprep.subr.mxu0 %v214
    %814 = vmatpush1.msra.mxu0 %v213
    %815 = vmatprep.subr.mxu0 %v222
    %816 = vmatpush1.msra.mxu0 %v221
    %817 = vmatprep.subr.mxu0 %v230
    %818 = vmatpush1.msra.mxu0 %v229
    %819 = vmatprep.subr.mxu0 %v238
    %820 = vmatpush1.msra.mxu0 %v237
    %821 = vmatprep.subr.mxu0 %v246
    %822 = vmatpush1.msra.mxu0 %v245
    %823 = vmatprep.subr.mxu0 %v254
    %824 = vmatpush1.msra.mxu0 %v253
    %825 = vmatprep.subr.mxu0 %v262
    %826 = vmatpush1.msra.mxu0 %v261
    %827 = vmatprep.subr.mxu0 %v270
    %828 = vmatpush1.msra.mxu0 %v269
    %829 = vmatprep.subr.mxu0 %v278
    %830 = vmatpush1.msra.mxu0 %v277
    %831 = vmatprep.subr.mxu0 %v286
    %832 = vmatpush1.msra.mxu0 %v285
    %833 = vmatprep.subr.mxu0 %v294
    %834 = vmatpush1.msra.mxu0 %v293
    %835 = vmatprep.mubr.f32.mxu0 0.0
    %836 = vmatmul.mubr.f32.gmra.mrb[0].mxu0 %v699
    %v837 = vpop.f32.mrb[0].mxu0
    %v838 = vadd.f32 0.0, %v837
    %v839 = vpop.f32.mrb[0].mxu0
    %v840 = vadd.f32 0.0, %v839
    %841 = vdwg.mxu0
    %842 = vmatprep.subr.mxu0 %v48
    %843 = vmatpush1.msra.mxu0 %v47
    %844 = vmatprep.subr.mxu0 %v56
    %845 = vmatpush1.msra.mxu0 %v55
    %846 = vmatprep.subr.mxu0 %v64
    %847 = vmatpush1.msra.mxu0 %v63
    %848 = vmatprep.subr.mxu0 %v72
    %849 = vmatpush1.msra.mxu0 %v71
    %850 = vmatprep.subr.mxu0 %v80
    %851 = vmatpush1.msra.mxu0 %v79
    %852 = vmatprep.subr.mxu0 %v88
    %853 = vmatpush1.msra.mxu0 %v87
    %854 = vmatprep.subr.mxu0 %v96
    %855 = vmatpush1.msra.mxu0 %v95
    %856 = vmatprep.subr.mxu0 %v104
    %857 = vmatpush1.msra.mxu0 %v103
    %858 = vmatprep.subr.mxu0 %v112
    %859 = vmatpush1.msra.mxu0 %v111
    %860 = vmatprep.subr.mxu0 %v120
    %861 = vmatpush1.msra.mxu0 %v119
    %862 = vmatprep.subr.mxu0 %v128
    %863 = vmatpush1.msra.mxu0 %v127
    %864 = vmatprep.subr.mxu0 %v136
    %865 = vmatpush1.msra.mxu0 %v135
    %866 = vmatprep.subr.mxu0 %v144
    %867 = vmatpush1.msra.mxu0 %v143
    %868 = vmatprep.subr.mxu0 %v152
    %869 = vmatpush1.msra.mxu0 %v151
    %870 = vmatprep.subr.mxu0 %v160
    %871 = vmatpush1.msra.mxu0 %v159
    %872 = vmatprep.subr.mxu0 %v168
    %873 = vmatpush1.msra.mxu0 %v167
    %874 = vmatprep.subr.mxu0 %v176
    %875 = vmatpush1.msra.mxu0 %v175
    %876 = vmatprep.subr.mxu0 %v184
    %877 = vmatpush1.msra.mxu0 %v183
    %878 = vmatprep.subr.mxu0 %v192
    %879 = vmatpush1.msra.mxu0 %v191
    %880 = vmatprep.subr.mxu0 %v200
    %881 = vmatpush1.msra.mxu0 %v199
    %882 = vmatprep.subr.mxu0 %v208
    %883 = vmatpush1.msra.mxu0 %v207
    %884 = vmatprep.subr.mxu0 %v216
    %885 = vmatpush1.msra.mxu0 %v215
    %886 = vmatprep.subr.mxu0 %v224
    %887 = vmatpush1.msra.mxu0 %v223
    %888 = vmatprep.subr.mxu0 %v232
    %889 = vmatpush1.msra.mxu0 %v231
    %890 = vmatprep.subr.mxu0 %v240
    %891 = vmatpush1.msra.mxu0 %v239
    %892 = vmatprep.subr.mxu0 %v248
    %893 = vmatpush1.msra.mxu0 %v247
    %894 = vmatprep.subr.mxu0 %v256
    %895 = vmatpush1.msra.mxu0 %v255
    %896 = vmatprep.subr.mxu0 %v264
    %897 = vmatpush1.msra.mxu0 %v263
    %898 = vmatprep.subr.mxu0 %v272
    %899 = vmatpush1.msra.mxu0 %v271
    %900 = vmatprep.subr.mxu0 %v280
    %901 = vmatpush1.msra.mxu0 %v279
    %902 = vmatprep.subr.mxu0 %v288
    %903 = vmatpush1.msra.mxu0 %v287
    %904 = vmatprep.subr.mxu0 %v296
    %905 = vmatpush1.msra.mxu0 %v295
    %906 = vmatprep.mubr.f32.mxu0 0.0
    %907 = vmatmul.mubr.f32.gmra.mrb[0].mxu0 %v699
    %v908 = vpop.f32.mrb[0].mxu0
    %v909 = vadd.f32 0.0, %v908
    %v910 = vpop.f32.mrb[0].mxu0
    %v911 = vadd.f32 0.0, %v910
    %912 = vdwg.mxu0
    %913 = vmatprep.subr.mxu0 %v50
    %914 = vmatpush1.msra.mxu0 %v49
    %915 = vmatprep.subr.mxu0 %v58
    %916 = vmatpush1.msra.mxu0 %v57
    %917 = vmatprep.subr.mxu0 %v66
    %918 = vmatpush1.msra.mxu0 %v65
    %919 = vmatprep.subr.mxu0 %v74
    %920 = vmatpush1.msra.mxu0 %v73
    %921 = vmatprep.subr.mxu0 %v82
    %922 = vmatpush1.msra.mxu0 %v81
    %923 = vmatprep.subr.mxu0 %v90
    %924 = vmatpush1.msra.mxu0 %v89
    %925 = vmatprep.subr.mxu0 %v98
    %926 = vmatpush1.msra.mxu0 %v97
    %927 = vmatprep.subr.mxu0 %v106
    %928 = vmatpush1.msra.mxu0 %v105
    %929 = vmatprep.subr.mxu0 %v114
    %930 = vmatpush1.msra.mxu0 %v113
    %931 = vmatprep.subr.mxu0 %v122
    %932 = vmatpush1.msra.mxu0 %v121
    %933 = vmatprep.subr.mxu0 %v130
    %934 = vmatpush1.msra.mxu0 %v129
    %935 = vmatprep.subr.mxu0 %v138
    %936 = vmatpush1.msra.mxu0 %v137
    %937 = vmatprep.subr.mxu0 %v146
    %938 = vmatpush1.msra.mxu0 %v145
    %939 = vmatprep.subr.mxu0 %v154
    %940 = vmatpush1.msra.mxu0 %v153
    %941 = vmatprep.subr.mxu0 %v162
    %942 = vmatpush1.msra.mxu0 %v161
    %943 = vmatprep.subr.mxu0 %v170
    %944 = vmatpush1.msra.mxu0 %v169
    %945 = vmatprep.subr.mxu0 %v178
    %946 = vmatpush1.msra.mxu0 %v177
    %947 = vmatprep.subr.mxu0 %v186
    %948 = vmatpush1.msra.mxu0 %v185
    %949 = vmatprep.subr.mxu0 %v194
    %950 = vmatpush1.msra.mxu0 %v193
    %951 = vmatprep.subr.mxu0 %v202
    %952 = vmatpush1.msra.mxu0 %v201
    %953 = vmatprep.subr.mxu0 %v210
    %954 = vmatpush1.msra.mxu0 %v209
    %955 = vmatprep.subr.mxu0 %v218
    %956 = vmatpush1.msra.mxu0 %v217
    %957 = vmatprep.subr.mxu0 %v226
    %958 = vmatpush1.msra.mxu0 %v225
    %959 = vmatprep.subr.mxu0 %v234
    %960 = vmatpush1.msra.mxu0 %v233
    %961 = vmatprep.subr.mxu0 %v242
    %962 = vmatpush1.msra.mxu0 %v241
    %963 = vmatprep.subr.mxu0 %v250
    %964 = vmatpush1.msra.mxu0 %v249
    %965 = vmatprep.subr.mxu0 %v258
    %966 = vmatpush1.msra.mxu0 %v257
    %967 = vmatprep.subr.mxu0 %v266
    %968 = vmatpush1.msra.mxu0 %v265
    %969 = vmatprep.subr.mxu0 %v274
    %970 = vmatpush1.msra.mxu0 %v273
    %971 = vmatprep.subr.mxu0 %v282
    %972 = vmatpush1.msra.mxu0 %v281
    %973 = vmatprep.subr.mxu0 %v290
    %974 = vmatpush1.msra.mxu0 %v289
    %975 = vmatprep.subr.mxu0 %v298
    %976 = vmatpush1.msra.mxu0 %v297
    %977 = vmatprep.mubr.f32.mxu0 0.0
    %978 = vmatmul.mubr.f32.gmra.mrb[0].mxu0 %v699
    %v979 = vpop.f32.mrb[0].mxu0
    %v980 = vadd.f32 0.0, %v979
    %v981 = vpop.f32.mrb[0].mxu0
    %v982 = vadd.f32 0.0, %v981
    %983 = vdwg.mxu0
    %v985 = vlaneseq
    %v986 = vshrl.u32 %v985, 7
    %v987 = vsub.s32 0, %v986
    %v988 = vrot.slane %v299, %v987
    %v989 = vlaneseq
    %v990 = vshrl.u32 %v989, 7
    %v991 = vsub.s32 1, %v990
    %v992 = vrot.slane %v299, %v991
    %v993 = vlaneseq
    %v994 = vshrl.u32 %v993, 7
    %v995 = vsub.s32 2, %v994
    %v996 = vrot.slane %v299, %v995
    %v997 = vlaneseq
    %v998 = vshrl.u32 %v997, 7
    %v999 = vsub.s32 3, %v998
    %v1000 = vrot.slane %v299, %v999
    %v1005 = vadd.f32 %v767, %v988
    %v1006 = vadd.f32 %v769, %v992
    %v1007 = vadd.f32 %v838, %v996
    %v1008 = vadd.f32 %v840, %v1000
    %s1009 = scalar_lea.vmem [#allocation2], 8
    %v1010 = vld [vmem:[%s1009] sm:$0xff]
    %v1012 = vcombine.high %v1010, %v1010
    %v1014 = vunpack.c.l.s4 1983009808
    %v1015 = vunpack.c.0.s8 %v1014
    %v1016 = vlaneseq
    %v1017 = vshrl.u32 %v1016, 7
    %v1018 = vsub.s32 %v1015, %v1017
    %v1019 = vrot.slane %v1010, %v1018
    %v1021 = vunpack.c.l.s4 1983009808
    %v1022 = vunpack.c.0.s8 %v1021
    %v1023 = vlaneseq
    %v1024 = vshrl.u32 %v1023, 7
    %v1025 = vsub.s32 %v1022, %v1024
    %v1026 = vrot.slane %v1012, %v1025
    %v1027 = vcombine.high %v1019, %v1019
    %v1028 = vcombine.high %v1026, %v1026
    %v1033 = vadd.f32 %v909, %v1019
    %v1034 = vadd.f32 %v911, %v1027
    %v1035 = vadd.f32 %v980, %v1026
    %v1036 = vadd.f32 %v982, %v1028
    %v1037 = vmul.f32 %v1005, 0.5
    %v1038 = vmul.f32 %v1006, 0.5
    %v1039 = vmul.f32 %v1007, 0.5
    %v1040 = vtanh.pop %v1037
    %v1041 = vtanh.pop %v1038
    %v1042 = vtanh.pop %v1039
    %v1043 = vmul.f32 %v1040, 0.5
    %v1044 = vmul.f32 %v1041, 0.5
    %v1045 = vmul.f32 %v1042, 0.5
    %v1046 = vadd.f32 %v1043, 0.5
    %v1047 = vadd.f32 %v1044, 0.5
    %v1048 = vadd.f32 %v1045, 0.5
    %v1049 = vtanh.pop %v1008
    %v1050 = vmul.f32 %v1047, 0.0
    %v1051 = vmul.f32 %v1046, %v1049
    %v1052 = vadd.f32 %v1050, %v1051
    %v1053 = vtanh.pop %v1052
    %v1054 = vmul.f32 %v1048, %v1053
    %v1055 = vmul.f32 %v1033, 0.5
    %v1056 = vmul.f32 %v1034, 0.5
    %v1057 = vmul.f32 %v1035, 0.5
    %v1058 = vtanh.pop %v1055
    %v1059 = vtanh.pop %v1056
    %v1060 = vtanh.pop %v1057
    %v1061 = vmul.f32 %v1058, 0.5
    %v1062 = vmul.f32 %v1059, 0.5
    %v1063 = vmul.f32 %v1060, 0.5
    %v1064 = vadd.f32 %v1061, 0.5
    %v1065 = vadd.f32 %v1062, 0.5
    %v1066 = vadd.f32 %v1063, 0.5
    %v1067 = vtanh.pop %v1036
    %v1068 = vmul.f32 %v1065, %v695
    %v1069 = vmul.f32 %v1064, %v1067
    %v1070 = vadd.f32 %v1068, %v1069
    %v1071 = vtanh.pop %v1070
    %v1072 = vmul.f32 %v1066, %v1071
    %v1074 = vlaneseq
    %v1075 = vshrl.u32 %v1074, 7
    %v1076 = vsub.s32 0, %v1075
    %v1077 = vrot.slane %v300, %v1076
    %v1079 = vmul.f32 %v1054, %v1077
    %vm1080 = vcmask 1041408
    %v1081 = vsel %vm1080, %v1079, 0.0
    %1082 = vadd.xlane.f32.xlu0 %v1081
    %v1083 = vpop.xlane.xlu0 %1082
    %v1085 = vlaneseq
    %v1086 = vshrl.u32 %v1085, 7
    %v1087 = vsub.s32 0, %v1086
    %v1088 = vrot.slane %v301, %v1087
    %v1090 = vadd.f32 %v1083, %v1088
    %vm1091 = vcmp.eq.s32.totalorder %v680, 0
    %1093 = vset.pattern.permute.xlu0 0
    %1094 = vperm.xlu0 %1093, %v1090
    %v1095 = vpop.permute.xlu0 %1094
    %v1097 = vsel %vm1091, %v1095, 0.0
    %1098 = vmatprep.subr.mxu0 %v44
    %1099 = vmatpush1.msra.mxu0 %v43
    %1100 = vmatprep.subr.mxu0 %v52
    %1101 = vmatpush1.msra.mxu0 %v51
    %1102 = vmatprep.subr.mxu0 %v60
    %1103 = vmatpush1.msra.mxu0 %v59
    %1104 = vmatprep.subr.mxu0 %v68
    %1105 = vmatpush1.msra.mxu0 %v67
    %1106 = vmatprep.subr.mxu0 %v76
    %1107 = vmatpush1.msra.mxu0 %v75
    %1108 = vmatprep.subr.mxu0 %v84
    %1109 = vmatpush1.msra.mxu0 %v83
    %1110 = vmatprep.subr.mxu0 %v92
    %1111 = vmatpush1.msra.mxu0 %v91
    %1112 = vmatprep.subr.mxu0 %v100
    %1113 = vmatpush1.msra.mxu0 %v99
    %1114 = vmatprep.subr.mxu0 %v108
    %1115 = vmatpush1.msra.mxu0 %v107
    %1116 = vmatprep.subr.mxu0 %v116
    %1117 = vmatpush1.msra.mxu0 %v115
    %1118 = vmatprep.subr.mxu0 %v124
    %1119 = vmatpush1.msra.mxu0 %v123
    %1120 = vmatprep.subr.mxu0 %v132
    %1121 = vmatpush1.msra.mxu0 %v131
    %1122 = vmatprep.subr.mxu0 %v140
    %1123 = vmatpush1.msra.mxu0 %v139
    %1124 = vmatprep.subr.mxu0 %v148
    %1125 = vmatpush1.msra.mxu0 %v147
    %1126 = vmatprep.subr.mxu0 %v156
    %1127 = vmatpush1.msra.mxu0 %v155
    %1128 = vmatprep.subr.mxu0 %v164
    %1129 = vmatpush1.msra.mxu0 %v163
    %1130 = vmatprep.subr.mxu0 %v172
    %1131 = vmatpush1.msra.mxu0 %v171
    %1132 = vmatprep.subr.mxu0 %v180
    %1133 = vmatpush1.msra.mxu0 %v179
    %1134 = vmatprep.subr.mxu0 %v188
    %1135 = vmatpush1.msra.mxu0 %v187
    %1136 = vmatprep.subr.mxu0 %v196
    %1137 = vmatpush1.msra.mxu0 %v195
    %1138 = vmatprep.subr.mxu0 %v204
    %1139 = vmatpush1.msra.mxu0 %v203
    %1140 = vmatprep.subr.mxu0 %v212
    %1141 = vmatpush1.msra.mxu0 %v211
    %1142 = vmatprep.subr.mxu0 %v220
    %1143 = vmatpush1.msra.mxu0 %v219
    %1144 = vmatprep.subr.mxu0 %v228
    %1145 = vmatpush1.msra.mxu0 %v227
    %1146 = vmatprep.subr.mxu0 %v236
    %1147 = vmatpush1.msra.mxu0 %v235
    %1148 = vmatprep.subr.mxu0 %v244
    %1149 = vmatpush1.msra.mxu0 %v243
    %1150 = vmatprep.subr.mxu0 %v252
    %1151 = vmatpush1.msra.mxu0 %v251
    %1152 = vmatprep.subr.mxu0 %v260
    %1153 = vmatpush1.msra.mxu0 %v259
    %1154 = vmatprep.subr.mxu0 %v268
    %1155 = vmatpush1.msra.mxu0 %v267
    %1156 = vmatprep.subr.mxu0 %v276
    %1157 = vmatpush1.msra.mxu0 %v275
    %1158 = vmatprep.subr.mxu0 %v284
    %1159 = vmatpush1.msra.mxu0 %v283
    %1160 = vmatprep.subr.mxu0 %v292
    %1161 = vmatpush1.msra.mxu0 %v291
    %1162 = vmatprep.mubr.f32.mxu0 %v1054
    %1163 = vmatmul.mubr.f32.gmra.mrb[0].mxu0 %v1072
    %v1164 = vpop.f32.mrb[0].mxu0
    %v1165 = vadd.f32 0.0, %v1164
    %v1166 = vpop.f32.mrb[0].mxu0
    %v1167 = vadd.f32 0.0, %v1166
    %1168 = vdwg.mxu0
    %1169 = vmatprep.subr.mxu0 %v46
    %1170 = vmatpush1.msra.mxu0 %v45
    %1171 = vmatprep.subr.mxu0 %v54
    %1172 = vmatpush1.msra.mxu0 %v53
    %1173 = vmatprep.subr.mxu0 %v62
    %1174 = vmatpush1.msra.mxu0 %v61
    %1175 = vmatprep.subr.mxu0 %v70
    %1176 = vmatpush1.msra.mxu0 %v69
    %1177 = vmatprep.subr.mxu0 %v78
    %1178 = vmatpush1.msra.mxu0 %v77
    %1179 = vmatprep.subr.mxu0 %v86
    %1180 = vmatpush1.msra.mxu0 %v85
    %1181 = vmatprep.subr.mxu0 %v94
    %1182 = vmatpush1.msra.mxu0 %v93
    %1183 = vmatprep.subr.mxu0 %v102
    %1184 = vmatpush1.msra.mxu0 %v101
    %1185 = vmatprep.subr.mxu0 %v110
    %1186 = vmatpush1.msra.mxu0 %v109
    %1187 = vmatprep.subr.mxu0 %v118
    %1188 = vmatpush1.msra.mxu0 %v117
    %1189 = vmatprep.subr.mxu0 %v126
    %1190 = vmatpush1.msra.mxu0 %v125
    %1191 = vmatprep.subr.mxu0 %v134
    %1192 = vmatpush1.msra.mxu0 %v133
    %1193 = vmatprep.subr.mxu0 %v142
    %1194 = vmatpush1.msra.mxu0 %v141
    %1195 = vmatprep.subr.mxu0 %v150
    %1196 = vmatpush1.msra.mxu0 %v149
    %1197 = vmatprep.subr.mxu0 %v158
    %1198 = vmatpush1.msra.mxu0 %v157
    %1199 = vmatprep.subr.mxu0 %v166
    %1200 = vmatpush1.msra.mxu0 %v165
    %1201 = vmatprep.subr.mxu0 %v174
    %1202 = vmatpush1.msra.mxu0 %v173
    %1203 = vmatprep.subr.mxu0 %v182
    %1204 = vmatpush1.msra.mxu0 %v181
    %1205 = vmatprep.subr.mxu0 %v190
    %1206 = vmatpush1.msra.mxu0 %v189
    %1207 = vmatprep.subr.mxu0 %v198
    %1208 = vmatpush1.msra.mxu0 %v197
    %1209 = vmatprep.subr.mxu0 %v206
    %1210 = vmatpush1.msra.mxu0 %v205
    %1211 = vmatprep.subr.mxu0 %v214
    %1212 = vmatpush1.msra.mxu0 %v213
    %1213 = vmatprep.subr.mxu0 %v222
    %1214 = vmatpush1.msra.mxu0 %v221
    %1215 = vmatprep.subr.mxu0 %v230
    %1216 = vmatpush1.msra.mxu0 %v229
    %1217 = vmatprep.subr.mxu0 %v238
    %1218 = vmatpush1.msra.mxu0 %v237
    %1219 = vmatprep.subr.mxu0 %v246
    %1220 = vmatpush1.msra.mxu0 %v245
    %1221 = vmatprep.subr.mxu0 %v254
    %1222 = vmatpush1.msra.mxu0 %v253
    %1223 = vmatprep.subr.mxu0 %v262
    %1224 = vmatpush1.msra.mxu0 %v261
    %1225 = vmatprep.subr.mxu0 %v270
    %1226 = vmatpush1.msra.mxu0 %v269
    %1227 = vmatprep.subr.mxu0 %v278
    %1228 = vmatpush1.msra.mxu0 %v277
    %1229 = vmatprep.subr.mxu0 %v286
    %1230 = vmatpush1.msra.mxu0 %v285
    %1231 = vmatprep.subr.mxu0 %v294
    %1232 = vmatpush1.msra.mxu0 %v293
    %1233 = vmatprep.mubr.f32.mxu0 %v1054
    %1234 = vmatmul.mubr.f32.gmra.mrb[0].mxu0 %v1072
    %v1235 = vpop.f32.mrb[0].mxu0
    %v1236 = vadd.f32 0.0, %v1235
    %v1237 = vpop.f32.mrb[0].mxu0
    %v1238 = vadd.f32 0.0, %v1237
    %1239 = vdwg.mxu0
    %1240 = vmatprep.subr.mxu0 %v48
    %1241 = vmatpush1.msra.mxu0 %v47
    %1242 = vmatprep.subr.mxu0 %v56
    %1243 = vmatpush1.msra.mxu0 %v55
    %1244 = vmatprep.subr.mxu0 %v64
    %1245 = vmatpush1.msra.mxu0 %v63
    %1246 = vmatprep.subr.mxu0 %v72
    %1247 = vmatpush1.msra.mxu0 %v71
    %1248 = vmatprep.subr.mxu0 %v80
    %1249 = vmatpush1.msra.mxu0 %v79
    %1250 = vmatprep.subr.mxu0 %v88
    %1251 = vmatpush1.msra.mxu0 %v87
    %1252 = vmatprep.subr.mxu0 %v96
    %1253 = vmatpush1.msra.mxu0 %v95
    %1254 = vmatprep.subr.mxu0 %v104
    %1255 = vmatpush1.msra.mxu0 %v103
    %1256 = vmatprep.subr.mxu0 %v112
    %1257 = vmatpush1.msra.mxu0 %v111
    %1258 = vmatprep.subr.mxu0 %v120
    %1259 = vmatpush1.msra.mxu0 %v119
    %1260 = vmatprep.subr.mxu0 %v128
    %1261 = vmatpush1.msra.mxu0 %v127
    %1262 = vmatprep.subr.mxu0 %v136
    %1263 = vmatpush1.msra.mxu0 %v135
    %1264 = vmatprep.subr.mxu0 %v144
    %1265 = vmatpush1.msra.mxu0 %v143
    %1266 = vmatprep.subr.mxu0 %v152
    %1267 = vmatpush1.msra.mxu0 %v151
    %1268 = vmatprep.subr.mxu0 %v160
    %1269 = vmatpush1.msra.mxu0 %v159
    %1270 = vmatprep.subr.mxu0 %v168
    %1271 = vmatpush1.msra.mxu0 %v167
    %1272 = vmatprep.subr.mxu0 %v176
    %1273 = vmatpush1.msra.mxu0 %v175
    %1274 = vmatprep.subr.mxu0 %v184
    %1275 = vmatpush1.msra.mxu0 %v183
    %1276 = vmatprep.subr.mxu0 %v192
    %1277 = vmatpush1.msra.mxu0 %v191
    %1278 = vmatprep.subr.mxu0 %v200
    %1279 = vmatpush1.msra.mxu0 %v199
    %1280 = vmatprep.subr.mxu0 %v208
    %1281 = vmatpush1.msra.mxu0 %v207
    %1282 = vmatprep.subr.mxu0 %v216
    %1283 = vmatpush1.msra.mxu0 %v215
    %1284 = vmatprep.subr.mxu0 %v224
    %1285 = vmatpush1.msra.mxu0 %v223
    %1286 = vmatprep.subr.mxu0 %v232
    %1287 = vmatpush1.msra.mxu0 %v231
    %1288 = vmatprep.subr.mxu0 %v240
    %1289 = vmatpush1.msra.mxu0 %v239
    %1290 = vmatprep.subr.mxu0 %v248
    %1291 = vmatpush1.msra.mxu0 %v247
    %1292 = vmatprep.subr.mxu0 %v256
    %1293 = vmatpush1.msra.mxu0 %v255
    %1294 = vmatprep.subr.mxu0 %v264
    %1295 = vmatpush1.msra.mxu0 %v263
    %1296 = vmatprep.subr.mxu0 %v272
    %1297 = vmatpush1.msra.mxu0 %v271
    %1298 = vmatprep.subr.mxu0 %v280
    %1299 = vmatpush1.msra.mxu0 %v279
    %1300 = vmatprep.subr.mxu0 %v288
    %1301 = vmatpush1.msra.mxu0 %v287
    %1302 = vmatprep.subr.mxu0 %v296
    %1303 = vmatpush1.msra.mxu0 %v295
    %1304 = vmatprep.mubr.f32.mxu0 %v1054
    %1305 = vmatmul.mubr.f32.gmra.mrb[0].mxu0 %v1072
    %v1306 = vpop.f32.mrb[0].mxu0
    %v1307 = vadd.f32 0.0, %v1306
    %v1308 = vpop.f32.mrb[0].mxu0
    %v1309 = vadd.f32 0.0, %v1308
    %1310 = vdwg.mxu0
    %1311 = vmatprep.subr.mxu0 %v50
    %1312 = vmatpush1.msra.mxu0 %v49
    %1313 = vmatprep.subr.mxu0 %v58
    %1314 = vmatpush1.msra.mxu0 %v57
    %1315 = vmatprep.subr.mxu0 %v66
    %1316 = vmatpush1.msra.mxu0 %v65
    %1317 = vmatprep.subr.mxu0 %v74
    %1318 = vmatpush1.msra.mxu0 %v73
    %1319 = vmatprep.subr.mxu0 %v82
    %1320 = vmatpush1.msra.mxu0 %v81
    %1321 = vmatprep.subr.mxu0 %v90
    %1322 = vmatpush1.msra.mxu0 %v89
    %1323 = vmatprep.subr.mxu0 %v98
    %1324 = vmatpush1.msra.mxu0 %v97
    %1325 = vmatprep.subr.mxu0 %v106
    %1326 = vmatpush1.msra.mxu0 %v105
    %1327 = vmatprep.subr.mxu0 %v114
    %1328 = vmatpush1.msra.mxu0 %v113
    %1329 = vmatprep.subr.mxu0 %v122
    %1330 = vmatpush1.msra.mxu0 %v121
    %1331 = vmatprep.subr.mxu0 %v130
    %1332 = vmatpush1.msra.mxu0 %v129
    %1333 = vmatprep.subr.mxu0 %v138
    %1334 = vmatpush1.msra.mxu0 %v137
    %1335 = vmatprep.subr.mxu0 %v146
    %1336 = vmatpush1.msra.mxu0 %v145
    %1337 = vmatprep.subr.mxu0 %v154
    %1338 = vmatpush1.msra.mxu0 %v153
    %1339 = vmatprep.subr.mxu0 %v162
    %1340 = vmatpush1.msra.mxu0 %v161
    %1341 = vmatprep.subr.mxu0 %v170
    %1342 = vmatpush1.msra.mxu0 %v169
    %1343 = vmatprep.subr.mxu0 %v178
    %1344 = vmatpush1.msra.mxu0 %v177
    %1345 = vmatprep.subr.mxu0 %v186
    %1346 = vmatpush1.msra.mxu0 %v185
    %1347 = vmatprep.subr.mxu0 %v194
    %1348 = vmatpush1.msra.mxu0 %v193
    %1349 = vmatprep.subr.mxu0 %v202
    %1350 = vmatpush1.msra.mxu0 %v201
    %1351 = vmatprep.subr.mxu0 %v210
    %1352 = vmatpush1.msra.mxu0 %v209
    %1353 = vmatprep.subr.mxu0 %v218
    %1354 = vmatpush1.msra.mxu0 %v217
    %1355 = vmatprep.subr.mxu0 %v226
    %1356 = vmatpush1.msra.mxu0 %v225
    %1357 = vmatprep.subr.mxu0 %v234
    %1358 = vmatpush1.msra.mxu0 %v233
    %1359 = vmatprep.subr.mxu0 %v242
    %1360 = vmatpush1.msra.mxu0 %v241
    %1361 = vmatprep.subr.mxu0 %v250
    %1362 = vmatpush1.msra.mxu0 %v249
    %1363 = vmatprep.subr.mxu0 %v258
    %1364 = vmatpush1.msra.mxu0 %v257
    %1365 = vmatprep.subr.mxu0 %v266
    %1366 = vmatpush1.msra.mxu0 %v265
    %1367 = vmatprep.subr.mxu0 %v274
    %1368 = vmatpush1.msra.mxu0 %v273
    %1369 = vmatprep.subr.mxu0 %v282
    %1370 = vmatpush1.msra.mxu0 %v281
    %1371 = vmatprep.subr.mxu0 %v290
    %1372 = vmatpush1.msra.mxu0 %v289
    %1373 = vmatprep.subr.mxu0 %v298
    %1374 = vmatpush1.msra.mxu0 %v297
    %1375 = vmatprep.mubr.f32.mxu0 %v1054
    %1376 = vmatmul.mubr.f32.gmra.mrb[0].mxu0 %v1072
    %v1377 = vpop.f32.mrb[0].mxu0
    %v1378 = vadd.f32 0.0, %v1377
    %v1379 = vpop.f32.mrb[0].mxu0
    %v1380 = vadd.f32 0.0, %v1379
    %1381 = vdwg.mxu0
    %v1382 = vadd.f32 %v1165, %v988
    %v1383 = vadd.f32 %v1167, %v992
    %v1384 = vadd.f32 %v1236, %v996
    %v1385 = vadd.f32 %v1238, %v1000
    %s1386 = scalar_lea.vmem [#allocation2], 16
    %v1387 = vld [vmem:[%s1386] sm:$0xff]
    %v1389 = vcombine.high %v1387, %v1387
    %v1391 = vunpack.c.l.s4 1983009808
    %v1392 = vunpack.c.0.s8 %v1391
    %v1393 = vlaneseq
    %v1394 = vshrl.u32 %v1393, 7
    %v1395 = vsub.s32 %v1392, %v1394
    %v1396 = vrot.slane %v1387, %v1395
    %v1398 = vunpack.c.l.s4 1983009808
    %v1399 = vunpack.c.0.s8 %v1398
    %v1400 = vlaneseq
    %v1401 = vshrl.u32 %v1400, 7
    %v1402 = vsub.s32 %v1399, %v1401
    %v1403 = vrot.slane %v1389, %v1402
    %v1404 = vcombine.high %v1396, %v1396
    %v1405 = vcombine.high %v1403, %v1403
    %v1410 = vadd.f32 %v1307, %v1396
    %v1411 = vadd.f32 %v1309, %v1404
    %v1412 = vadd.f32 %v1378, %v1403
    %v1413 = vadd.f32 %v1380, %v1405
    %v1414 = vmul.f32 %v1382, 0.5
    %v1415 = vmul.f32 %v1383, 0.5
    %v1416 = vmul.f32 %v1384, 0.5
    %v1417 = vtanh.pop %v1414
    %v1418 = vtanh.pop %v1415
    %v1419 = vtanh.pop %v1416
    %v1420 = vmul.f32 %v1417, 0.5
    %v1421 = vmul.f32 %v1418, 0.5
    %v1422 = vmul.f32 %v1419, 0.5
    %v1423 = vadd.f32 %v1420, 0.5
    %v1424 = vadd.f32 %v1421, 0.5
    %v1425 = vadd.f32 %v1422, 0.5
    %v1426 = vtanh.pop %v1385
    %v1427 = vmul.f32 %v1424, %v1052
    %v1428 = vmul.f32 %v1423, %v1426
    %v1429 = vadd.f32 %v1427, %v1428
    %v1430 = vtanh.pop %v1429
    %v1431 = vmul.f32 %v1425, %v1430
    %v1432 = vmul.f32 %v1410, 0.5
    %v1433 = vmul.f32 %v1411, 0.5
    %v1434 = vmul.f32 %v1412, 0.5
    %v1435 = vtanh.pop %v1432
    %v1436 = vtanh.pop %v1433
    %v1437 = vtanh.pop %v1434
    %v1438 = vmul.f32 %v1435, 0.5
    %v1439 = vmul.f32 %v1436, 0.5
    %v1440 = vmul.f32 %v1437, 0.5
    %v1441 = vadd.f32 %v1438, 0.5
    %v1442 = vadd.f32 %v1439, 0.5
    %v1443 = vadd.f32 %v1440, 0.5
    %v1444 = vtanh.pop %v1413
    %v1445 = vmul.f32 %v1442, %v1070
    %v1446 = vmul.f32 %v1441, %v1444
    %v1447 = vadd.f32 %v1445, %v1446
    %v1448 = vtanh.pop %v1447
    %v1449 = vmul.f32 %v1443, %v1448
    %v1450 = vmul.f32 %v1431, %v1077
    %v1451 = vsel %vm1080, %v1450, 0.0
    %1452 = vadd.xlane.f32.xlu0 %v1451
    %v1453 = vpop.xlane.xlu0 %1452
    %v1454 = vadd.f32 %v1453, %v1088
    %vm1455 = vcmp.eq.s32.totalorder %v680, 1
    %1457 = vset.pattern.permute.xlu0 0
    %1458 = vperm.xlu0 %1457, %v1454
    %v1459 = vpop.permute.xlu0 %1458
    %v1461 = vsel %vm1455, %v1459, %v1097
    %1462 = vmatprep.subr.mxu0 %v44
    %1463 = vmatpush1.msra.mxu0 %v43
    %1464 = vmatprep.subr.mxu0 %v52
    %1465 = vmatpush1.msra.mxu0 %v51
    %1466 = vmatprep.subr.mxu0 %v60
    %1467 = vmatpush1.msra.mxu0 %v59
    %1468 = vmatprep.subr.mxu0 %v68
    %1469 = vmatpush1.msra.mxu0 %v67
    %1470 = vmatprep.subr.mxu0 %v76
    %1471 = vmatpush1.msra.mxu0 %v75
    %1472 = vmatprep.subr.mxu0 %v84
    %1473 = vmatpush1.msra.mxu0 %v83
    %1474 = vmatprep.subr.mxu0 %v92
    %1475 = vmatpush1.msra.mxu0 %v91
    %1476 = vmatprep.subr.mxu0 %v100
    %1477 = vmatpush1.msra.mxu0 %v99
    %1478 = vmatprep.subr.mxu0 %v108
    %1479 = vmatpush1.msra.mxu0 %v107
    %1480 = vmatprep.subr.mxu0 %v116
    %1481 = vmatpush1.msra.mxu0 %v115
    %1482 = vmatprep.subr.mxu0 %v124
    %1483 = vmatpush1.msra.mxu0 %v123
    %1484 = vmatprep.subr.mxu0 %v132
    %1485 = vmatpush1.msra.mxu0 %v131
    %1486 = vmatprep.subr.mxu0 %v140
    %1487 = vmatpush1.msra.mxu0 %v139
    %1488 = vmatprep.subr.mxu0 %v148
    %1489 = vmatpush1.msra.mxu0 %v147
    %1490 = vmatprep.subr.mxu0 %v156
    %1491 = vmatpush1.msra.mxu0 %v155
    %1492 = vmatprep.subr.mxu0 %v164
    %1493 = vmatpush1.msra.mxu0 %v163
    %1494 = vmatprep.subr.mxu0 %v172
    %1495 = vmatpush1.msra.mxu0 %v171
    %1496 = vmatprep.subr.mxu0 %v180
    %1497 = vmatpush1.msra.mxu0 %v179
    %1498 = vmatprep.subr.mxu0 %v188
    %1499 = vmatpush1.msra.mxu0 %v187
    %1500 = vmatprep.subr.mxu0 %v196
    %1501 = vmatpush1.msra.mxu0 %v195
    %1502 = vmatprep.subr.mxu0 %v204
    %1503 = vmatpush1.msra.mxu0 %v203
    %1504 = vmatprep.subr.mxu0 %v212
    %1505 = vmatpush1.msra.mxu0 %v211
    %1506 = vmatprep.subr.mxu0 %v220
    %1507 = vmatpush1.msra.mxu0 %v219
    %1508 = vmatprep.subr.mxu0 %v228
    %1509 = vmatpush1.msra.mxu0 %v227
    %1510 = vmatprep.subr.mxu0 %v236
    %1511 = vmatpush1.msra.mxu0 %v235
    %1512 = vmatprep.subr.mxu0 %v244
    %1513 = vmatpush1.msra.mxu0 %v243
    %1514 = vmatprep.subr.mxu0 %v252
    %1515 = vmatpush1.msra.mxu0 %v251
    %1516 = vmatprep.subr.mxu0 %v260
    %1517 = vmatpush1.msra.mxu0 %v259
    %1518 = vmatprep.subr.mxu0 %v268
    %1519 = vmatpush1.msra.mxu0 %v267
    %1520 = vmatprep.subr.mxu0 %v276
    %1521 = vmatpush1.msra.mxu0 %v275
    %1522 = vmatprep.subr.mxu0 %v284
    %1523 = vmatpush1.msra.mxu0 %v283
    %1524 = vmatprep.subr.mxu0 %v292
    %1525 = vmatpush1.msra.mxu0 %v291
    %1526 = vmatprep.mubr.f32.mxu0 %v1431
    %1527 = vmatmul.mubr.f32.gmra.mrb[0].mxu0 %v1449
    %v1528 = vpop.f32.mrb[0].mxu0
    %v1529 = vadd.f32 0.0, %v1528
    %v1530 = vpop.f32.mrb[0].mxu0
    %v1531 = vadd.f32 0.0, %v1530
    %1532 = vdwg.mxu0
    %1533 = vmatprep.subr.mxu0 %v46
    %1534 = vmatpush1.msra.mxu0 %v45
    %1535 = vmatprep.subr.mxu0 %v54
    %1536 = vmatpush1.msra.mxu0 %v53
    %1537 = vmatprep.subr.mxu0 %v62
    %1538 = vmatpush1.msra.mxu0 %v61
    %1539 = vmatprep.subr.mxu0 %v70
    %1540 = vmatpush1.msra.mxu0 %v69
    %1541 = vmatprep.subr.mxu0 %v78
    %1542 = vmatpush1.msra.mxu0 %v77
    %1543 = vmatprep.subr.mxu0 %v86
    %1544 = vmatpush1.msra.mxu0 %v85
    %1545 = vmatprep.subr.mxu0 %v94
    %1546 = vmatpush1.msra.mxu0 %v93
    %1547 = vmatprep.subr.mxu0 %v102
    %1548 = vmatpush1.msra.mxu0 %v101
    %1549 = vmatprep.subr.mxu0 %v110
    %1550 = vmatpush1.msra.mxu0 %v109
    %1551 = vmatprep.subr.mxu0 %v118
    %1552 = vmatpush1.msra.mxu0 %v117
    %1553 = vmatprep.subr.mxu0 %v126
    %1554 = vmatpush1.msra.mxu0 %v125
    %1555 = vmatprep.subr.mxu0 %v134
    %1556 = vmatpush1.msra.mxu0 %v133
    %1557 = vmatprep.subr.mxu0 %v142
    %1558 = vmatpush1.msra.mxu0 %v141
    %1559 = vmatprep.subr.mxu0 %v150
    %1560 = vmatpush1.msra.mxu0 %v149
    %1561 = vmatprep.subr.mxu0 %v158
    %1562 = vmatpush1.msra.mxu0 %v157
    %1563 = vmatprep.subr.mxu0 %v166
    %1564 = vmatpush1.msra.mxu0 %v165
    %1565 = vmatprep.subr.mxu0 %v174
    %1566 = vmatpush1.msra.mxu0 %v173
    %1567 = vmatprep.subr.mxu0 %v182
    %1568 = vmatpush1.msra.mxu0 %v181
    %1569 = vmatprep.subr.mxu0 %v190
    %1570 = vmatpush1.msra.mxu0 %v189
    %1571 = vmatprep.subr.mxu0 %v198
    %1572 = vmatpush1.msra.mxu0 %v197
    %1573 = vmatprep.subr.mxu0 %v206
    %1574 = vmatpush1.msra.mxu0 %v205
    %1575 = vmatprep.subr.mxu0 %v214
    %1576 = vmatpush1.msra.mxu0 %v213
    %1577 = vmatprep.subr.mxu0 %v222
    %1578 = vmatpush1.msra.mxu0 %v221
    %1579 = vmatprep.subr.mxu0 %v230
    %1580 = vmatpush1.msra.mxu0 %v229
    %1581 = vmatprep.subr.mxu0 %v238
    %1582 = vmatpush1.msra.mxu0 %v237
    %1583 = vmatprep.subr.mxu0 %v246
    %1584 = vmatpush1.msra.mxu0 %v245
    %1585 = vmatprep.subr.mxu0 %v254
    %1586 = vmatpush1.msra.mxu0 %v253
    %1587 = vmatprep.subr.mxu0 %v262
    %1588 = vmatpush1.msra.mxu0 %v261
    %1589 = vmatprep.subr.mxu0 %v270
    %1590 = vmatpush1.msra.mxu0 %v269
    %1591 = vmatprep.subr.mxu0 %v278
    %1592 = vmatpush1.msra.mxu0 %v277
    %1593 = vmatprep.subr.mxu0 %v286
    %1594 = vmatpush1.msra.mxu0 %v285
    %1595 = vmatprep.subr.mxu0 %v294
    %1596 = vmatpush1.msra.mxu0 %v293
    %1597 = vmatprep.mubr.f32.mxu0 %v1431
    %1598 = vmatmul.mubr.f32.gmra.mrb[0].mxu0 %v1449
    %v1599 = vpop.f32.mrb[0].mxu0
    %v1600 = vadd.f32 0.0, %v1599
    %v1601 = vpop.f32.mrb[0].mxu0
    %v1602 = vadd.f32 0.0, %v1601
    %1603 = vdwg.mxu0
    %1604 = vmatprep.subr.mxu0 %v48
    %1605 = vmatpush1.msra.mxu0 %v47
    %1606 = vmatprep.subr.mxu0 %v56
    %1607 = vmatpush1.msra.mxu0 %v55
    %1608 = vmatprep.subr.mxu0 %v64
    %1609 = vmatpush1.msra.mxu0 %v63
    %1610 = vmatprep.subr.mxu0 %v72
    %1611 = vmatpush1.msra.mxu0 %v71
    %1612 = vmatprep.subr.mxu0 %v80
    %1613 = vmatpush1.msra.mxu0 %v79
    %1614 = vmatprep.subr.mxu0 %v88
    %1615 = vmatpush1.msra.mxu0 %v87
    %1616 = vmatprep.subr.mxu0 %v96
    %1617 = vmatpush1.msra.mxu0 %v95
    %1618 = vmatprep.subr.mxu0 %v104
    %1619 = vmatpush1.msra.mxu0 %v103
    %1620 = vmatprep.subr.mxu0 %v112
    %1621 = vmatpush1.msra.mxu0 %v111
    %1622 = vmatprep.subr.mxu0 %v120
    %1623 = vmatpush1.msra.mxu0 %v119
    %1624 = vmatprep.subr.mxu0 %v128
    %1625 = vmatpush1.msra.mxu0 %v127
    %1626 = vmatprep.subr.mxu0 %v136
    %1627 = vmatpush1.msra.mxu0 %v135
    %1628 = vmatprep.subr.mxu0 %v144
    %1629 = vmatpush1.msra.mxu0 %v143
    %1630 = vmatprep.subr.mxu0 %v152
    %1631 = vmatpush1.msra.mxu0 %v151
    %1632 = vmatprep.subr.mxu0 %v160
    %1633 = vmatpush1.msra.mxu0 %v159
    %1634 = vmatprep.subr.mxu0 %v168
    %1635 = vmatpush1.msra.mxu0 %v167
    %1636 = vmatprep.subr.mxu0 %v176
    %1637 = vmatpush1.msra.mxu0 %v175
    %1638 = vmatprep.subr.mxu0 %v184
    %1639 = vmatpush1.msra.mxu0 %v183
    %1640 = vmatprep.subr.mxu0 %v192
    %1641 = vmatpush1.msra.mxu0 %v191
    %1642 = vmatprep.subr.mxu0 %v200
    %1643 = vmatpush1.msra.mxu0 %v199
    %1644 = vmatprep.subr.mxu0 %v208
    %1645 = vmatpush1.msra.mxu0 %v207
    %1646 = vmatprep.subr.mxu0 %v216
    %1647 = vmatpush1.msra.mxu0 %v215
    %1648 = vmatprep.subr.mxu0 %v224
    %1649 = vmatpush1.msra.mxu0 %v223
    %1650 = vmatprep.subr.mxu0 %v232
    %1651 = vmatpush1.msra.mxu0 %v231
    %1652 = vmatprep.subr.mxu0 %v240
    %1653 = vmatpush1.msra.mxu0 %v239
    %1654 = vmatprep.subr.mxu0 %v248
    %1655 = vmatpush1.msra.mxu0 %v247
    %1656 = vmatprep.subr.mxu0 %v256
    %1657 = vmatpush1.msra.mxu0 %v255
    %1658 = vmatprep.subr.mxu0 %v264
    %1659 = vmatpush1.msra.mxu0 %v263
    %1660 = vmatprep.subr.mxu0 %v272
    %1661 = vmatpush1.msra.mxu0 %v271
    %1662 = vmatprep.subr.mxu0 %v280
    %1663 = vmatpush1.msra.mxu0 %v279
    %1664 = vmatprep.subr.mxu0 %v288
    %1665 = vmatpush1.msra.mxu0 %v287
    %1666 = vmatprep.subr.mxu0 %v296
    %1667 = vmatpush1.msra.mxu0 %v295
    %1668 = vmatprep.mubr.f32.mxu0 %v1431
    %1669 = vmatmul.mubr.f32.gmra.mrb[0].mxu0 %v1449
    %v1670 = vpop.f32.mrb[0].mxu0
    %v1671 = vadd.f32 0.0, %v1670
    %v1672 = vpop.f32.mrb[0].mxu0
    %v1673 = vadd.f32 0.0, %v1672
    %1674 = vdwg.mxu0
    %1675 = vmatprep.subr.mxu0 %v50
    %1676 = vmatpush1.msra.mxu0 %v49
    %1677 = vmatprep.subr.mxu0 %v58
    %1678 = vmatpush1.msra.mxu0 %v57
    %1679 = vmatprep.subr.mxu0 %v66
    %1680 = vmatpush1.msra.mxu0 %v65
    %1681 = vmatprep.subr.mxu0 %v74
    %1682 = vmatpush1.msra.mxu0 %v73
    %1683 = vmatprep.subr.mxu0 %v82
    %1684 = vmatpush1.msra.mxu0 %v81
    %1685 = vmatprep.subr.mxu0 %v90
    %1686 = vmatpush1.msra.mxu0 %v89
    %1687 = vmatprep.subr.mxu0 %v98
    %1688 = vmatpush1.msra.mxu0 %v97
    %1689 = vmatprep.subr.mxu0 %v106
    %1690 = vmatpush1.msra.mxu0 %v105
    %1691 = vmatprep.subr.mxu0 %v114
    %1692 = vmatpush1.msra.mxu0 %v113
    %1693 = vmatprep.subr.mxu0 %v122
    %1694 = vmatpush1.msra.mxu0 %v121
    %1695 = vmatprep.subr.mxu0 %v130
    %1696 = vmatpush1.msra.mxu0 %v129
    %1697 = vmatprep.subr.mxu0 %v138
    %1698 = vmatpush1.msra.mxu0 %v137
    %1699 = vmatprep.subr.mxu0 %v146
    %1700 = vmatpush1.msra.mxu0 %v145
    %1701 = vmatprep.subr.mxu0 %v154
    %1702 = vmatpush1.msra.mxu0 %v153
    %1703 = vmatprep.subr.mxu0 %v162
    %1704 = vmatpush1.msra.mxu0 %v161
    %1705 = vmatprep.subr.mxu0 %v170
    %1706 = vmatpush1.msra.mxu0 %v169
    %1707 = vmatprep.subr.mxu0 %v178
    %1708 = vmatpush1.msra.mxu0 %v177
    %1709 = vmatprep.subr.mxu0 %v186
    %1710 = vmatpush1.msra.mxu0 %v185
    %1711 = vmatprep.subr.mxu0 %v194
    %1712 = vmatpush1.msra.mxu0 %v193
    %1713 = vmatprep.subr.mxu0 %v202
    %1714 = vmatpush1.msra.mxu0 %v201
    %1715 = vmatprep.subr.mxu0 %v210
    %1716 = vmatpush1.msra.mxu0 %v209
    %1717 = vmatprep.subr.mxu0 %v218
    %1718 = vmatpush1.msra.mxu0 %v217
    %1719 = vmatprep.subr.mxu0 %v226
    %1720 = vmatpush1.msra.mxu0 %v225
    %1721 = vmatprep.subr.mxu0 %v234
    %1722 = vmatpush1.msra.mxu0 %v233
    %1723 = vmatprep.subr.mxu0 %v242
    %1724 = vmatpush1.msra.mxu0 %v241
    %1725 = vmatprep.subr.mxu0 %v250
    %1726 = vmatpush1.msra.mxu0 %v249
    %1727 = vmatprep.subr.mxu0 %v258
    %1728 = vmatpush1.msra.mxu0 %v257
    %1729 = vmatprep.subr.mxu0 %v266
    %1730 = vmatpush1.msra.mxu0 %v265
    %1731 = vmatprep.subr.mxu0 %v274
    %1732 = vmatpush1.msra.mxu0 %v273
    %1733 = vmatprep.subr.mxu0 %v282
    %1734 = vmatpush1.msra.mxu0 %v281
    %1735 = vmatprep.subr.mxu0 %v290
    %1736 = vmatpush1.msra.mxu0 %v289
    %1737 = vmatprep.subr.mxu0 %v298
    %1738 = vmatpush1.msra.mxu0 %v297
    %1739 = vmatprep.mubr.f32.mxu0 %v1431
    %1740 = vmatmul.mubr.f32.gmra.mrb[0].mxu0 %v1449
    %v1741 = vpop.f32.mrb[0].mxu0
    %v1742 = vadd.f32 0.0, %v1741
    %v1743 = vpop.f32.mrb[0].mxu0
    %v1744 = vadd.f32 0.0, %v1743
    %1745 = vdwg.mxu0
    %v1746 = vadd.f32 %v1529, %v988
    %v1747 = vadd.f32 %v1531, %v992
    %v1748 = vadd.f32 %v1600, %v996
    %v1749 = vadd.f32 %v1602, %v1000
    %s1750 = scalar_lea.vmem [#allocation2], 24
    %v1751 = vld [vmem:[%s1750] sm:$0xff]
    %v1753 = vcombine.high %v1751, %v1751
    %v1755 = vunpack.c.l.s4 1983009808
    %v1756 = vunpack.c.0.s8 %v1755
    %v1757 = vlaneseq
    %v1758 = vshrl.u32 %v1757, 7
    %v1759 = vsub.s32 %v1756, %v1758
    %v1760 = vrot.slane %v1751, %v1759
    %v1762 = vunpack.c.l.s4 1983009808
    %v1763 = vunpack.c.0.s8 %v1762
    %v1764 = vlaneseq
    %v1765 = vshrl.u32 %v1764, 7
    %v1766 = vsub.s32 %v1763, %v1765
    %v1767 = vrot.slane %v1753, %v1766
    %v1768 = vcombine.high %v1760, %v1760
    %v1769 = vcombine.high %v1767, %v1767
    %v1774 = vadd.f32 %v1671, %v1760
    %v1775 = vadd.f32 %v1673, %v1768
    %v1776 = vadd.f32 %v1742, %v1767
    %v1777 = vadd.f32 %v1744, %v1769
    %v1778 = vmul.f32 %v1746, 0.5
    %v1779 = vmul.f32 %v1747, 0.5
    %v1780 = vmul.f32 %v1748, 0.5
    %v1781 = vtanh.pop %v1778
    %v1782 = vtanh.pop %v1779
    %v1783 = vtanh.pop %v1780
    %v1784 = vmul.f32 %v1781, 0.5
    %v1785 = vmul.f32 %v1782, 0.5
    %v1786 = vmul.f32 %v1783, 0.5
    %v1787 = vadd.f32 %v1784, 0.5
    %v1788 = vadd.f32 %v1785, 0.5
    %v1789 = vadd.f32 %v1786, 0.5
    %v1790 = vtanh.pop %v1749
    %v1791 = vmul.f32 %v1788, %v1429
    %v1792 = vmul.f32 %v1787, %v1790
    %v1793 = vadd.f32 %v1791, %v1792
    %v1794 = vtanh.pop %v1793
    %v1795 = vmul.f32 %v1789, %v1794
    %v1796 = vmul.f32 %v1774, 0.5
    %v1797 = vmul.f32 %v1775, 0.5
    %v1798 = vmul.f32 %v1776, 0.5
    %v1799 = vtanh.pop %v1796
    %v1800 = vtanh.pop %v1797
    %v1801 = vtanh.pop %v1798
    %v1802 = vmul.f32 %v1799, 0.5
    %v1803 = vmul.f32 %v1800, 0.5
    %v1804 = vmul.f32 %v1801, 0.5
    %v1805 = vadd.f32 %v1802, 0.5
    %v1806 = vadd.f32 %v1803, 0.5
    %v1807 = vadd.f32 %v1804, 0.5
    %v1808 = vtanh.pop %v1777
    %v1809 = vmul.f32 %v1806, %v1447
    %v1810 = vmul.f32 %v1805, %v1808
    %v1811 = vadd.f32 %v1809, %v1810
    %v1812 = vtanh.pop %v1811
    %v1813 = vmul.f32 %v1807, %v1812
    %v1814 = vmul.f32 %v1795, %v1077
    %v1815 = vsel %vm1080, %v1814, 0.0
    %1816 = vadd.xlane.f32.xlu0 %v1815
    %v1817 = vpop.xlane.xlu0 %1816
    %v1818 = vadd.f32 %v1817, %v1088
    %vm1819 = vcmp.eq.s32.totalorder %v680, 2
    %1821 = vset.pattern.permute.xlu0 0
    %1822 = vperm.xlu0 %1821, %v1818
    %v1823 = vpop.permute.xlu0 %1822
    %v1825 = vsel %vm1819, %v1823, %v1461
    %1826 = vmatprep.subr.mxu0 %v44
    %1827 = vmatpush1.msra.mxu0 %v43
    %1828 = vmatprep.subr.mxu0 %v52
    %1829 = vmatpush1.msra.mxu0 %v51
    %1830 = vmatprep.subr.mxu0 %v60
    %1831 = vmatpush1.msra.mxu0 %v59
    %1832 = vmatprep.subr.mxu0 %v68
    %1833 = vmatpush1.msra.mxu0 %v67
    %1834 = vmatprep.subr.mxu0 %v76
    %1835 = vmatpush1.msra.mxu0 %v75
    %1836 = vmatprep.subr.mxu0 %v84
    %1837 = vmatpush1.msra.mxu0 %v83
    %1838 = vmatprep.subr.mxu0 %v92
    %1839 = vmatpush1.msra.mxu0 %v91
    %1840 = vmatprep.subr.mxu0 %v100
    %1841 = vmatpush1.msra.mxu0 %v99
    %1842 = vmatprep.subr.mxu0 %v108
    %1843 = vmatpush1.msra.mxu0 %v107
    %1844 = vmatprep.subr.mxu0 %v116
    %1845 = vmatpush1.msra.mxu0 %v115
    %1846 = vmatprep.subr.mxu0 %v124
    %1847 = vmatpush1.msra.mxu0 %v123
    %1848 = vmatprep.subr.mxu0 %v132
    %1849 = vmatpush1.msra.mxu0 %v131
    %1850 = vmatprep.subr.mxu0 %v140
    %1851 = vmatpush1.msra.mxu0 %v139
    %1852 = vmatprep.subr.mxu0 %v148
    %1853 = vmatpush1.msra.mxu0 %v147
    %1854 = vmatprep.subr.mxu0 %v156
    %1855 = vmatpush1.msra.mxu0 %v155
    %1856 = vmatprep.subr.mxu0 %v164
    %1857 = vmatpush1.msra.mxu0 %v163
    %1858 = vmatprep.subr.mxu0 %v172
    %1859 = vmatpush1.msra.mxu0 %v171
    %1860 = vmatprep.subr.mxu0 %v180
    %1861 = vmatpush1.msra.mxu0 %v179
    %1862 = vmatprep.subr.mxu0 %v188
    %1863 = vmatpush1.msra.mxu0 %v187
    %1864 = vmatprep.subr.mxu0 %v196
    %1865 = vmatpush1.msra.mxu0 %v195
    %1866 = vmatprep.subr.mxu0 %v204
    %1867 = vmatpush1.msra.mxu0 %v203
    %1868 = vmatprep.subr.mxu0 %v212
    %1869 = vmatpush1.msra.mxu0 %v211
    %1870 = vmatprep.subr.mxu0 %v220
    %1871 = vmatpush1.msra.mxu0 %v219
    %1872 = vmatprep.subr.mxu0 %v228
    %1873 = vmatpush1.msra.mxu0 %v227
    %1874 = vmatprep.subr.mxu0 %v236
    %1875 = vmatpush1.msra.mxu0 %v235
    %1876 = vmatprep.subr.mxu0 %v244
    %1877 = vmatpush1.msra.mxu0 %v243
    %1878 = vmatprep.subr.mxu0 %v252
    %1879 = vmatpush1.msra.mxu0 %v251
    %1880 = vmatprep.subr.mxu0 %v260
    %1881 = vmatpush1.msra.mxu0 %v259
    %1882 = vmatprep.subr.mxu0 %v268
    %1883 = vmatpush1.msra.mxu0 %v267
    %1884 = vmatprep.subr.mxu0 %v276
    %1885 = vmatpush1.msra.mxu0 %v275
    %1886 = vmatprep.subr.mxu0 %v284
    %1887 = vmatpush1.msra.mxu0 %v283
    %1888 = vmatprep.subr.mxu0 %v292
    %1889 = vmatpush1.msra.mxu0 %v291
    %1890 = vmatprep.mubr.f32.mxu0 %v1795
    %1891 = vmatmul.mubr.f32.gmra.mrb[0].mxu0 %v1813
    %v1892 = vpop.f32.mrb[0].mxu0
    %v1893 = vadd.f32 0.0, %v1892
    %v1894 = vpop.f32.mrb[0].mxu0
    %v1895 = vadd.f32 0.0, %v1894
    %1896 = vdwg.mxu0
    %1897 = vmatprep.subr.mxu0 %v46
    %1898 = vmatpush1.msra.mxu0 %v45
    %1899 = vmatprep.subr.mxu0 %v54
    %1900 = vmatpush1.msra.mxu0 %v53
    %1901 = vmatprep.subr.mxu0 %v62
    %1902 = vmatpush1.msra.mxu0 %v61
    %1903 = vmatprep.subr.mxu0 %v70
    %1904 = vmatpush1.msra.mxu0 %v69
    %1905 = vmatprep.subr.mxu0 %v78
    %1906 = vmatpush1.msra.mxu0 %v77
    %1907 = vmatprep.subr.mxu0 %v86
    %1908 = vmatpush1.msra.mxu0 %v85
    %1909 = vmatprep.subr.mxu0 %v94
    %1910 = vmatpush1.msra.mxu0 %v93
    %1911 = vmatprep.subr.mxu0 %v102
    %1912 = vmatpush1.msra.mxu0 %v101
    %1913 = vmatprep.subr.mxu0 %v110
    %1914 = vmatpush1.msra.mxu0 %v109
    %1915 = vmatprep.subr.mxu0 %v118
    %1916 = vmatpush1.msra.mxu0 %v117
    %1917 = vmatprep.subr.mxu0 %v126
    %1918 = vmatpush1.msra.mxu0 %v125
    %1919 = vmatprep.subr.mxu0 %v134
    %1920 = vmatpush1.msra.mxu0 %v133
    %1921 = vmatprep.subr.mxu0 %v142
    %1922 = vmatpush1.msra.mxu0 %v141
    %1923 = vmatprep.subr.mxu0 %v150
    %1924 = vmatpush1.msra.mxu0 %v149
    %1925 = vmatprep.subr.mxu0 %v158
    %1926 = vmatpush1.msra.mxu0 %v157
    %1927 = vmatprep.subr.mxu0 %v166
    %1928 = vmatpush1.msra.mxu0 %v165
    %1929 = vmatprep.subr.mxu0 %v174
    %1930 = vmatpush1.msra.mxu0 %v173
    %1931 = vmatprep.subr.mxu0 %v182
    %1932 = vmatpush1.msra.mxu0 %v181
    %1933 = vmatprep.subr.mxu0 %v190
    %1934 = vmatpush1.msra.mxu0 %v189
    %1935 = vmatprep.subr.mxu0 %v198
    %1936 = vmatpush1.msra.mxu0 %v197
    %1937 = vmatprep.subr.mxu0 %v206
    %1938 = vmatpush1.msra.mxu0 %v205
    %1939 = vmatprep.subr.mxu0 %v214
    %1940 = vmatpush1.msra.mxu0 %v213
    %1941 = vmatprep.subr.mxu0 %v222
    %1942 = vmatpush1.msra.mxu0 %v221
    %1943 = vmatprep.subr.mxu0 %v230
    %1944 = vmatpush1.msra.mxu0 %v229
    %1945 = vmatprep.subr.mxu0 %v238
    %1946 = vmatpush1.msra.mxu0 %v237
    %1947 = vmatprep.subr.mxu0 %v246
    %1948 = vmatpush1.msra.mxu0 %v245
    %1949 = vmatprep.subr.mxu0 %v254
    %1950 = vmatpush1.msra.mxu0 %v253
    %1951 = vmatprep.subr.mxu0 %v262
    %1952 = vmatpush1.msra.mxu0 %v261
    %1953 = vmatprep.subr.mxu0 %v270
    %1954 = vmatpush1.msra.mxu0 %v269
    %1955 = vmatprep.subr.mxu0 %v278
    %1956 = vmatpush1.msra.mxu0 %v277
    %1957 = vmatprep.subr.mxu0 %v286
    %1958 = vmatpush1.msra.mxu0 %v285
    %1959 = vmatprep.subr.mxu0 %v294
    %1960 = vmatpush1.msra.mxu0 %v293
    %1961 = vmatprep.mubr.f32.mxu0 %v1795
    %1962 = vmatmul.mubr.f32.gmra.mrb[0].mxu0 %v1813
    %v1963 = vpop.f32.mrb[0].mxu0
    %v1964 = vadd.f32 0.0, %v1963
    %v1965 = vpop.f32.mrb[0].mxu0
    %v1966 = vadd.f32 0.0, %v1965
    %1967 = vdwg.mxu0
    %1968 = vmatprep.subr.mxu0 %v48
    %1969 = vmatpush1.msra.mxu0 %v47
    %1970 = vmatprep.subr.mxu0 %v56
    %1971 = vmatpush1.msra.mxu0 %v55
    %1972 = vmatprep.subr.mxu0 %v64
    %1973 = vmatpush1.msra.mxu0 %v63
    %1974 = vmatprep.subr.mxu0 %v72
    %1975 = vmatpush1.msra.mxu0 %v71
    %1976 = vmatprep.subr.mxu0 %v80
    %1977 = vmatpush1.msra.mxu0 %v79
    %1978 = vmatprep.subr.mxu0 %v88
    %1979 = vmatpush1.msra.mxu0 %v87
    %1980 = vmatprep.subr.mxu0 %v96
    %1981 = vmatpush1.msra.mxu0 %v95
    %1982 = vmatprep.subr.mxu0 %v104
    %1983 = vmatpush1.msra.mxu0 %v103
    %1984 = vmatprep.subr.mxu0 %v112
    %1985 = vmatpush1.msra.mxu0 %v111
    %1986 = vmatprep.subr.mxu0 %v120
    %1987 = vmatpush1.msra.mxu0 %v119
    %1988 = vmatprep.subr.mxu0 %v128
    %1989 = vmatpush1.msra.mxu0 %v127
    %1990 = vmatprep.subr.mxu0 %v136
    %1991 = vmatpush1.msra.mxu0 %v135
    %1992 = vmatprep.subr.mxu0 %v144
    %1993 = vmatpush1.msra.mxu0 %v143
    %1994 = vmatprep.subr.mxu0 %v152
    %1995 = vmatpush1.msra.mxu0 %v151
    %1996 = vmatprep.subr.mxu0 %v160
    %1997 = vmatpush1.msra.mxu0 %v159
    %1998 = vmatprep.subr.mxu0 %v168
    %1999 = vmatpush1.msra.mxu0 %v167
    %2000 = vmatprep.subr.mxu0 %v176
    %2001 = vmatpush1.msra.mxu0 %v175
    %2002 = vmatprep.subr.mxu0 %v184
    %2003 = vmatpush1.msra.mxu0 %v183
    %2004 = vmatprep.subr.mxu0 %v192
    %2005 = vmatpush1.msra.mxu0 %v191
    %2006 = vmatprep.subr.mxu0 %v200
    %2007 = vmatpush1.msra.mxu0 %v199
    %2008 = vmatprep.subr.mxu0 %v208
    %2009 = vmatpush1.msra.mxu0 %v207
    %2010 = vmatprep.subr.mxu0 %v216
    %2011 = vmatpush1.msra.mxu0 %v215
    %2012 = vmatprep.subr.mxu0 %v224
    %2013 = vmatpush1.msra.mxu0 %v223
    %2014 = vmatprep.subr.mxu0 %v232
    %2015 = vmatpush1.msra.mxu0 %v231
    %2016 = vmatprep.subr.mxu0 %v240
    %2017 = vmatpush1.msra.mxu0 %v239
    %2018 = vmatprep.subr.mxu0 %v248
    %2019 = vmatpush1.msra.mxu0 %v247
    %2020 = vmatprep.subr.mxu0 %v256
    %2021 = vmatpush1.msra.mxu0 %v255
    %2022 = vmatprep.subr.mxu0 %v264
    %2023 = vmatpush1.msra.mxu0 %v263
    %2024 = vmatprep.subr.mxu0 %v272
    %2025 = vmatpush1.msra.mxu0 %v271
    %2026 = vmatprep.subr.mxu0 %v280
    %2027 = vmatpush1.msra.mxu0 %v279
    %2028 = vmatprep.subr.mxu0 %v288
    %2029 = vmatpush1.msra.mxu0 %v287
    %2030 = vmatprep.subr.mxu0 %v296
    %2031 = vmatpush1.msra.mxu0 %v295
    %2032 = vmatprep.mubr.f32.mxu0 %v1795
    %2033 = vmatmul.mubr.f32.gmra.mrb[0].mxu0 %v1813
    %v2034 = vpop.f32.mrb[0].mxu0
    %v2035 = vadd.f32 0.0, %v2034
    %v2036 = vpop.f32.mrb[0].mxu0
    %v2037 = vadd.f32 0.0, %v2036
    %2038 = vdwg.mxu0
    %2039 = vmatprep.subr.mxu0 %v50
    %2040 = vmatpush1.msra.mxu0 %v49
    %2041 = vmatprep.subr.mxu0 %v58
    %2042 = vmatpush1.msra.mxu0 %v57
    %2043 = vmatprep.subr.mxu0 %v66
    %2044 = vmatpush1.msra.mxu0 %v65
    %2045 = vmatprep.subr.mxu0 %v74
    %2046 = vmatpush1.msra.mxu0 %v73
    %2047 = vmatprep.subr.mxu0 %v82
    %2048 = vmatpush1.msra.mxu0 %v81
    %2049 = vmatprep.subr.mxu0 %v90
    %2050 = vmatpush1.msra.mxu0 %v89
    %2051 = vmatprep.subr.mxu0 %v98
    %2052 = vmatpush1.msra.mxu0 %v97
    %2053 = vmatprep.subr.mxu0 %v106
    %2054 = vmatpush1.msra.mxu0 %v105
    %2055 = vmatprep.subr.mxu0 %v114
    %2056 = vmatpush1.msra.mxu0 %v113
    %2057 = vmatprep.subr.mxu0 %v122
    %2058 = vmatpush1.msra.mxu0 %v121
    %2059 = vmatprep.subr.mxu0 %v130
    %2060 = vmatpush1.msra.mxu0 %v129
    %2061 = vmatprep.subr.mxu0 %v138
    %2062 = vmatpush1.msra.mxu0 %v137
    %2063 = vmatprep.subr.mxu0 %v146
    %2064 = vmatpush1.msra.mxu0 %v145
    %2065 = vmatprep.subr.mxu0 %v154
    %2066 = vmatpush1.msra.mxu0 %v153
    %2067 = vmatprep.subr.mxu0 %v162
    %2068 = vmatpush1.msra.mxu0 %v161
    %2069 = vmatprep.subr.mxu0 %v170
    %2070 = vmatpush1.msra.mxu0 %v169
    %2071 = vmatprep.subr.mxu0 %v178
    %2072 = vmatpush1.msra.mxu0 %v177
    %2073 = vmatprep.subr.mxu0 %v186
    %2074 = vmatpush1.msra.mxu0 %v185
    %2075 = vmatprep.subr.mxu0 %v194
    %2076 = vmatpush1.msra.mxu0 %v193
    %2077 = vmatprep.subr.mxu0 %v202
    %2078 = vmatpush1.msra.mxu0 %v201
    %2079 = vmatprep.subr.mxu0 %v210
    %2080 = vmatpush1.msra.mxu0 %v209
    %2081 = vmatprep.subr.mxu0 %v218
    %2082 = vmatpush1.msra.mxu0 %v217
    %2083 = vmatprep.subr.mxu0 %v226
    %2084 = vmatpush1.msra.mxu0 %v225
    %2085 = vmatprep.subr.mxu0 %v234
    %2086 = vmatpush1.msra.mxu0 %v233
    %2087 = vmatprep.subr.mxu0 %v242
    %2088 = vmatpush1.msra.mxu0 %v241
    %2089 = vmatprep.subr.mxu0 %v250
    %2090 = vmatpush1.msra.mxu0 %v249
    %2091 = vmatprep.subr.mxu0 %v258
    %2092 = vmatpush1.msra.mxu0 %v257
    %2093 = vmatprep.subr.mxu0 %v266
    %2094 = vmatpush1.msra.mxu0 %v265
    %2095 = vmatprep.subr.mxu0 %v274
    %2096 = vmatpush1.msra.mxu0 %v273
    %2097 = vmatprep.subr.mxu0 %v282
    %2098 = vmatpush1.msra.mxu0 %v281
    %2099 = vmatprep.subr.mxu0 %v290
    %2100 = vmatpush1.msra.mxu0 %v289
    %2101 = vmatprep.subr.mxu0 %v298
    %2102 = vmatpush1.msra.mxu0 %v297
    %2103 = vmatprep.mubr.f32.mxu0 %v1795
    %2104 = vmatmul.mubr.f32.gmra.mrb[0].mxu0 %v1813
    %v2105 = vpop.f32.mrb[0].mxu0
    %v2106 = vadd.f32 0.0, %v2105
    %v2107 = vpop.f32.mrb[0].mxu0
    %v2108 = vadd.f32 0.0, %v2107
    %2109 = vdwg.mxu0
    %v2110 = vadd.f32 %v1893, %v988
    %v2111 = vadd.f32 %v1895, %v992
    %v2112 = vadd.f32 %v1964, %v996
    %v2113 = vadd.f32 %v1966, %v1000
    %s2114 = scalar_lea.vmem [#allocation2], 32
    %v2115 = vld [vmem:[%s2114] sm:$0xff]
    %v2117 = vcombine.high %v2115, %v2115
    %v2119 = vunpack.c.l.s4 1983009808
    %v2120 = vunpack.c.0.s8 %v2119
    %v2121 = vlaneseq
    %v2122 = vshrl.u32 %v2121, 7
    %v2123 = vsub.s32 %v2120, %v2122
    %v2124 = vrot.slane %v2115, %v2123
    %v2126 = vunpack.c.l.s4 1983009808
    %v2127 = vunpack.c.0.s8 %v2126
    %v2128 = vlaneseq
    %v2129 = vshrl.u32 %v2128, 7
    %v2130 = vsub.s32 %v2127, %v2129
    %v2131 = vrot.slane %v2117, %v2130
    %v2132 = vcombine.high %v2124, %v2124
    %v2133 = vcombine.high %v2131, %v2131
    %v2138 = vadd.f32 %v2035, %v2124
    %v2139 = vadd.f32 %v2037, %v2132
    %v2140 = vadd.f32 %v2106, %v2131
    %v2141 = vadd.f32 %v2108, %v2133
    %v2142 = vmul.f32 %v2110, 0.5
    %v2143 = vmul.f32 %v2111, 0.5
    %v2144 = vmul.f32 %v2112, 0.5
    %v2145 = vtanh.pop %v2142
    %v2146 = vtanh.pop %v2143
    %v2147 = vtanh.pop %v2144
    %v2148 = vmul.f32 %v2145, 0.5
    %v2149 = vmul.f32 %v2146, 0.5
    %v2150 = vmul.f32 %v2147, 0.5
    %v2151 = vadd.f32 %v2148, 0.5
    %v2152 = vadd.f32 %v2149, 0.5
    %v2153 = vadd.f32 %v2150, 0.5
    %v2154 = vtanh.pop %v2113
    %v2155 = vmul.f32 %v2152, %v1793
    %v2156 = vmul.f32 %v2151, %v2154
    %v2157 = vadd.f32 %v2155, %v2156
    %v2158 = vtanh.pop %v2157
    %v2159 = vmul.f32 %v2153, %v2158
    %v2160 = vmul.f32 %v2138, 0.5
    %v2161 = vmul.f32 %v2139, 0.5
    %v2162 = vmul.f32 %v2140, 0.5
    %v2163 = vtanh.pop %v2160
    %v2164 = vtanh.pop %v2161
    %v2165 = vtanh.pop %v2162
    %v2166 = vmul.f32 %v2163, 0.5
    %v2167 = vmul.f32 %v2164, 0.5
    %v2168 = vmul.f32 %v2165, 0.5
    %v2169 = vadd.f32 %v2166, 0.5
    %v2170 = vadd.f32 %v2167, 0.5
    %v2171 = vadd.f32 %v2168, 0.5
    %v2172 = vtanh.pop %v2141
    %v2173 = vmul.f32 %v2170, %v1811
    %v2174 = vmul.f32 %v2169, %v2172
    %v2175 = vadd.f32 %v2173, %v2174
    %v2176 = vtanh.pop %v2175
    %v2177 = vmul.f32 %v2171, %v2176
    %v2178 = vmul.f32 %v2159, %v1077
    %v2179 = vsel %vm1080, %v2178, 0.0
    %2180 = vadd.xlane.f32.xlu0 %v2179
    %v2181 = vpop.xlane.xlu0 %2180
    %v2182 = vadd.f32 %v2181, %v1088
    %vm2183 = vcmp.eq.s32.totalorder %v680, 3
    %2185 = vset.pattern.permute.xlu0 0
    %2186 = vperm.xlu0 %2185, %v2182
    %v2187 = vpop.permute.xlu0 %2186
    %v2189 = vsel %vm2183, %v2187, %v1825
    %2190 = vmatprep.subr.mxu0 %v44
    %2191 = vmatpush1.msra.mxu0 %v43
    %2192 = vmatprep.subr.mxu0 %v52
    %2193 = vmatpush1.msra.mxu0 %v51
    %2194 = vmatprep.subr.mxu0 %v60
    %2195 = vmatpush1.msra.mxu0 %v59
    %2196 = vmatprep.subr.mxu0 %v68
    %2197 = vmatpush1.msra.mxu0 %v67
    %2198 = vmatprep.subr.mxu0 %v76
    %2199 = vmatpush1.msra.mxu0 %v75
    %2200 = vmatprep.subr.mxu0 %v84
    %2201 = vmatpush1.msra.mxu0 %v83
    %2202 = vmatprep.subr.mxu0 %v92
    %2203 = vmatpush1.msra.mxu0 %v91
    %2204 = vmatprep.subr.mxu0 %v100
    %2205 = vmatpush1.msra.mxu0 %v99
    %2206 = vmatprep.subr.mxu0 %v108
    %2207 = vmatpush1.msra.mxu0 %v107
    %2208 = vmatprep.subr.mxu0 %v116
    %2209 = vmatpush1.msra.mxu0 %v115
    %2210 = vmatprep.subr.mxu0 %v124
    %2211 = vmatpush1.msra.mxu0 %v123
    %2212 = vmatprep.subr.mxu0 %v132
    %2213 = vmatpush1.msra.mxu0 %v131
    %2214 = vmatprep.subr.mxu0 %v140
    %2215 = vmatpush1.msra.mxu0 %v139
    %2216 = vmatprep.subr.mxu0 %v148
    %2217 = vmatpush1.msra.mxu0 %v147
    %2218 = vmatprep.subr.mxu0 %v156
    %2219 = vmatpush1.msra.mxu0 %v155
    %2220 = vmatprep.subr.mxu0 %v164
    %2221 = vmatpush1.msra.mxu0 %v163
    %2222 = vmatprep.subr.mxu0 %v172
    %2223 = vmatpush1.msra.mxu0 %v171
    %2224 = vmatprep.subr.mxu0 %v180
    %2225 = vmatpush1.msra.mxu0 %v179
    %2226 = vmatprep.subr.mxu0 %v188
    %2227 = vmatpush1.msra.mxu0 %v187
    %2228 = vmatprep.subr.mxu0 %v196
    %2229 = vmatpush1.msra.mxu0 %v195
    %2230 = vmatprep.subr.mxu0 %v204
    %2231 = vmatpush1.msra.mxu0 %v203
    %2232 = vmatprep.subr.mxu0 %v212
    %2233 = vmatpush1.msra.mxu0 %v211
    %2234 = vmatprep.subr.mxu0 %v220
    %2235 = vmatpush1.msra.mxu0 %v219
    %2236 = vmatprep.subr.mxu0 %v228
    %2237 = vmatpush1.msra.mxu0 %v227
    %2238 = vmatprep.subr.mxu0 %v236
    %2239 = vmatpush1.msra.mxu0 %v235
    %2240 = vmatprep.subr.mxu0 %v244
    %2241 = vmatpush1.msra.mxu0 %v243
    %2242 = vmatprep.subr.mxu0 %v252
    %2243 = vmatpush1.msra.mxu0 %v251
    %2244 = vmatprep.subr.mxu0 %v260
    %2245 = vmatpush1.msra.mxu0 %v259
    %2246 = vmatprep.subr.mxu0 %v268
    %2247 = vmatpush1.msra.mxu0 %v267
    %2248 = vmatprep.subr.mxu0 %v276
    %2249 = vmatpush1.msra.mxu0 %v275
    %2250 = vmatprep.subr.mxu0 %v284
    %2251 = vmatpush1.msra.mxu0 %v283
    %2252 = vmatprep.subr.mxu0 %v292
    %2253 = vmatpush1.msra.mxu0 %v291
    %2254 = vmatprep.mubr.f32.mxu0 %v2159
    %2255 = vmatmul.mubr.f32.gmra.mrb[0].mxu0 %v2177
    %v2256 = vpop.f32.mrb[0].mxu0
    %v2257 = vadd.f32 0.0, %v2256
    %v2258 = vpop.f32.mrb[0].mxu0
    %v2259 = vadd.f32 0.0, %v2258
    %2260 = vdwg.mxu0
    %2261 = vmatprep.subr.mxu0 %v46
    %2262 = vmatpush1.msra.mxu0 %v45
    %2263 = vmatprep.subr.mxu0 %v54
    %2264 = vmatpush1.msra.mxu0 %v53
    %2265 = vmatprep.subr.mxu0 %v62
    %2266 = vmatpush1.msra.mxu0 %v61
    %2267 = vmatprep.subr.mxu0 %v70
    %2268 = vmatpush1.msra.mxu0 %v69
    %2269 = vmatprep.subr.mxu0 %v78
    %2270 = vmatpush1.msra.mxu0 %v77
    %2271 = vmatprep.subr.mxu0 %v86
    %2272 = vmatpush1.msra.mxu0 %v85
    %2273 = vmatprep.subr.mxu0 %v94
    %2274 = vmatpush1.msra.mxu0 %v93
    %2275 = vmatprep.subr.mxu0 %v102
    %2276 = vmatpush1.msra.mxu0 %v101
    %2277 = vmatprep.subr.mxu0 %v110
    %2278 = vmatpush1.msra.mxu0 %v109
    %2279 = vmatprep.subr.mxu0 %v118
    %2280 = vmatpush1.msra.mxu0 %v117
    %2281 = vmatprep.subr.mxu0 %v126
    %2282 = vmatpush1.msra.mxu0 %v125
    %2283 = vmatprep.subr.mxu0 %v134
    %2284 = vmatpush1.msra.mxu0 %v133
    %2285 = vmatprep.subr.mxu0 %v142
    %2286 = vmatpush1.msra.mxu0 %v141
    %2287 = vmatprep.subr.mxu0 %v150
    %2288 = vmatpush1.msra.mxu0 %v149
    %2289 = vmatprep.subr.mxu0 %v158
    %2290 = vmatpush1.msra.mxu0 %v157
    %2291 = vmatprep.subr.mxu0 %v166
    %2292 = vmatpush1.msra.mxu0 %v165
    %2293 = vmatprep.subr.mxu0 %v174
    %2294 = vmatpush1.msra.mxu0 %v173
    %2295 = vmatprep.subr.mxu0 %v182
    %2296 = vmatpush1.msra.mxu0 %v181
    %2297 = vmatprep.subr.mxu0 %v190
    %2298 = vmatpush1.msra.mxu0 %v189
    %2299 = vmatprep.subr.mxu0 %v198
    %2300 = vmatpush1.msra.mxu0 %v197
    %2301 = vmatprep.subr.mxu0 %v206
    %2302 = vmatpush1.msra.mxu0 %v205
    %2303 = vmatprep.subr.mxu0 %v214
    %2304 = vmatpush1.msra.mxu0 %v213
    %2305 = vmatprep.subr.mxu0 %v222
    %2306 = vmatpush1.msra.mxu0 %v221
    %2307 = vmatprep.subr.mxu0 %v230
    %2308 = vmatpush1.msra.mxu0 %v229
    %2309 = vmatprep.subr.mxu0 %v238
    %2310 = vmatpush1.msra.mxu0 %v237
    %2311 = vmatprep.subr.mxu0 %v246
    %2312 = vmatpush1.msra.mxu0 %v245
    %2313 = vmatprep.subr.mxu0 %v254
    %2314 = vmatpush1.msra.mxu0 %v253
    %2315 = vmatprep.subr.mxu0 %v262
    %2316 = vmatpush1.msra.mxu0 %v261
    %2317 = vmatprep.subr.mxu0 %v270
    %2318 = vmatpush1.msra.mxu0 %v269
    %2319 = vmatprep.subr.mxu0 %v278
    %2320 = vmatpush1.msra.mxu0 %v277
    %2321 = vmatprep.subr.mxu0 %v286
    %2322 = vmatpush1.msra.mxu0 %v285
    %2323 = vmatprep.subr.mxu0 %v294
    %2324 = vmatpush1.msra.mxu0 %v293
    %2325 = vmatprep.mubr.f32.mxu0 %v2159
    %2326 = vmatmul.mubr.f32.gmra.mrb[0].mxu0 %v2177
    %v2327 = vpop.f32.mrb[0].mxu0
    %v2328 = vadd.f32 0.0, %v2327
    %v2329 = vpop.f32.mrb[0].mxu0
    %v2330 = vadd.f32 0.0, %v2329
    %2331 = vdwg.mxu0
    %2332 = vmatprep.subr.mxu0 %v48
    %2333 = vmatpush1.msra.mxu0 %v47
    %2334 = vmatprep.subr.mxu0 %v56
    %2335 = vmatpush1.msra.mxu0 %v55
    %2336 = vmatprep.subr.mxu0 %v64
    %2337 = vmatpush1.msra.mxu0 %v63
    %2338 = vmatprep.subr.mxu0 %v72
    %2339 = vmatpush1.msra.mxu0 %v71
    %2340 = vmatprep.subr.mxu0 %v80
    %2341 = vmatpush1.msra.mxu0 %v79
    %2342 = vmatprep.subr.mxu0 %v88
    %2343 = vmatpush1.msra.mxu0 %v87
    %2344 = vmatprep.subr.mxu0 %v96
    %2345 = vmatpush1.msra.mxu0 %v95
    %2346 = vmatprep.subr.mxu0 %v104
    %2347 = vmatpush1.msra.mxu0 %v103
    %2348 = vmatprep.subr.mxu0 %v112
    %2349 = vmatpush1.msra.mxu0 %v111
    %2350 = vmatprep.subr.mxu0 %v120
    %2351 = vmatpush1.msra.mxu0 %v119
    %2352 = vmatprep.subr.mxu0 %v128
    %2353 = vmatpush1.msra.mxu0 %v127
    %2354 = vmatprep.subr.mxu0 %v136
    %2355 = vmatpush1.msra.mxu0 %v135
    %2356 = vmatprep.subr.mxu0 %v144
    %2357 = vmatpush1.msra.mxu0 %v143
    %2358 = vmatprep.subr.mxu0 %v152
    %2359 = vmatpush1.msra.mxu0 %v151
    %2360 = vmatprep.subr.mxu0 %v160
    %2361 = vmatpush1.msra.mxu0 %v159
    %2362 = vmatprep.subr.mxu0 %v168
    %2363 = vmatpush1.msra.mxu0 %v167
    %2364 = vmatprep.subr.mxu0 %v176
    %2365 = vmatpush1.msra.mxu0 %v175
    %2366 = vmatprep.subr.mxu0 %v184
    %2367 = vmatpush1.msra.mxu0 %v183
    %2368 = vmatprep.subr.mxu0 %v192
    %2369 = vmatpush1.msra.mxu0 %v191
    %2370 = vmatprep.subr.mxu0 %v200
    %2371 = vmatpush1.msra.mxu0 %v199
    %2372 = vmatprep.subr.mxu0 %v208
    %2373 = vmatpush1.msra.mxu0 %v207
    %2374 = vmatprep.subr.mxu0 %v216
    %2375 = vmatpush1.msra.mxu0 %v215
    %2376 = vmatprep.subr.mxu0 %v224
    %2377 = vmatpush1.msra.mxu0 %v223
    %2378 = vmatprep.subr.mxu0 %v232
    %2379 = vmatpush1.msra.mxu0 %v231
    %2380 = vmatprep.subr.mxu0 %v240
    %2381 = vmatpush1.msra.mxu0 %v239
    %2382 = vmatprep.subr.mxu0 %v248
    %2383 = vmatpush1.msra.mxu0 %v247
    %2384 = vmatprep.subr.mxu0 %v256
    %2385 = vmatpush1.msra.mxu0 %v255
    %2386 = vmatprep.subr.mxu0 %v264
    %2387 = vmatpush1.msra.mxu0 %v263
    %2388 = vmatprep.subr.mxu0 %v272
    %2389 = vmatpush1.msra.mxu0 %v271
    %2390 = vmatprep.subr.mxu0 %v280
    %2391 = vmatpush1.msra.mxu0 %v279
    %2392 = vmatprep.subr.mxu0 %v288
    %2393 = vmatpush1.msra.mxu0 %v287
    %2394 = vmatprep.subr.mxu0 %v296
    %2395 = vmatpush1.msra.mxu0 %v295
    %2396 = vmatprep.mubr.f32.mxu0 %v2159
    %2397 = vmatmul.mubr.f32.gmra.mrb[0].mxu0 %v2177
    %v2398 = vpop.f32.mrb[0].mxu0
    %v2399 = vadd.f32 0.0, %v2398
    %v2400 = vpop.f32.mrb[0].mxu0
    %v2401 = vadd.f32 0.0, %v2400
    %2402 = vdwg.mxu0
    %2403 = vmatprep.subr.mxu0 %v50
    %2404 = vmatpush1.msra.mxu0 %v49
    %2405 = vmatprep.subr.mxu0 %v58
    %2406 = vmatpush1.msra.mxu0 %v57
    %2407 = vmatprep.subr.mxu0 %v66
    %2408 = vmatpush1.msra.mxu0 %v65
    %2409 = vmatprep.subr.mxu0 %v74
    %2410 = vmatpush1.msra.mxu0 %v73
    %2411 = vmatprep.subr.mxu0 %v82
    %2412 = vmatpush1.msra.mxu0 %v81
    %2413 = vmatprep.subr.mxu0 %v90
    %2414 = vmatpush1.msra.mxu0 %v89
    %2415 = vmatprep.subr.mxu0 %v98
    %2416 = vmatpush1.msra.mxu0 %v97
    %2417 = vmatprep.subr.mxu0 %v106
    %2418 = vmatpush1.msra.mxu0 %v105
    %2419 = vmatprep.subr.mxu0 %v114
    %2420 = vmatpush1.msra.mxu0 %v113
    %2421 = vmatprep.subr.mxu0 %v122
    %2422 = vmatpush1.msra.mxu0 %v121
    %2423 = vmatprep.subr.mxu0 %v130
    %2424 = vmatpush1.msra.mxu0 %v129
    %2425 = vmatprep.subr.mxu0 %v138
    %2426 = vmatpush1.msra.mxu0 %v137
    %2427 = vmatprep.subr.mxu0 %v146
    %2428 = vmatpush1.msra.mxu0 %v145
    %2429 = vmatprep.subr.mxu0 %v154
    %2430 = vmatpush1.msra.mxu0 %v153
    %2431 = vmatprep.subr.mxu0 %v162
    %2432 = vmatpush1.msra.mxu0 %v161
    %2433 = vmatprep.subr.mxu0 %v170
    %2434 = vmatpush1.msra.mxu0 %v169
    %2435 = vmatprep.subr.mxu0 %v178
    %2436 = vmatpush1.msra.mxu0 %v177
    %2437 = vmatprep.subr.mxu0 %v186
    %2438 = vmatpush1.msra.mxu0 %v185
    %2439 = vmatprep.subr.mxu0 %v194
    %2440 = vmatpush1.msra.mxu0 %v193
    %2441 = vmatprep.subr.mxu0 %v202
    %2442 = vmatpush1.msra.mxu0 %v201
    %2443 = vmatprep.subr.mxu0 %v210
    %2444 = vmatpush1.msra.mxu0 %v209
    %2445 = vmatprep.subr.mxu0 %v218
    %2446 = vmatpush1.msra.mxu0 %v217
    %2447 = vmatprep.subr.mxu0 %v226
    %2448 = vmatpush1.msra.mxu0 %v225
    %2449 = vmatprep.subr.mxu0 %v234
    %2450 = vmatpush1.msra.mxu0 %v233
    %2451 = vmatprep.subr.mxu0 %v242
    %2452 = vmatpush1.msra.mxu0 %v241
    %2453 = vmatprep.subr.mxu0 %v250
    %2454 = vmatpush1.msra.mxu0 %v249
    %2455 = vmatprep.subr.mxu0 %v258
    %2456 = vmatpush1.msra.mxu0 %v257
    %2457 = vmatprep.subr.mxu0 %v266
    %2458 = vmatpush1.msra.mxu0 %v265
    %2459 = vmatprep.subr.mxu0 %v274
    %2460 = vmatpush1.msra.mxu0 %v273
    %2461 = vmatprep.subr.mxu0 %v282
    %2462 = vmatpush1.msra.mxu0 %v281
    %2463 = vmatprep.subr.mxu0 %v290
    %2464 = vmatpush1.msra.mxu0 %v289
    %2465 = vmatprep.subr.mxu0 %v298
    %2466 = vmatpush1.msra.mxu0 %v297
    %2467 = vmatprep.mubr.f32.mxu0 %v2159
    %2468 = vmatmul.mubr.f32.gmra.mrb[0].mxu0 %v2177
    %v2469 = vpop.f32.mrb[0].mxu0
    %v2470 = vadd.f32 0.0, %v2469
    %v2471 = vpop.f32.mrb[0].mxu0
    %v2472 = vadd.f32 0.0, %v2471
    %2473 = vdwg.mxu0
    %v2474 = vadd.f32 %v2257, %v988
    %v2475 = vadd.f32 %v2259, %v992
    %v2476 = vadd.f32 %v2328, %v996
    %v2477 = vadd.f32 %v2330, %v1000
    %s2478 = scalar_lea.vmem [#allocation2], 40
    %v2479 = vld [vmem:[%s2478] sm:$0xff]
    %v2481 = vcombine.high %v2479, %v2479
    %v2483 = vunpack.c.l.s4 1983009808
    %v2484 = vunpack.c.0.s8 %v2483
    %v2485 = vlaneseq
    %v2486 = vshrl.u32 %v2485, 7
    %v2487 = vsub.s32 %v2484, %v2486
    %v2488 = vrot.slane %v2479, %v2487
    %v2490 = vunpack.c.l.s4 1983009808
    %v2491 = vunpack.c.0.s8 %v2490
    %v2492 = vlaneseq
    %v2493 = vshrl.u32 %v2492, 7
    %v2494 = vsub.s32 %v2491, %v2493
    %v2495 = vrot.slane %v2481, %v2494
    %v2496 = vcombine.high %v2488, %v2488
    %v2497 = vcombine.high %v2495, %v2495
    %v2502 = vadd.f32 %v2399, %v2488
    %v2503 = vadd.f32 %v2401, %v2496
    %v2504 = vadd.f32 %v2470, %v2495
    %v2505 = vadd.f32 %v2472, %v2497
    %v2506 = vmul.f32 %v2474, 0.5
    %v2507 = vmul.f32 %v2475, 0.5
    %v2508 = vmul.f32 %v2476, 0.5
    %v2509 = vtanh.pop %v2506
    %v2510 = vtanh.pop %v2507
    %v2511 = vtanh.pop %v2508
    %v2512 = vmul.f32 %v2509, 0.5
    %v2513 = vmul.f32 %v2510, 0.5
    %v2514 = vmul.f32 %v2511, 0.5
    %v2515 = vadd.f32 %v2512, 0.5
    %v2516 = vadd.f32 %v2513, 0.5
    %v2517 = vadd.f32 %v2514, 0.5
    %v2518 = vtanh.pop %v2477
    %v2519 = vmul.f32 %v2516, %v2157
    %v2520 = vmul.f32 %v2515, %v2518
    %v2521 = vadd.f32 %v2519, %v2520
    %v2522 = vtanh.pop %v2521
    %v2523 = vmul.f32 %v2517, %v2522
    %v2524 = vmul.f32 %v2502, 0.5
    %v2525 = vmul.f32 %v2503, 0.5
    %v2526 = vmul.f32 %v2504, 0.5
    %v2527 = vtanh.pop %v2524
    %v2528 = vtanh.pop %v2525
    %v2529 = vtanh.pop %v2526
    %v2530 = vmul.f32 %v2527, 0.5
    %v2531 = vmul.f32 %v2528, 0.5
    %v2532 = vmul.f32 %v2529, 0.5
    %v2533 = vadd.f32 %v2530, 0.5
    %v2534 = vadd.f32 %v2531, 0.5
    %v2535 = vadd.f32 %v2532, 0.5
    %v2536 = vtanh.pop %v2505
    %v2537 = vmul.f32 %v2534, %v2175
    %v2538 = vmul.f32 %v2533, %v2536
    %v2539 = vadd.f32 %v2537, %v2538
    %v2540 = vtanh.pop %v2539
    %v2541 = vmul.f32 %v2535, %v2540
    %v2542 = vmul.f32 %v2523, %v1077
    %v2543 = vsel %vm1080, %v2542, 0.0
    %2544 = vadd.xlane.f32.xlu0 %v2543
    %v2545 = vpop.xlane.xlu0 %2544
    %v2546 = vadd.f32 %v2545, %v1088
    %vm2547 = vcmp.eq.s32.totalorder %v680, 4
    %2549 = vset.pattern.permute.xlu0 0
    %2550 = vperm.xlu0 %2549, %v2546
    %v2551 = vpop.permute.xlu0 %2550
    %v2553 = vsel %vm2547, %v2551, %v2189
    %2554 = vmatprep.subr.mxu0 %v44
    %2555 = vmatpush1.msra.mxu0 %v43
    %2556 = vmatprep.subr.mxu0 %v52
    %2557 = vmatpush1.msra.mxu0 %v51
    %2558 = vmatprep.subr.mxu0 %v60
    %2559 = vmatpush1.msra.mxu0 %v59
    %2560 = vmatprep.subr.mxu0 %v68
    %2561 = vmatpush1.msra.mxu0 %v67
    %2562 = vmatprep.subr.mxu0 %v76
    %2563 = vmatpush1.msra.mxu0 %v75
    %2564 = vmatprep.subr.mxu0 %v84
    %2565 = vmatpush1.msra.mxu0 %v83
    %2566 = vmatprep.subr.mxu0 %v92
    %2567 = vmatpush1.msra.mxu0 %v91
    %2568 = vmatprep.subr.mxu0 %v100
    %2569 = vmatpush1.msra.mxu0 %v99
    %2570 = vmatprep.subr.mxu0 %v108
    %2571 = vmatpush1.msra.mxu0 %v107
    %2572 = vmatprep.subr.mxu0 %v116
    %2573 = vmatpush1.msra.mxu0 %v115
    %2574 = vmatprep.subr.mxu0 %v124
    %2575 = vmatpush1.msra.mxu0 %v123
    %2576 = vmatprep.subr.mxu0 %v132
    %2577 = vmatpush1.msra.mxu0 %v131
    %2578 = vmatprep.subr.mxu0 %v140
    %2579 = vmatpush1.msra.mxu0 %v139
    %2580 = vmatprep.subr.mxu0 %v148
    %2581 = vmatpush1.msra.mxu0 %v147
    %2582 = vmatprep.subr.mxu0 %v156
    %2583 = vmatpush1.msra.mxu0 %v155
    %2584 = vmatprep.subr.mxu0 %v164
    %2585 = vmatpush1.msra.mxu0 %v163
    %2586 = vmatprep.subr.mxu0 %v172
    %2587 = vmatpush1.msra.mxu0 %v171
    %2588 = vmatprep.subr.mxu0 %v180
    %2589 = vmatpush1.msra.mxu0 %v179
    %2590 = vmatprep.subr.mxu0 %v188
    %2591 = vmatpush1.msra.mxu0 %v187
    %2592 = vmatprep.subr.mxu0 %v196
    %2593 = vmatpush1.msra.mxu0 %v195
    %2594 = vmatprep.subr.mxu0 %v204
    %2595 = vmatpush1.msra.mxu0 %v203
    %2596 = vmatprep.subr.mxu0 %v212
    %2597 = vmatpush1.msra.mxu0 %v211
    %2598 = vmatprep.subr.mxu0 %v220
    %2599 = vmatpush1.msra.mxu0 %v219
    %2600 = vmatprep.subr.mxu0 %v228
    %2601 = vmatpush1.msra.mxu0 %v227
    %2602 = vmatprep.subr.mxu0 %v236
    %2603 = vmatpush1.msra.mxu0 %v235
    %2604 = vmatprep.subr.mxu0 %v244
    %2605 = vmatpush1.msra.mxu0 %v243
    %2606 = vmatprep.subr.mxu0 %v252
    %2607 = vmatpush1.msra.mxu0 %v251
    %2608 = vmatprep.subr.mxu0 %v260
    %2609 = vmatpush1.msra.mxu0 %v259
    %2610 = vmatprep.subr.mxu0 %v268
    %2611 = vmatpush1.msra.mxu0 %v267
    %2612 = vmatprep.subr.mxu0 %v276
    %2613 = vmatpush1.msra.mxu0 %v275
    %2614 = vmatprep.subr.mxu0 %v284
    %2615 = vmatpush1.msra.mxu0 %v283
    %2616 = vmatprep.subr.mxu0 %v292
    %2617 = vmatpush1.msra.mxu0 %v291
    %2618 = vmatprep.mubr.f32.mxu0 %v2523
    %2619 = vmatmul.mubr.f32.gmra.mrb[0].mxu0 %v2541
    %v2620 = vpop.f32.mrb[0].mxu0
    %v2621 = vadd.f32 0.0, %v2620
    %v2622 = vpop.f32.mrb[0].mxu0
    %v2623 = vadd.f32 0.0, %v2622
    %2624 = vdwg.mxu0
    %2625 = vmatprep.subr.mxu0 %v46
    %2626 = vmatpush1.msra.mxu0 %v45
    %2627 = vmatprep.subr.mxu0 %v54
    %2628 = vmatpush1.msra.mxu0 %v53
    %2629 = vmatprep.subr.mxu0 %v62
    %2630 = vmatpush1.msra.mxu0 %v61
    %2631 = vmatprep.subr.mxu0 %v70
    %2632 = vmatpush1.msra.mxu0 %v69
    %2633 = vmatprep.subr.mxu0 %v78
    %2634 = vmatpush1.msra.mxu0 %v77
    %2635 = vmatprep.subr.mxu0 %v86
    %2636 = vmatpush1.msra.mxu0 %v85
    %2637 = vmatprep.subr.mxu0 %v94
    %2638 = vmatpush1.msra.mxu0 %v93
    %2639 = vmatprep.subr.mxu0 %v102
    %2640 = vmatpush1.msra.mxu0 %v101
    %2641 = vmatprep.subr.mxu0 %v110
    %2642 = vmatpush1.msra.mxu0 %v109
    %2643 = vmatprep.subr.mxu0 %v118
    %2644 = vmatpush1.msra.mxu0 %v117
    %2645 = vmatprep.subr.mxu0 %v126
    %2646 = vmatpush1.msra.mxu0 %v125
    %2647 = vmatprep.subr.mxu0 %v134
    %2648 = vmatpush1.msra.mxu0 %v133
    %2649 = vmatprep.subr.mxu0 %v142
    %2650 = vmatpush1.msra.mxu0 %v141
    %2651 = vmatprep.subr.mxu0 %v150
    %2652 = vmatpush1.msra.mxu0 %v149
    %2653 = vmatprep.subr.mxu0 %v158
    %2654 = vmatpush1.msra.mxu0 %v157
    %2655 = vmatprep.subr.mxu0 %v166
    %2656 = vmatpush1.msra.mxu0 %v165
    %2657 = vmatprep.subr.mxu0 %v174
    %2658 = vmatpush1.msra.mxu0 %v173
    %2659 = vmatprep.subr.mxu0 %v182
    %2660 = vmatpush1.msra.mxu0 %v181
    %2661 = vmatprep.subr.mxu0 %v190
    %2662 = vmatpush1.msra.mxu0 %v189
    %2663 = vmatprep.subr.mxu0 %v198
    %2664 = vmatpush1.msra.mxu0 %v197
    %2665 = vmatprep.subr.mxu0 %v206
    %2666 = vmatpush1.msra.mxu0 %v205
    %2667 = vmatprep.subr.mxu0 %v214
    %2668 = vmatpush1.msra.mxu0 %v213
    %2669 = vmatprep.subr.mxu0 %v222
    %2670 = vmatpush1.msra.mxu0 %v221
    %2671 = vmatprep.subr.mxu0 %v230
    %2672 = vmatpush1.msra.mxu0 %v229
    %2673 = vmatprep.subr.mxu0 %v238
    %2674 = vmatpush1.msra.mxu0 %v237
    %2675 = vmatprep.subr.mxu0 %v246
    %2676 = vmatpush1.msra.mxu0 %v245
    %2677 = vmatprep.subr.mxu0 %v254
    %2678 = vmatpush1.msra.mxu0 %v253
    %2679 = vmatprep.subr.mxu0 %v262
    %2680 = vmatpush1.msra.mxu0 %v261
    %2681 = vmatprep.subr.mxu0 %v270
    %2682 = vmatpush1.msra.mxu0 %v269
    %2683 = vmatprep.subr.mxu0 %v278
    %2684 = vmatpush1.msra.mxu0 %v277
    %2685 = vmatprep.subr.mxu0 %v286
    %2686 = vmatpush1.msra.mxu0 %v285
    %2687 = vmatprep.subr.mxu0 %v294
    %2688 = vmatpush1.msra.mxu0 %v293
    %2689 = vmatprep.mubr.f32.mxu0 %v2523
    %2690 = vmatmul.mubr.f32.gmra.mrb[0].mxu0 %v2541
    %v2691 = vpop.f32.mrb[0].mxu0
    %v2692 = vadd.f32 0.0, %v2691
    %v2693 = vpop.f32.mrb[0].mxu0
    %v2694 = vadd.f32 0.0, %v2693
    %2695 = vdwg.mxu0
    %2696 = vmatprep.subr.mxu0 %v48
    %2697 = vmatpush1.msra.mxu0 %v47
    %2698 = vmatprep.subr.mxu0 %v56
    %2699 = vmatpush1.msra.mxu0 %v55
    %2700 = vmatprep.subr.mxu0 %v64
    %2701 = vmatpush1.msra.mxu0 %v63
    %2702 = vmatprep.subr.mxu0 %v72
    %2703 = vmatpush1.msra.mxu0 %v71
    %2704 = vmatprep.subr.mxu0 %v80
    %2705 = vmatpush1.msra.mxu0 %v79
    %2706 = vmatprep.subr.mxu0 %v88
    %2707 = vmatpush1.msra.mxu0 %v87
    %2708 = vmatprep.subr.mxu0 %v96
    %2709 = vmatpush1.msra.mxu0 %v95
    %2710 = vmatprep.subr.mxu0 %v104
    %2711 = vmatpush1.msra.mxu0 %v103
    %2712 = vmatprep.subr.mxu0 %v112
    %2713 = vmatpush1.msra.mxu0 %v111
    %2714 = vmatprep.subr.mxu0 %v120
    %2715 = vmatpush1.msra.mxu0 %v119
    %2716 = vmatprep.subr.mxu0 %v128
    %2717 = vmatpush1.msra.mxu0 %v127
    %2718 = vmatprep.subr.mxu0 %v136
    %2719 = vmatpush1.msra.mxu0 %v135
    %2720 = vmatprep.subr.mxu0 %v144
    %2721 = vmatpush1.msra.mxu0 %v143
    %2722 = vmatprep.subr.mxu0 %v152
    %2723 = vmatpush1.msra.mxu0 %v151
    %2724 = vmatprep.subr.mxu0 %v160
    %2725 = vmatpush1.msra.mxu0 %v159
    %2726 = vmatprep.subr.mxu0 %v168
    %2727 = vmatpush1.msra.mxu0 %v167
    %2728 = vmatprep.subr.mxu0 %v176
    %2729 = vmatpush1.msra.mxu0 %v175
    %2730 = vmatprep.subr.mxu0 %v184
    %2731 = vmatpush1.msra.mxu0 %v183
    %2732 = vmatprep.subr.mxu0 %v192
    %2733 = vmatpush1.msra.mxu0 %v191
    %2734 = vmatprep.subr.mxu0 %v200
    %2735 = vmatpush1.msra.mxu0 %v199
    %2736 = vmatprep.subr.mxu0 %v208
    %2737 = vmatpush1.msra.mxu0 %v207
    %2738 = vmatprep.subr.mxu0 %v216
    %2739 = vmatpush1.msra.mxu0 %v215
    %2740 = vmatprep.subr.mxu0 %v224
    %2741 = vmatpush1.msra.mxu0 %v223
    %2742 = vmatprep.subr.mxu0 %v232
    %2743 = vmatpush1.msra.mxu0 %v231
    %2744 = vmatprep.subr.mxu0 %v240
    %2745 = vmatpush1.msra.mxu0 %v239
    %2746 = vmatprep.subr.mxu0 %v248
    %2747 = vmatpush1.msra.mxu0 %v247
    %2748 = vmatprep.subr.mxu0 %v256
    %2749 = vmatpush1.msra.mxu0 %v255
    %2750 = vmatprep.subr.mxu0 %v264
    %2751 = vmatpush1.msra.mxu0 %v263
    %2752 = vmatprep.subr.mxu0 %v272
    %2753 = vmatpush1.msra.mxu0 %v271
    %2754 = vmatprep.subr.mxu0 %v280
    %2755 = vmatpush1.msra.mxu0 %v279
    %2756 = vmatprep.subr.mxu0 %v288
    %2757 = vmatpush1.msra.mxu0 %v287
    %2758 = vmatprep.subr.mxu0 %v296
    %2759 = vmatpush1.msra.mxu0 %v295
    %2760 = vmatprep.mubr.f32.mxu0 %v2523
    %2761 = vmatmul.mubr.f32.gmra.mrb[0].mxu0 %v2541
    %v2762 = vpop.f32.mrb[0].mxu0
    %v2763 = vadd.f32 0.0, %v2762
    %v2764 = vpop.f32.mrb[0].mxu0
    %v2765 = vadd.f32 0.0, %v2764
    %2766 = vdwg.mxu0
    %2767 = vmatprep.subr.mxu0 %v50
    %2768 = vmatpush1.msra.mxu0 %v49
    %2769 = vmatprep.subr.mxu0 %v58
    %2770 = vmatpush1.msra.mxu0 %v57
    %2771 = vmatprep.subr.mxu0 %v66
    %2772 = vmatpush1.msra.mxu0 %v65
    %2773 = vmatprep.subr.mxu0 %v74
    %2774 = vmatpush1.msra.mxu0 %v73
    %2775 = vmatprep.subr.mxu0 %v82
    %2776 = vmatpush1.msra.mxu0 %v81
    %2777 = vmatprep.subr.mxu0 %v90
    %2778 = vmatpush1.msra.mxu0 %v89
    %2779 = vmatprep.subr.mxu0 %v98
    %2780 = vmatpush1.msra.mxu0 %v97
    %2781 = vmatprep.subr.mxu0 %v106
    %2782 = vmatpush1.msra.mxu0 %v105
    %2783 = vmatprep.subr.mxu0 %v114
    %2784 = vmatpush1.msra.mxu0 %v113
    %2785 = vmatprep.subr.mxu0 %v122
    %2786 = vmatpush1.msra.mxu0 %v121
    %2787 = vmatprep.subr.mxu0 %v130
    %2788 = vmatpush1.msra.mxu0 %v129
    %2789 = vmatprep.subr.mxu0 %v138
    %2790 = vmatpush1.msra.mxu0 %v137
    %2791 = vmatprep.subr.mxu0 %v146
    %2792 = vmatpush1.msra.mxu0 %v145
    %2793 = vmatprep.subr.mxu0 %v154
    %2794 = vmatpush1.msra.mxu0 %v153
    %2795 = vmatprep.subr.mxu0 %v162
    %2796 = vmatpush1.msra.mxu0 %v161
    %2797 = vmatprep.subr.mxu0 %v170
    %2798 = vmatpush1.msra.mxu0 %v169
    %2799 = vmatprep.subr.mxu0 %v178
    %2800 = vmatpush1.msra.mxu0 %v177
    %2801 = vmatprep.subr.mxu0 %v186
    %2802 = vmatpush1.msra.mxu0 %v185
    %2803 = vmatprep.subr.mxu0 %v194
    %2804 = vmatpush1.msra.mxu0 %v193
    %2805 = vmatprep.subr.mxu0 %v202
    %2806 = vmatpush1.msra.mxu0 %v201
    %2807 = vmatprep.subr.mxu0 %v210
    %2808 = vmatpush1.msra.mxu0 %v209
    %2809 = vmatprep.subr.mxu0 %v218
    %2810 = vmatpush1.msra.mxu0 %v217
    %2811 = vmatprep.subr.mxu0 %v226
    %2812 = vmatpush1.msra.mxu0 %v225
    %2813 = vmatprep.subr.mxu0 %v234
    %2814 = vmatpush1.msra.mxu0 %v233
    %2815 = vmatprep.subr.mxu0 %v242
    %2816 = vmatpush1.msra.mxu0 %v241
    %2817 = vmatprep.subr.mxu0 %v250
    %2818 = vmatpush1.msra.mxu0 %v249
    %2819 = vmatprep.subr.mxu0 %v258
    %2820 = vmatpush1.msra.mxu0 %v257
    %2821 = vmatprep.subr.mxu0 %v266
    %2822 = vmatpush1.msra.mxu0 %v265
    %2823 = vmatprep.subr.mxu0 %v274
    %2824 = vmatpush1.msra.mxu0 %v273
    %2825 = vmatprep.subr.mxu0 %v282
    %2826 = vmatpush1.msra.mxu0 %v281
    %2827 = vmatprep.subr.mxu0 %v290
    %2828 = vmatpush1.msra.mxu0 %v289
    %2829 = vmatprep.subr.mxu0 %v298
    %2830 = vmatpush1.msra.mxu0 %v297
    %2831 = vmatprep.mubr.f32.mxu0 %v2523
    %2832 = vmatmul.mubr.f32.gmra.mrb[0].mxu0 %v2541
    %v2833 = vpop.f32.mrb[0].mxu0
    %v2834 = vadd.f32 0.0, %v2833
    %v2835 = vpop.f32.mrb[0].mxu0
    %v2836 = vadd.f32 0.0, %v2835
    %2837 = vdwg.mxu0
    %v2838 = vadd.f32 %v2621, %v988
    %v2839 = vadd.f32 %v2623, %v992
    %v2840 = vadd.f32 %v2692, %v996
    %v2841 = vadd.f32 %v2694, %v1000
    %s2842 = scalar_lea.vmem [#allocation2], 48
    %v2843 = vld [vmem:[%s2842] sm:$0xff]
    %v2845 = vcombine.high %v2843, %v2843
    %v2847 = vunpack.c.l.s4 1983009808
    %v2848 = vunpack.c.0.s8 %v2847
    %v2849 = vlaneseq
    %v2850 = vshrl.u32 %v2849, 7
    %v2851 = vsub.s32 %v2848, %v2850
    %v2852 = vrot.slane %v2843, %v2851
    %v2854 = vunpack.c.l.s4 1983009808
    %v2855 = vunpack.c.0.s8 %v2854
    %v2856 = vlaneseq
    %v2857 = vshrl.u32 %v2856, 7
    %v2858 = vsub.s32 %v2855, %v2857
    %v2859 = vrot.slane %v2845, %v2858
    %v2860 = vcombine.high %v2852, %v2852
    %v2861 = vcombine.high %v2859, %v2859
    %v2866 = vadd.f32 %v2763, %v2852
    %v2867 = vadd.f32 %v2765, %v2860
    %v2868 = vadd.f32 %v2834, %v2859
    %v2869 = vadd.f32 %v2836, %v2861
    %v2870 = vmul.f32 %v2838, 0.5
    %v2871 = vmul.f32 %v2839, 0.5
    %v2872 = vmul.f32 %v2840, 0.5
    %v2873 = vtanh.pop %v2870
    %v2874 = vtanh.pop %v2871
    %v2875 = vtanh.pop %v2872
    %v2876 = vmul.f32 %v2873, 0.5
    %v2877 = vmul.f32 %v2874, 0.5
    %v2878 = vmul.f32 %v2875, 0.5
    %v2879 = vadd.f32 %v2876, 0.5
    %v2880 = vadd.f32 %v2877, 0.5
    %v2881 = vadd.f32 %v2878, 0.5
    %v2882 = vtanh.pop %v2841
    %v2883 = vmul.f32 %v2880, %v2521
    %v2884 = vmul.f32 %v2879, %v2882
    %v2885 = vadd.f32 %v2883, %v2884
    %v2886 = vtanh.pop %v2885
    %v2887 = vmul.f32 %v2881, %v2886
    %v2888 = vmul.f32 %v2866, 0.5
    %v2889 = vmul.f32 %v2867, 0.5
    %v2890 = vmul.f32 %v2868, 0.5
    %v2891 = vtanh.pop %v2888
    %v2892 = vtanh.pop %v2889
    %v2893 = vtanh.pop %v2890
    %v2894 = vmul.f32 %v2891, 0.5
    %v2895 = vmul.f32 %v2892, 0.5
    %v2896 = vmul.f32 %v2893, 0.5
    %v2897 = vadd.f32 %v2894, 0.5
    %v2898 = vadd.f32 %v2895, 0.5
    %v2899 = vadd.f32 %v2896, 0.5
    %v2900 = vtanh.pop %v2869
    %v2901 = vmul.f32 %v2898, %v2539
    %v2902 = vmul.f32 %v2897, %v2900
    %v2903 = vadd.f32 %v2901, %v2902
    %v2904 = vtanh.pop %v2903
    %v2905 = vmul.f32 %v2899, %v2904
    %v2906 = vmul.f32 %v2887, %v1077
    %v2907 = vsel %vm1080, %v2906, 0.0
    %2908 = vadd.xlane.f32.xlu0 %v2907
    %v2909 = vpop.xlane.xlu0 %2908
    %v2910 = vadd.f32 %v2909, %v1088
    %vm2911 = vcmp.eq.s32.totalorder %v680, 5
    %2913 = vset.pattern.permute.xlu0 0
    %2914 = vperm.xlu0 %2913, %v2910
    %v2915 = vpop.permute.xlu0 %2914
    %v2917 = vsel %vm2911, %v2915, %v2553
    %2918 = vmatprep.subr.mxu0 %v44
    %2919 = vmatpush1.msra.mxu0 %v43
    %2920 = vmatprep.subr.mxu0 %v52
    %2921 = vmatpush1.msra.mxu0 %v51
    %2922 = vmatprep.subr.mxu0 %v60
    %2923 = vmatpush1.msra.mxu0 %v59
    %2924 = vmatprep.subr.mxu0 %v68
    %2925 = vmatpush1.msra.mxu0 %v67
    %2926 = vmatprep.subr.mxu0 %v76
    %2927 = vmatpush1.msra.mxu0 %v75
    %2928 = vmatprep.subr.mxu0 %v84
    %2929 = vmatpush1.msra.mxu0 %v83
    %2930 = vmatprep.subr.mxu0 %v92
    %2931 = vmatpush1.msra.mxu0 %v91
    %2932 = vmatprep.subr.mxu0 %v100
    %2933 = vmatpush1.msra.mxu0 %v99
    %2934 = vmatprep.subr.mxu0 %v108
    %2935 = vmatpush1.msra.mxu0 %v107
    %2936 = vmatprep.subr.mxu0 %v116
    %2937 = vmatpush1.msra.mxu0 %v115
    %2938 = vmatprep.subr.mxu0 %v124
    %2939 = vmatpush1.msra.mxu0 %v123
    %2940 = vmatprep.subr.mxu0 %v132
    %2941 = vmatpush1.msra.mxu0 %v131
    %2942 = vmatprep.subr.mxu0 %v140
    %2943 = vmatpush1.msra.mxu0 %v139
    %2944 = vmatprep.subr.mxu0 %v148
    %2945 = vmatpush1.msra.mxu0 %v147
    %2946 = vmatprep.subr.mxu0 %v156
    %2947 = vmatpush1.msra.mxu0 %v155
    %2948 = vmatprep.subr.mxu0 %v164
    %2949 = vmatpush1.msra.mxu0 %v163
    %2950 = vmatprep.subr.mxu0 %v172
    %2951 = vmatpush1.msra.mxu0 %v171
    %2952 = vmatprep.subr.mxu0 %v180
    %2953 = vmatpush1.msra.mxu0 %v179
    %2954 = vmatprep.subr.mxu0 %v188
    %2955 = vmatpush1.msra.mxu0 %v187
    %2956 = vmatprep.subr.mxu0 %v196
    %2957 = vmatpush1.msra.mxu0 %v195
    %2958 = vmatprep.subr.mxu0 %v204
    %2959 = vmatpush1.msra.mxu0 %v203
    %2960 = vmatprep.subr.mxu0 %v212
    %2961 = vmatpush1.msra.mxu0 %v211
    %2962 = vmatprep.subr.mxu0 %v220
    %2963 = vmatpush1.msra.mxu0 %v219
    %2964 = vmatprep.subr.mxu0 %v228
    %2965 = vmatpush1.msra.mxu0 %v227
    %2966 = vmatprep.subr.mxu0 %v236
    %2967 = vmatpush1.msra.mxu0 %v235
    %2968 = vmatprep.subr.mxu0 %v244
    %2969 = vmatpush1.msra.mxu0 %v243
    %2970 = vmatprep.subr.mxu0 %v252
    %2971 = vmatpush1.msra.mxu0 %v251
    %2972 = vmatprep.subr.mxu0 %v260
    %2973 = vmatpush1.msra.mxu0 %v259
    %2974 = vmatprep.subr.mxu0 %v268
    %2975 = vmatpush1.msra.mxu0 %v267
    %2976 = vmatprep.subr.mxu0 %v276
    %2977 = vmatpush1.msra.mxu0 %v275
    %2978 = vmatprep.subr.mxu0 %v284
    %2979 = vmatpush1.msra.mxu0 %v283
    %2980 = vmatprep.subr.mxu0 %v292
    %2981 = vmatpush1.msra.mxu0 %v291
    %2982 = vmatprep.mubr.f32.mxu0 %v2887
    %2983 = vmatmul.mubr.f32.gmra.mrb[0].mxu0 %v2905
    %v2984 = vpop.f32.mrb[0].mxu0
    %v2985 = vadd.f32 0.0, %v2984
    %v2986 = vpop.f32.mrb[0].mxu0
    %v2987 = vadd.f32 0.0, %v2986
    %2988 = vdwg.mxu0
    %2989 = vmatprep.subr.mxu0 %v46
    %2990 = vmatpush1.msra.mxu0 %v45
    %2991 = vmatprep.subr.mxu0 %v54
    %2992 = vmatpush1.msra.mxu0 %v53
    %2993 = vmatprep.subr.mxu0 %v62
    %2994 = vmatpush1.msra.mxu0 %v61
    %2995 = vmatprep.subr.mxu0 %v70
    %2996 = vmatpush1.msra.mxu0 %v69
    %2997 = vmatprep.subr.mxu0 %v78
    %2998 = vmatpush1.msra.mxu0 %v77
    %2999 = vmatprep.subr.mxu0 %v86
    %3000 = vmatpush1.msra.mxu0 %v85
    %3001 = vmatprep.subr.mxu0 %v94
    %3002 = vmatpush1.msra.mxu0 %v93
    %3003 = vmatprep.subr.mxu0 %v102
    %3004 = vmatpush1.msra.mxu0 %v101
    %3005 = vmatprep.subr.mxu0 %v110
    %3006 = vmatpush1.msra.mxu0 %v109
    %3007 = vmatprep.subr.mxu0 %v118
    %3008 = vmatpush1.msra.mxu0 %v117
    %3009 = vmatprep.subr.mxu0 %v126
    %3010 = vmatpush1.msra.mxu0 %v125
    %3011 = vmatprep.subr.mxu0 %v134
    %3012 = vmatpush1.msra.mxu0 %v133
    %3013 = vmatprep.subr.mxu0 %v142
    %3014 = vmatpush1.msra.mxu0 %v141
    %3015 = vmatprep.subr.mxu0 %v150
    %3016 = vmatpush1.msra.mxu0 %v149
    %3017 = vmatprep.subr.mxu0 %v158
    %3018 = vmatpush1.msra.mxu0 %v157
    %3019 = vmatprep.subr.mxu0 %v166
    %3020 = vmatpush1.msra.mxu0 %v165
    %3021 = vmatprep.subr.mxu0 %v174
    %3022 = vmatpush1.msra.mxu0 %v173
    %3023 = vmatprep.subr.mxu0 %v182
    %3024 = vmatpush1.msra.mxu0 %v181
    %3025 = vmatprep.subr.mxu0 %v190
    %3026 = vmatpush1.msra.mxu0 %v189
    %3027 = vmatprep.subr.mxu0 %v198
    %3028 = vmatpush1.msra.mxu0 %v197
    %3029 = vmatprep.subr.mxu0 %v206
    %3030 = vmatpush1.msra.mxu0 %v205
    %3031 = vmatprep.subr.mxu0 %v214
    %3032 = vmatpush1.msra.mxu0 %v213
    %3033 = vmatprep.subr.mxu0 %v222
    %3034 = vmatpush1.msra.mxu0 %v221
    %3035 = vmatprep.subr.mxu0 %v230
    %3036 = vmatpush1.msra.mxu0 %v229
    %3037 = vmatprep.subr.mxu0 %v238
    %3038 = vmatpush1.msra.mxu0 %v237
    %3039 = vmatprep.subr.mxu0 %v246
    %3040 = vmatpush1.msra.mxu0 %v245
    %3041 = vmatprep.subr.mxu0 %v254
    %3042 = vmatpush1.msra.mxu0 %v253
    %3043 = vmatprep.subr.mxu0 %v262
    %3044 = vmatpush1.msra.mxu0 %v261
    %3045 = vmatprep.subr.mxu0 %v270
    %3046 = vmatpush1.msra.mxu0 %v269
    %3047 = vmatprep.subr.mxu0 %v278
    %3048 = vmatpush1.msra.mxu0 %v277
    %3049 = vmatprep.subr.mxu0 %v286
    %3050 = vmatpush1.msra.mxu0 %v285
    %3051 = vmatprep.subr.mxu0 %v294
    %3052 = vmatpush1.msra.mxu0 %v293
    %3053 = vmatprep.mubr.f32.mxu0 %v2887
    %3054 = vmatmul.mubr.f32.gmra.mrb[0].mxu0 %v2905
    %v3055 = vpop.f32.mrb[0].mxu0
    %v3056 = vadd.f32 0.0, %v3055
    %v3057 = vpop.f32.mrb[0].mxu0
    %v3058 = vadd.f32 0.0, %v3057
    %3059 = vdwg.mxu0
    %3060 = vmatprep.subr.mxu0 %v48
    %3061 = vmatpush1.msra.mxu0 %v47
    %3062 = vmatprep.subr.mxu0 %v56
    %3063 = vmatpush1.msra.mxu0 %v55
    %3064 = vmatprep.subr.mxu0 %v64
    %3065 = vmatpush1.msra.mxu0 %v63
    %3066 = vmatprep.subr.mxu0 %v72
    %3067 = vmatpush1.msra.mxu0 %v71
    %3068 = vmatprep.subr.mxu0 %v80
    %3069 = vmatpush1.msra.mxu0 %v79
    %3070 = vmatprep.subr.mxu0 %v88
    %3071 = vmatpush1.msra.mxu0 %v87
    %3072 = vmatprep.subr.mxu0 %v96
    %3073 = vmatpush1.msra.mxu0 %v95
    %3074 = vmatprep.subr.mxu0 %v104
    %3075 = vmatpush1.msra.mxu0 %v103
    %3076 = vmatprep.subr.mxu0 %v112
    %3077 = vmatpush1.msra.mxu0 %v111
    %3078 = vmatprep.subr.mxu0 %v120
    %3079 = vmatpush1.msra.mxu0 %v119
    %3080 = vmatprep.subr.mxu0 %v128
    %3081 = vmatpush1.msra.mxu0 %v127
    %3082 = vmatprep.subr.mxu0 %v136
    %3083 = vmatpush1.msra.mxu0 %v135
    %3084 = vmatprep.subr.mxu0 %v144
    %3085 = vmatpush1.msra.mxu0 %v143
    %3086 = vmatprep.subr.mxu0 %v152
    %3087 = vmatpush1.msra.mxu0 %v151
    %3088 = vmatprep.subr.mxu0 %v160
    %3089 = vmatpush1.msra.mxu0 %v159
    %3090 = vmatprep.subr.mxu0 %v168
    %3091 = vmatpush1.msra.mxu0 %v167
    %3092 = vmatprep.subr.mxu0 %v176
    %3093 = vmatpush1.msra.mxu0 %v175
    %3094 = vmatprep.subr.mxu0 %v184
    %3095 = vmatpush1.msra.mxu0 %v183
    %3096 = vmatprep.subr.mxu0 %v192
    %3097 = vmatpush1.msra.mxu0 %v191
    %3098 = vmatprep.subr.mxu0 %v200
    %3099 = vmatpush1.msra.mxu0 %v199
    %3100 = vmatprep.subr.mxu0 %v208
    %3101 = vmatpush1.msra.mxu0 %v207
    %3102 = vmatprep.subr.mxu0 %v216
    %3103 = vmatpush1.msra.mxu0 %v215
    %3104 = vmatprep.subr.mxu0 %v224
    %3105 = vmatpush1.msra.mxu0 %v223
    %3106 = vmatprep.subr.mxu0 %v232
    %3107 = vmatpush1.msra.mxu0 %v231
    %3108 = vmatprep.subr.mxu0 %v240
    %3109 = vmatpush1.msra.mxu0 %v239
    %3110 = vmatprep.subr.mxu0 %v248
    %3111 = vmatpush1.msra.mxu0 %v247
    %3112 = vmatprep.subr.mxu0 %v256
    %3113 = vmatpush1.msra.mxu0 %v255
    %3114 = vmatprep.subr.mxu0 %v264
    %3115 = vmatpush1.msra.mxu0 %v263
    %3116 = vmatprep.subr.mxu0 %v272
    %3117 = vmatpush1.msra.mxu0 %v271
    %3118 = vmatprep.subr.mxu0 %v280
    %3119 = vmatpush1.msra.mxu0 %v279
    %3120 = vmatprep.subr.mxu0 %v288
    %3121 = vmatpush1.msra.mxu0 %v287
    %3122 = vmatprep.subr.mxu0 %v296
    %3123 = vmatpush1.msra.mxu0 %v295
    %3124 = vmatprep.mubr.f32.mxu0 %v2887
    %3125 = vmatmul.mubr.f32.gmra.mrb[0].mxu0 %v2905
    %v3126 = vpop.f32.mrb[0].mxu0
    %v3127 = vadd.f32 0.0, %v3126
    %v3128 = vpop.f32.mrb[0].mxu0
    %v3129 = vadd.f32 0.0, %v3128
    %3130 = vdwg.mxu0
    %3131 = vmatprep.subr.mxu0 %v50
    %3132 = vmatpush1.msra.mxu0 %v49
    %3133 = vmatprep.subr.mxu0 %v58
    %3134 = vmatpush1.msra.mxu0 %v57
    %3135 = vmatprep.subr.mxu0 %v66
    %3136 = vmatpush1.msra.mxu0 %v65
    %3137 = vmatprep.subr.mxu0 %v74
    %3138 = vmatpush1.msra.mxu0 %v73
    %3139 = vmatprep.subr.mxu0 %v82
    %3140 = vmatpush1.msra.mxu0 %v81
    %3141 = vmatprep.subr.mxu0 %v90
    %3142 = vmatpush1.msra.mxu0 %v89
    %3143 = vmatprep.subr.mxu0 %v98
    %3144 = vmatpush1.msra.mxu0 %v97
    %3145 = vmatprep.subr.mxu0 %v106
    %3146 = vmatpush1.msra.mxu0 %v105
    %3147 = vmatprep.subr.mxu0 %v114
    %3148 = vmatpush1.msra.mxu0 %v113
    %3149 = vmatprep.subr.mxu0 %v122
    %3150 = vmatpush1.msra.mxu0 %v121
    %3151 = vmatprep.subr.mxu0 %v130
    %3152 = vmatpush1.msra.mxu0 %v129
    %3153 = vmatprep.subr.mxu0 %v138
    %3154 = vmatpush1.msra.mxu0 %v137
    %3155 = vmatprep.subr.mxu0 %v146
    %3156 = vmatpush1.msra.mxu0 %v145
    %3157 = vmatprep.subr.mxu0 %v154
    %3158 = vmatpush1.msra.mxu0 %v153
    %3159 = vmatprep.subr.mxu0 %v162
    %3160 = vmatpush1.msra.mxu0 %v161
    %3161 = vmatprep.subr.mxu0 %v170
    %3162 = vmatpush1.msra.mxu0 %v169
    %3163 = vmatprep.subr.mxu0 %v178
    %3164 = vmatpush1.msra.mxu0 %v177
    %3165 = vmatprep.subr.mxu0 %v186
    %3166 = vmatpush1.msra.mxu0 %v185
    %3167 = vmatprep.subr.mxu0 %v194
    %3168 = vmatpush1.msra.mxu0 %v193
    %3169 = vmatprep.subr.mxu0 %v202
    %3170 = vmatpush1.msra.mxu0 %v201
    %3171 = vmatprep.subr.mxu0 %v210
    %3172 = vmatpush1.msra.mxu0 %v209
    %3173 = vmatprep.subr.mxu0 %v218
    %3174 = vmatpush1.msra.mxu0 %v217
    %3175 = vmatprep.subr.mxu0 %v226
    %3176 = vmatpush1.msra.mxu0 %v225
    %3177 = vmatprep.subr.mxu0 %v234
    %3178 = vmatpush1.msra.mxu0 %v233
    %3179 = vmatprep.subr.mxu0 %v242
    %3180 = vmatpush1.msra.mxu0 %v241
    %3181 = vmatprep.subr.mxu0 %v250
    %3182 = vmatpush1.msra.mxu0 %v249
    %3183 = vmatprep.subr.mxu0 %v258
    %3184 = vmatpush1.msra.mxu0 %v257
    %3185 = vmatprep.subr.mxu0 %v266
    %3186 = vmatpush1.msra.mxu0 %v265
    %3187 = vmatprep.subr.mxu0 %v274
    %3188 = vmatpush1.msra.mxu0 %v273
    %3189 = vmatprep.subr.mxu0 %v282
    %3190 = vmatpush1.msra.mxu0 %v281
    %3191 = vmatprep.subr.mxu0 %v290
    %3192 = vmatpush1.msra.mxu0 %v289
    %3193 = vmatprep.subr.mxu0 %v298
    %3194 = vmatpush1.msra.mxu0 %v297
    %3195 = vmatprep.mubr.f32.mxu0 %v2887
    %3196 = vmatmul.mubr.f32.gmra.mrb[0].mxu0 %v2905
    %v3197 = vpop.f32.mrb[0].mxu0
    %v3198 = vadd.f32 0.0, %v3197
    %v3199 = vpop.f32.mrb[0].mxu0
    %v3200 = vadd.f32 0.0, %v3199
    %3201 = vdwg.mxu0
    %v3202 = vadd.f32 %v2985, %v988
    %v3203 = vadd.f32 %v2987, %v992
    %v3204 = vadd.f32 %v3056, %v996
    %v3205 = vadd.f32 %v3058, %v1000
    %s3206 = scalar_lea.vmem [#allocation2], 56
    %v3207 = vld [vmem:[%s3206] sm:$0xff]
    %v3209 = vcombine.high %v3207, %v3207
    %v3211 = vunpack.c.l.s4 1983009808
    %v3212 = vunpack.c.0.s8 %v3211
    %v3213 = vlaneseq
    %v3214 = vshrl.u32 %v3213, 7
    %v3215 = vsub.s32 %v3212, %v3214
    %v3216 = vrot.slane %v3207, %v3215
    %v3218 = vunpack.c.l.s4 1983009808
    %v3219 = vunpack.c.0.s8 %v3218
    %v3220 = vlaneseq
    %v3221 = vshrl.u32 %v3220, 7
    %v3222 = vsub.s32 %v3219, %v3221
    %v3223 = vrot.slane %v3209, %v3222
    %v3224 = vcombine.high %v3216, %v3216
    %v3225 = vcombine.high %v3223, %v3223
    %v3230 = vadd.f32 %v3127, %v3216
    %v3231 = vadd.f32 %v3129, %v3224
    %v3232 = vadd.f32 %v3198, %v3223
    %v3233 = vadd.f32 %v3200, %v3225
    %v3234 = vmul.f32 %v3202, 0.5
    %v3235 = vmul.f32 %v3203, 0.5
    %v3236 = vmul.f32 %v3204, 0.5
    %v3237 = vtanh.pop %v3234
    %v3238 = vtanh.pop %v3235
    %v3239 = vtanh.pop %v3236
    %v3240 = vmul.f32 %v3237, 0.5
    %v3241 = vmul.f32 %v3238, 0.5
    %v3242 = vmul.f32 %v3239, 0.5
    %v3243 = vadd.f32 %v3240, 0.5
    %v3244 = vadd.f32 %v3241, 0.5
    %v3245 = vadd.f32 %v3242, 0.5
    %v3246 = vtanh.pop %v3205
    %v3247 = vmul.f32 %v3244, %v2885
    %v3248 = vmul.f32 %v3243, %v3246
    %v3249 = vadd.f32 %v3247, %v3248
    %v3250 = vtanh.pop %v3249
    %v3251 = vmul.f32 %v3245, %v3250
    %v3252 = vmul.f32 %v3230, 0.5
    %v3253 = vmul.f32 %v3231, 0.5
    %v3254 = vmul.f32 %v3232, 0.5
    %v3255 = vtanh.pop %v3252
    %v3256 = vtanh.pop %v3253
    %v3257 = vtanh.pop %v3254
    %v3258 = vmul.f32 %v3255, 0.5
    %v3259 = vmul.f32 %v3256, 0.5
    %v3260 = vmul.f32 %v3257, 0.5
    %v3261 = vadd.f32 %v3258, 0.5
    %v3262 = vadd.f32 %v3259, 0.5
    %v3263 = vadd.f32 %v3260, 0.5
    %v3264 = vtanh.pop %v3233
    %v3265 = vmul.f32 %v3262, %v2903
    %v3266 = vmul.f32 %v3261, %v3264
    %v3267 = vadd.f32 %v3265, %v3266
    %v3268 = vtanh.pop %v3267
    %v3269 = vmul.f32 %v3263, %v3268
    %v3270 = vmul.f32 %v3251, %v1077
    %v3271 = vsel %vm1080, %v3270, 0.0
    %3272 = vadd.xlane.f32.xlu0 %v3271
    %v3273 = vpop.xlane.xlu0 %3272
    %v3274 = vadd.f32 %v3273, %v1088
    %vm3275 = vcmp.eq.s32.totalorder %v680, 6
    %3277 = vset.pattern.permute.xlu0 0
    %3278 = vperm.xlu0 %3277, %v3274
    %v3279 = vpop.permute.xlu0 %3278
    %v3281 = vsel %vm3275, %v3279, %v2917
    %3282 = vmatprep.subr.mxu0 %v44
    %3283 = vmatpush1.msra.mxu0 %v43
    %3284 = vmatprep.subr.mxu0 %v52
    %3285 = vmatpush1.msra.mxu0 %v51
    %3286 = vmatprep.subr.mxu0 %v60
    %3287 = vmatpush1.msra.mxu0 %v59
    %3288 = vmatprep.subr.mxu0 %v68
    %3289 = vmatpush1.msra.mxu0 %v67
    %3290 = vmatprep.subr.mxu0 %v76
    %3291 = vmatpush1.msra.mxu0 %v75
    %3292 = vmatprep.subr.mxu0 %v84
    %3293 = vmatpush1.msra.mxu0 %v83
    %3294 = vmatprep.subr.mxu0 %v92
    %3295 = vmatpush1.msra.mxu0 %v91
    %3296 = vmatprep.subr.mxu0 %v100
    %3297 = vmatpush1.msra.mxu0 %v99
    %3298 = vmatprep.subr.mxu0 %v108
    %3299 = vmatpush1.msra.mxu0 %v107
    %3300 = vmatprep.subr.mxu0 %v116
    %3301 = vmatpush1.msra.mxu0 %v115
    %3302 = vmatprep.subr.mxu0 %v124
    %3303 = vmatpush1.msra.mxu0 %v123
    %3304 = vmatprep.subr.mxu0 %v132
    %3305 = vmatpush1.msra.mxu0 %v131
    %3306 = vmatprep.subr.mxu0 %v140
    %3307 = vmatpush1.msra.mxu0 %v139
    %3308 = vmatprep.subr.mxu0 %v148
    %3309 = vmatpush1.msra.mxu0 %v147
    %3310 = vmatprep.subr.mxu0 %v156
    %3311 = vmatpush1.msra.mxu0 %v155
    %3312 = vmatprep.subr.mxu0 %v164
    %3313 = vmatpush1.msra.mxu0 %v163
    %3314 = vmatprep.subr.mxu0 %v172
    %3315 = vmatpush1.msra.mxu0 %v171
    %3316 = vmatprep.subr.mxu0 %v180
    %3317 = vmatpush1.msra.mxu0 %v179
    %3318 = vmatprep.subr.mxu0 %v188
    %3319 = vmatpush1.msra.mxu0 %v187
    %3320 = vmatprep.subr.mxu0 %v196
    %3321 = vmatpush1.msra.mxu0 %v195
    %3322 = vmatprep.subr.mxu0 %v204
    %3323 = vmatpush1.msra.mxu0 %v203
    %3324 = vmatprep.subr.mxu0 %v212
    %3325 = vmatpush1.msra.mxu0 %v211
    %3326 = vmatprep.subr.mxu0 %v220
    %3327 = vmatpush1.msra.mxu0 %v219
    %3328 = vmatprep.subr.mxu0 %v228
    %3329 = vmatpush1.msra.mxu0 %v227
    %3330 = vmatprep.subr.mxu0 %v236
    %3331 = vmatpush1.msra.mxu0 %v235
    %3332 = vmatprep.subr.mxu0 %v244
    %3333 = vmatpush1.msra.mxu0 %v243
    %3334 = vmatprep.subr.mxu0 %v252
    %3335 = vmatpush1.msra.mxu0 %v251
    %3336 = vmatprep.subr.mxu0 %v260
    %3337 = vmatpush1.msra.mxu0 %v259
    %3338 = vmatprep.subr.mxu0 %v268
    %3339 = vmatpush1.msra.mxu0 %v267
    %3340 = vmatprep.subr.mxu0 %v276
    %3341 = vmatpush1.msra.mxu0 %v275
    %3342 = vmatprep.subr.mxu0 %v284
    %3343 = vmatpush1.msra.mxu0 %v283
    %3344 = vmatprep.subr.mxu0 %v292
    %3345 = vmatpush1.msra.mxu0 %v291
    %3346 = vmatprep.mubr.f32.mxu0 %v3251
    %3347 = vmatmul.mubr.f32.gmra.mrb[0].mxu0 %v3269
    %v3348 = vpop.f32.mrb[0].mxu0
    %v3349 = vadd.f32 0.0, %v3348
    %v3350 = vpop.f32.mrb[0].mxu0
    %v3351 = vadd.f32 0.0, %v3350
    %3352 = vdwg.mxu0
    %3353 = vmatprep.subr.mxu0 %v46
    %3354 = vmatpush1.msra.mxu0 %v45
    %3355 = vmatprep.subr.mxu0 %v54
    %3356 = vmatpush1.msra.mxu0 %v53
    %3357 = vmatprep.subr.mxu0 %v62
    %3358 = vmatpush1.msra.mxu0 %v61
    %3359 = vmatprep.subr.mxu0 %v70
    %3360 = vmatpush1.msra.mxu0 %v69
    %3361 = vmatprep.subr.mxu0 %v78
    %3362 = vmatpush1.msra.mxu0 %v77
    %3363 = vmatprep.subr.mxu0 %v86
    %3364 = vmatpush1.msra.mxu0 %v85
    %3365 = vmatprep.subr.mxu0 %v94
    %3366 = vmatpush1.msra.mxu0 %v93
    %3367 = vmatprep.subr.mxu0 %v102
    %3368 = vmatpush1.msra.mxu0 %v101
    %3369 = vmatprep.subr.mxu0 %v110
    %3370 = vmatpush1.msra.mxu0 %v109
    %3371 = vmatprep.subr.mxu0 %v118
    %3372 = vmatpush1.msra.mxu0 %v117
    %3373 = vmatprep.subr.mxu0 %v126
    %3374 = vmatpush1.msra.mxu0 %v125
    %3375 = vmatprep.subr.mxu0 %v134
    %3376 = vmatpush1.msra.mxu0 %v133
    %3377 = vmatprep.subr.mxu0 %v142
    %3378 = vmatpush1.msra.mxu0 %v141
    %3379 = vmatprep.subr.mxu0 %v150
    %3380 = vmatpush1.msra.mxu0 %v149
    %3381 = vmatprep.subr.mxu0 %v158
    %3382 = vmatpush1.msra.mxu0 %v157
    %3383 = vmatprep.subr.mxu0 %v166
    %3384 = vmatpush1.msra.mxu0 %v165
    %3385 = vmatprep.subr.mxu0 %v174
    %3386 = vmatpush1.msra.mxu0 %v173
    %3387 = vmatprep.subr.mxu0 %v182
    %3388 = vmatpush1.msra.mxu0 %v181
    %3389 = vmatprep.subr.mxu0 %v190
    %3390 = vmatpush1.msra.mxu0 %v189
    %3391 = vmatprep.subr.mxu0 %v198
    %3392 = vmatpush1.msra.mxu0 %v197
    %3393 = vmatprep.subr.mxu0 %v206
    %3394 = vmatpush1.msra.mxu0 %v205
    %3395 = vmatprep.subr.mxu0 %v214
    %3396 = vmatpush1.msra.mxu0 %v213
    %3397 = vmatprep.subr.mxu0 %v222
    %3398 = vmatpush1.msra.mxu0 %v221
    %3399 = vmatprep.subr.mxu0 %v230
    %3400 = vmatpush1.msra.mxu0 %v229
    %3401 = vmatprep.subr.mxu0 %v238
    %3402 = vmatpush1.msra.mxu0 %v237
    %3403 = vmatprep.subr.mxu0 %v246
    %3404 = vmatpush1.msra.mxu0 %v245
    %3405 = vmatprep.subr.mxu0 %v254
    %3406 = vmatpush1.msra.mxu0 %v253
    %3407 = vmatprep.subr.mxu0 %v262
    %3408 = vmatpush1.msra.mxu0 %v261
    %3409 = vmatprep.subr.mxu0 %v270
    %3410 = vmatpush1.msra.mxu0 %v269
    %3411 = vmatprep.subr.mxu0 %v278
    %3412 = vmatpush1.msra.mxu0 %v277
    %3413 = vmatprep.subr.mxu0 %v286
    %3414 = vmatpush1.msra.mxu0 %v285
    %3415 = vmatprep.subr.mxu0 %v294
    %3416 = vmatpush1.msra.mxu0 %v293
    %3417 = vmatprep.mubr.f32.mxu0 %v3251
    %3418 = vmatmul.mubr.f32.gmra.mrb[0].mxu0 %v3269
    %v3419 = vpop.f32.mrb[0].mxu0
    %v3420 = vadd.f32 0.0, %v3419
    %v3421 = vpop.f32.mrb[0].mxu0
    %v3422 = vadd.f32 0.0, %v3421
    %3423 = vdwg.mxu0
    %v3424 = vadd.f32 %v3349, %v988
    %v3425 = vadd.f32 %v3351, %v992
    %v3426 = vadd.f32 %v3420, %v996
    %v3427 = vadd.f32 %v3422, %v1000
    %v3428 = vmul.f32 %v3424, 0.5
    %v3429 = vmul.f32 %v3425, 0.5
    %v3430 = vmul.f32 %v3426, 0.5
    %v3431 = vtanh.pop %v3428
    %v3432 = vtanh.pop %v3429
    %v3433 = vtanh.pop %v3430
    %v3434 = vmul.f32 %v3431, 0.5
    %v3435 = vmul.f32 %v3432, 0.5
    %v3436 = vmul.f32 %v3433, 0.5
    %v3437 = vadd.f32 %v3434, 0.5
    %v3438 = vadd.f32 %v3435, 0.5
    %v3439 = vadd.f32 %v3436, 0.5
    %v3440 = vtanh.pop %v3427
    %v3441 = vmul.f32 %v3438, %v3249
    %v3442 = vmul.f32 %v3437, %v3440
    %v3443 = vadd.f32 %v3441, %v3442
    %v3444 = vtanh.pop %v3443
    %v3445 = vmul.f32 %v3439, %v3444
    %v3446 = vmul.f32 %v3445, %v1077
    %v3447 = vsel %vm1080, %v3446, 0.0
    %3448 = vadd.xlane.f32.xlu0 %v3447
    %v3449 = vpop.xlane.xlu0 %3448
    %v3450 = vadd.f32 %v3449, %v1088
    %vm3451 = vcmp.eq.s32.totalorder %v680, 7
    %3453 = vset.pattern.permute.xlu0 0
    %3454 = vperm.xlu0 %3453, %v3450
    %v3455 = vpop.permute.xlu0 %3454
    %v3457 = vsel %vm3451, %v3455, %v3281
    %3458 = vst [vmem:[#allocation7] sm:$0x3] %v3457
    // Predicated region
    $region34: #{tpu_custom_call.1} parent=1 // pred_check
      _
    $region35: #{tpu_custom_call.1} parent=1 // pred_check_branch
      %3460 = sbr.rel (0) target = $region37
    $region36: #{tpu_custom_call.1} parent=1 // pred_region
      %s3462 = ssub.s32 32, 32
      %3463 = vsyncadd [#allocation6], %s3462
      %s3465 = sshll.u32 [#allocation7], 4
      %s3466 = int_to_ptr.vmem [resolvable:$true] %s3465
      %3468 = dma.vmem_to_hbm [thread:$0]  %s3466, 32, %s7, [#allocation6]
    $region37: #{tpu_custom_call.1} parent=1 // pred_fallthru
      _
    // Predicated region
    $region38: #{tpu_custom_call.1} parent=1 // pred_check
      _
    $region39: #{tpu_custom_call.1} parent=1 // pred_check_branch
      %3470 = sbr.rel (0) target = $region41
    $region40: #{tpu_custom_call.1} parent=1 // pred_region
      %3471 = dma.done [#allocation6], 32
    $region41: #{tpu_custom_call.1} parent=1 // pred_fallthru
      _
    %3472 = vsyncpa [#allocation5], 1
    %3473 = vsyncpa [#allocation6], 1

</llo_original>
